<compile_context>
chip_gen: v6e
topology: v6e:2x2x1
jax: 0.10.0
libtpu: 0.0.40
codegen_flags: <defaults>
</compile_context>

<pallas_src>
import functools
import math

import jax
import jax.numpy as jnp
from jax import lax
from jax.experimental import pallas as pl
from jax.experimental.pallas import tpu as pltpu

LN_EPS = 1e-6
NEG_INF = -1e9


# ----------------------------- in-kernel math helpers -----------------------------
def _layernorm(x, gamma, beta):
    mu = jnp.mean(x, axis=-1, keepdims=True)
    var = jnp.mean((x - mu) ** 2, axis=-1, keepdims=True)
    return gamma * (x - mu) * lax.rsqrt(var + LN_EPS) + beta


def _mm(a, w):
    # bf16 MXU operands, f32 accumulation (native bf16 MXU path on v6e/v7x).
    return jnp.dot(a.astype(jnp.bfloat16), w.astype(jnp.bfloat16),
                   preferred_element_type=jnp.float32)


def _attention(q_in, kv_in, mask_ref, n_batch, t_q, t_k,
               wq, bq, wk, bk, wv, bv, wo, bo, gamma, beta,
               num_heads, d_k, d_v):
    """Multi-headed attention + residual + LayerNorm on one batch block.

    q_in:  (n_batch * t_q, D) f32  -- all rows of the block, M-folded.
    kv_in: (n_batch * t_k, D) f32
    mask_ref: (n_batch, t_q, t_k) ref; >0 means "attend".
    """
    d_model = wo.shape[1]
    scale = 1.0 / math.sqrt(d_k)

    # Fused full-width projections over all rows of the block (lane- and M-dense).
    q = (_mm(q_in, wq) + bq) * scale      # (n_batch*t_q, H*d_k)
    k = _mm(kv_in, wk) + bk               # (n_batch*t_k, H*d_k)
    v = _mm(kv_in, wv) + bv               # (n_batch*t_k, H*d_v)

    out_rows = []
    for b in range(n_batch):              # static, small: batch elements of this block
        qb = q[b * t_q:(b + 1) * t_q, :]
        kb = k[b * t_k:(b + 1) * t_k, :]
        vb = v[b * t_k:(b + 1) * t_k, :]
        # Additive mask bias, computed once per example (hoisted out of the head loop).
        bias = jnp.where(mask_ref[b] > 0, 0.0, NEG_INF)
        o_b = jnp.zeros((t_q, d_model), jnp.float32)
        for h in range(num_heads):        # review option (b): accumulate, no concat
            qh = qb[:, h * d_k:(h + 1) * d_k].astype(jnp.bfloat16)
            kh = kb[:, h * d_k:(h + 1) * d_k].astype(jnp.bfloat16)
            vh = vb[:, h * d_v:(h + 1) * d_v].astype(jnp.bfloat16)
            # Q.K^T via dot_general contracting dim 1 of both operands (no XLU transpose).
            s = lax.dot_general(qh, kh, (((1,), (1,)), ((), ())),
                                preferred_element_type=jnp.float32)   # (t_q, t_k)
            s = s + bias
            m = jnp.max(s, axis=-1, keepdims=True)
            p = jnp.exp(s - m)
            inv = pl.reciprocal(jnp.sum(p, axis=-1, keepdims=True), approx=True)
            attn = (p * inv).astype(jnp.bfloat16)
            ctx = jnp.dot(attn, vh, preferred_element_type=jnp.float32)  # (t_q, d_v)
            o_b = o_b + jnp.dot(ctx.astype(jnp.bfloat16),
                                wo[h * d_v:(h + 1) * d_v, :],
                                preferred_element_type=jnp.float32)
        out_rows.append(o_b)
    out = out_rows[0] if n_batch == 1 else jnp.concatenate(out_rows, axis=0)
    out = out + bo
    return _layernorm(q_in + out, gamma, beta)    # residual + LayerNorm, f32


# ----------------------------------- kernel ---------------------------------------
def _decoder_block_kernel(
    x_ref, enc_ref, tmask_ref, smask_ref,
    # self-attention params
    sa_wq, sa_bq, sa_wk, sa_bk, sa_wv, sa_bv, sa_wo, sa_bo, sa_g, sa_b,
    # source (cross) attention params
    ca_wq, ca_bq, ca_wk, ca_bk, ca_wv, ca_bv, ca_wo, ca_bo, ca_g, ca_b,
    # pointwise feed-forward params
    ff_w1, ff_b1, ff_w2, ff_b2,
    out_ref,
    *, num_heads, d_k, d_v):
    n_batch, t_len, d_model = x_ref.shape
    s_len = enc_ref.shape[1]

    # Fold the per-step batch block into the matmul M dimension (leading-dim merge only).
    x2 = x_ref[...].reshape(n_batch * t_len, d_model)
    e2 = enc_ref[...].reshape(n_batch * s_len, d_model)

    # masked self-attention sublayer (+ residual + LayerNorm)
    x2 = _attention(x2, x2, tmask_ref, n_batch, t_len, t_len,
                    sa_wq[...], sa_bq[...], sa_wk[...], sa_bk[...],
                    sa_wv[...], sa_bv[...], sa_wo[...], sa_bo[...],
                    sa_g[...], sa_b[...], num_heads, d_k, d_v)

    # encoder-decoder (source) attention sublayer (+ residual + LayerNorm)
    x2 = _attention(x2, e2, smask_ref, n_batch, t_len, s_len,
                    ca_wq[...], ca_bq[...], ca_wk[...], ca_bk[...],
                    ca_wv[...], ca_bv[...], ca_wo[...], ca_bo[...],
                    ca_g[...], ca_b[...], num_heads, d_k, d_v)

    # pointwise feed-forward, fused over all rows of the block
    hid = jnp.maximum(_mm(x2, ff_w1[...]) + ff_b1[...], 0.0)
    y = _mm(hid, ff_w2[...]) + ff_b2[...]          # (n_batch*t_len, d_model) f32

    # Lane-dense output slab: (n_batch*T, D) -> (n_batch, T*D).  Built from row slices +
    # lane-axis concatenation (robust Mosaic lowering) rather than a minor-dim reshape.
    rows = []
    for b in range(n_batch):
        rows.append(jnp.concatenate(
            [y[b * t_len + t: b * t_len + t + 1, :] for t in range(t_len)], axis=1))
    dense = rows[0] if n_batch == 1 else jnp.concatenate(rows, axis=0)
    out_ref[0] = dense.astype(out_ref.dtype)


# ----------------------------------- wrapper --------------------------------------
PARAM_ORDER = (
    "sa_wq", "sa_bq", "sa_wk", "sa_bk", "sa_wv", "sa_bv", "sa_wo", "sa_bo", "sa_g", "sa_b",
    "ca_wq", "ca_bq", "ca_wk", "ca_bk", "ca_wv", "ca_bv", "ca_wo", "ca_bo", "ca_g", "ca_b",
    "ff_w1", "ff_b1", "ff_w2", "ff_b2",
)
WEIGHT_NAMES = frozenset({
    "sa_wq", "sa_wk", "sa_wv", "sa_wo",
    "ca_wq", "ca_wk", "ca_wv", "ca_wo",
    "ff_w1", "ff_w2",
})


def decoder_block(target_emb, encodings, source_mask, target_mask, params,
                  *, num_heads, d_k, d_v, batch_block=None):
    B, T, D = target_emb.shape
    _, S, _ = encodings.shape

    # Batch-block the grid: several batch elements per step (their rows are folded into the
    # matmul M dimension), while keeping >= 2 parallel steps when possible so both v7x
    # TensorCores get work.  Pass batch_block=B to collapse to a single step on v5e/v6e.
    if batch_block is None:
        batch_block = B // 2 if (B >= 2 and B % 2 == 0) else 1
    assert B % batch_block == 0, "batch size must be divisible by batch_block"
    n_steps = B // batch_block

    # Weight matrices as bf16 MXU operands (f32 accumulation in-kernel); biases and
    # LayerNorm parameters stay f32 (all elementwise math stays f32 on every generation).
    param_arrays = [params[name].astype(jnp.bfloat16) if name in WEIGHT_NAMES
                    else params[name] for name in PARAM_ORDER]

    def full_spec(arr):
        # Whole (small) grid-invariant parameter array resident in VMEM every step.
        return pl.BlockSpec(arr.shape, lambda g: (0,) * arr.ndim)

    in_specs = [
        pl.BlockSpec((batch_block, T, D), lambda g: (g, 0, 0)),   # target embeddings
        pl.BlockSpec((batch_block, S, D), lambda g: (g, 0, 0)),   # encodings
        pl.BlockSpec((batch_block, T, T), lambda g: (g, 0, 0)),   # target mask
        pl.BlockSpec((batch_block, T, S), lambda g: (g, 0, 0)),   # source mask
    ] + [full_spec(a) for a in param_arrays]

    kernel = functools.partial(_decoder_block_kernel,
                               num_heads=num_heads, d_k=d_k, d_v=d_v)

    out = pl.pallas_call(
        kernel,
        out_shape=jax.ShapeDtypeStruct((n_steps, batch_block, T * D), jnp.float32),
        grid=(n_steps,),
        in_specs=in_specs,
        out_specs=pl.BlockSpec((1, batch_block, T * D), lambda g: (g, 0, 0)),
        compiler_params=pltpu.CompilerParams(dimension_semantics=("parallel",)),
    )(target_emb, encodings, target_mask, source_mask, *param_arrays)

    return out.reshape(B, T, D)


# ------------------------------ pure-JAX reference ---------------------------------
def _reference(target_emb, encodings, source_mask, target_mask, p,
               *, num_heads, d_k, d_v):
    def layernorm(x, g, b):
        mu = jnp.mean(x, axis=-1, keepdims=True)
        var = jnp.mean((x - mu) ** 2, axis=-1, keepdims=True)
        return g * (x - mu) * lax.rsqrt(var + LN_EPS) + b

    def mha(q_in, kv_in, mask, pre):
        B, Tq, D = q_in.shape
        Tk = kv_in.shape[1]
        q = (q_in @ p[pre + "wq"] + p[pre + "bq"]).reshape(B, Tq, num_heads, d_k)
        k = (kv_in @ p[pre + "wk"] + p[pre + "bk"]).reshape(B, Tk, num_heads, d_k)
        v = (kv_in @ p[pre + "wv"] + p[pre + "bv"]).reshape(B, Tk, num_heads, d_v)
        scores = jnp.einsum("bqhd,bkhd->bhqk", q, k) / math.sqrt(d_k)
        scores = jnp.where(mask[:, None] > 0, scores, NEG_INF)
        attn = jax.nn.softmax(scores, axis=-1)
        out = jnp.einsum("bhqk,bkhd->bqhd", attn, v).reshape(B, Tq, num_heads * d_v)
        out = out @ p[pre + "wo"] + p[pre + "bo"]
        return layernorm(q_in + out, p[pre + "g"], p[pre + "b"])

    x = mha(target_emb, target_emb, target_mask, "sa_")
    x = mha(x, encodings, source_mask, "ca_")
    h = jnp.maximum(x @ p["ff_w1"] + p["ff_b1"], 0.0)
    return h @ p["ff_w2"] + p["ff_b2"]


# --------------------------------- param init --------------------------------------
def init_params(key, d_model, d_k, d_v, num_heads, d_ff):
    def linear(k, fan_in, fan_out):
        k1, k2 = jax.random.split(k)
        lim = 1.0 / math.sqrt(fan_in)
        w = jax.random.uniform(k1, (fan_in, fan_out), jnp.float32, -lim, lim)
        b = jax.random.uniform(k2, (1, fan_out), jnp.float32, -lim, lim)
        return w, b

    keys = jax.random.split(key, 10)
    params = {}
    for prefix, (kq, kk, kv, ko) in (("sa_", keys[0:4]), ("ca_", keys[4:8])):
        params[prefix + "wq"], params[prefix + "bq"] = linear(kq, d_model, num_heads * d_k)
        params[prefix + "wk"], params[prefix + "bk"] = linear(kk, d_model, num_heads * d_k)
        params[prefix + "wv"], params[prefix + "bv"] = linear(kv, d_model, num_heads * d_v)
        params[prefix + "wo"], params[prefix + "bo"] = linear(ko, num_heads * d_v, d_model)
        params[prefix + "g"] = jnp.ones((1, d_model), jnp.float32)
        params[prefix + "b"] = jnp.zeros((1, d_model), jnp.float32)
    params["ff_w1"], params["ff_b1"] = linear(keys[8], d_model, d_ff)
    params["ff_w2"], params["ff_b2"] = linear(keys[9], d_ff, d_model)
    return params


# ------------------------------------- main -----------------------------------------
if __name__ == "__main__":
    B, T, S = 4, 8, 16
    d_model, num_heads, d_k, d_v, d_ff = 32, 4, 8, 8, 64

    key = jax.random.PRNGKey(0)
    k_x, k_e, k_p = jax.random.split(key, 3)

    target_emb = jax.random.normal(k_x, (B, T, d_model), jnp.float32)
    encodings = jax.random.normal(k_e, (B, S, d_model), jnp.float32)
    # causal target mask (1 = attend), full source mask
    target_mask = jnp.broadcast_to(
        jnp.tril(jnp.ones((T, T), jnp.float32)), (B, T, T))
    source_mask = jnp.ones((B, T, S), jnp.float32)

    params = init_params(k_p, d_model, d_k, d_v, num_heads, d_ff)

    out = decoder_block(target_emb, encodings, source_mask, target_mask, params,
                        num_heads=num_heads, d_k=d_k, d_v=d_v)
    out = jax.block_until_ready(out)

    ref = _reference(target_emb, encodings, source_mask, target_mask, params,
                     num_heads=num_heads, d_k=d_k, d_v=d_v)
    assert out.shape == (B, T, d_model)
    # Kernel uses bf16 MXU operands with f32 accumulation; reference is all-f32, so the
    # tolerance is loosened accordingly (typical max abs deviation is well below this).
    assert jnp.allclose(out, ref, atol=5e-2, rtol=5e-2), "kernel vs reference mismatch"

    print("KERNEL_OK")
</pallas_src>

<mosaic_0001>
module attributes {stable_mosaic.version = 11 : i64} {
  func.func @_decoder_block_kernel(%arg0: i32, %arg1: memref<2x8x32xf32, #tpu.memory_space<vmem>>, %arg2: memref<2x16x32xf32, #tpu.memory_space<vmem>>, %arg3: memref<2x8x8xf32, #tpu.memory_space<vmem>>, %arg4: memref<2x8x16xf32, #tpu.memory_space<vmem>>, %arg5: memref<32x32xbf16, #tpu.memory_space<vmem>>, %arg6: memref<1x32xf32, #tpu.memory_space<vmem>>, %arg7: memref<32x32xbf16, #tpu.memory_space<vmem>>, %arg8: memref<1x32xf32, #tpu.memory_space<vmem>>, %arg9: memref<32x32xbf16, #tpu.memory_space<vmem>>, %arg10: memref<1x32xf32, #tpu.memory_space<vmem>>, %arg11: memref<32x32xbf16, #tpu.memory_space<vmem>>, %arg12: memref<1x32xf32, #tpu.memory_space<vmem>>, %arg13: memref<1x32xf32, #tpu.memory_space<vmem>>, %arg14: memref<1x32xf32, #tpu.memory_space<vmem>>, %arg15: memref<32x32xbf16, #tpu.memory_space<vmem>>, %arg16: memref<1x32xf32, #tpu.memory_space<vmem>>, %arg17: memref<32x32xbf16, #tpu.memory_space<vmem>>, %arg18: memref<1x32xf32, #tpu.memory_space<vmem>>, %arg19: memref<32x32xbf16, #tpu.memory_space<vmem>>, %arg20: memref<1x32xf32, #tpu.memory_space<vmem>>, %arg21: memref<32x32xbf16, #tpu.memory_space<vmem>>, %arg22: memref<1x32xf32, #tpu.memory_space<vmem>>, %arg23: memref<1x32xf32, #tpu.memory_space<vmem>>, %arg24: memref<1x32xf32, #tpu.memory_space<vmem>>, %arg25: memref<32x64xbf16, #tpu.memory_space<vmem>>, %arg26: memref<1x64xf32, #tpu.memory_space<vmem>>, %arg27: memref<64x32xbf16, #tpu.memory_space<vmem>>, %arg28: memref<1x32xf32, #tpu.memory_space<vmem>>, %arg29: memref<1x2x256xf32, #tpu.memory_space<vmem>>) attributes {dimension_semantics = [#tpu.dimension_semantics<parallel>], iteration_bounds = array<i64: 2>, scalar_prefetch = 0 : i64, scratch_operands = 0 : i64, tpu.core_type = #tpu.core_type<tc>, window_params = [{transform_indices = @transform_0, window_bounds = array<i64: 2, 8, 32>}, {transform_indices = @transform_1, window_bounds = array<i64: 2, 16, 32>}, {transform_indices = @transform_2, window_bounds = array<i64: 2, 8, 8>}, {transform_indices = @transform_3, window_bounds = array<i64: 2, 8, 16>}, {pipeline_mode = #tpu.pipeline_mode<synchronous>, transform_indices = @transform_4, window_bounds = array<i64: 32, 32>}, {pipeline_mode = #tpu.pipeline_mode<synchronous>, transform_indices = @transform_5, window_bounds = array<i64: 1, 32>}, {pipeline_mode = #tpu.pipeline_mode<synchronous>, transform_indices = @transform_6, window_bounds = array<i64: 32, 32>}, {pipeline_mode = #tpu.pipeline_mode<synchronous>, transform_indices = @transform_7, window_bounds = array<i64: 1, 32>}, {pipeline_mode = #tpu.pipeline_mode<synchronous>, transform_indices = @transform_8, window_bounds = array<i64: 32, 32>}, {pipeline_mode = #tpu.pipeline_mode<synchronous>, transform_indices = @transform_9, window_bounds = array<i64: 1, 32>}, {pipeline_mode = #tpu.pipeline_mode<synchronous>, transform_indices = @transform_10, window_bounds = array<i64: 32, 32>}, {pipeline_mode = #tpu.pipeline_mode<synchronous>, transform_indices = @transform_11, window_bounds = array<i64: 1, 32>}, {pipeline_mode = #tpu.pipeline_mode<synchronous>, transform_indices = @transform_12, window_bounds = array<i64: 1, 32>}, {pipeline_mode = #tpu.pipeline_mode<synchronous>, transform_indices = @transform_13, window_bounds = array<i64: 1, 32>}, {pipeline_mode = #tpu.pipeline_mode<synchronous>, transform_indices = @transform_14, window_bounds = array<i64: 32, 32>}, {pipeline_mode = #tpu.pipeline_mode<synchronous>, transform_indices = @transform_15, window_bounds = array<i64: 1, 32>}, {pipeline_mode = #tpu.pipeline_mode<synchronous>, transform_indices = @transform_16, window_bounds = array<i64: 32, 32>}, {pipeline_mode = #tpu.pipeline_mode<synchronous>, transform_indices = @transform_17, window_bounds = array<i64: 1, 32>}, {pipeline_mode = #tpu.pipeline_mode<synchronous>, transform_indices = @transform_18, window_bounds = array<i64: 32, 32>}, {pipeline_mode = #tpu.pipeline_mode<synchronous>, transform_indices = @transform_19, window_bounds = array<i64: 1, 32>}, {pipeline_mode = #tpu.pipeline_mode<synchronous>, transform_indices = @transform_20, window_bounds = array<i64: 32, 32>}, {pipeline_mode = #tpu.pipeline_mode<synchronous>, transform_indices = @transform_21, window_bounds = array<i64: 1, 32>}, {pipeline_mode = #tpu.pipeline_mode<synchronous>, transform_indices = @transform_22, window_bounds = array<i64: 1, 32>}, {pipeline_mode = #tpu.pipeline_mode<synchronous>, transform_indices = @transform_23, window_bounds = array<i64: 1, 32>}, {pipeline_mode = #tpu.pipeline_mode<synchronous>, transform_indices = @transform_24, window_bounds = array<i64: 32, 64>}, {pipeline_mode = #tpu.pipeline_mode<synchronous>, transform_indices = @transform_25, window_bounds = array<i64: 1, 64>}, {pipeline_mode = #tpu.pipeline_mode<synchronous>, transform_indices = @transform_26, window_bounds = array<i64: 64, 32>}, {pipeline_mode = #tpu.pipeline_mode<synchronous>, transform_indices = @transform_27, window_bounds = array<i64: 1, 32>}, {transform_indices = @transform_28, window_bounds = array<i64: 1, 2, 256>}]} {
    %c0 = arith.constant 0 : index
    %c0_0 = arith.constant 0 : index
    %c0_1 = arith.constant 0 : index
    %0 = vector.load %arg1[%c0, %c0_0, %c0_1] : memref<2x8x32xf32, #tpu.memory_space<vmem>>, vector<2x8x32xf32>
    %1 = vector.shape_cast %0 : vector<2x8x32xf32> to vector<16x32xf32>
    %c0_2 = arith.constant 0 : index
    %c0_3 = arith.constant 0 : index
    %c0_4 = arith.constant 0 : index
    %2 = vector.load %arg2[%c0_2, %c0_3, %c0_4] : memref<2x16x32xf32, #tpu.memory_space<vmem>>, vector<2x16x32xf32>
    %3 = vector.shape_cast %2 : vector<2x16x32xf32> to vector<32x32xf32>
    %c0_5 = arith.constant 0 : index
    %c0_6 = arith.constant 0 : index
    %4 = vector.load %arg5[%c0_5, %c0_6] : memref<32x32xbf16, #tpu.memory_space<vmem>>, vector<32x32xbf16>
    %c0_7 = arith.constant 0 : index
    %c0_8 = arith.constant 0 : index
    %5 = vector.load %arg6[%c0_7, %c0_8] : memref<1x32xf32, #tpu.memory_space<vmem>>, vector<1x32xf32>
    %c0_9 = arith.constant 0 : index
    %c0_10 = arith.constant 0 : index
    %6 = vector.load %arg7[%c0_9, %c0_10] : memref<32x32xbf16, #tpu.memory_space<vmem>>, vector<32x32xbf16>
    %c0_11 = arith.constant 0 : index
    %c0_12 = arith.constant 0 : index
    %7 = vector.load %arg8[%c0_11, %c0_12] : memref<1x32xf32, #tpu.memory_space<vmem>>, vector<1x32xf32>
    %c0_13 = arith.constant 0 : index
    %c0_14 = arith.constant 0 : index
    %8 = vector.load %arg9[%c0_13, %c0_14] : memref<32x32xbf16, #tpu.memory_space<vmem>>, vector<32x32xbf16>
    %c0_15 = arith.constant 0 : index
    %c0_16 = arith.constant 0 : index
    %9 = vector.load %arg10[%c0_15, %c0_16] : memref<1x32xf32, #tpu.memory_space<vmem>>, vector<1x32xf32>
    %c0_17 = arith.constant 0 : index
    %c0_18 = arith.constant 0 : index
    %10 = vector.load %arg11[%c0_17, %c0_18] : memref<32x32xbf16, #tpu.memory_space<vmem>>, vector<32x32xbf16>
    %c0_19 = arith.constant 0 : index
    %c0_20 = arith.constant 0 : index
    %11 = vector.load %arg12[%c0_19, %c0_20] : memref<1x32xf32, #tpu.memory_space<vmem>>, vector<1x32xf32>
    %c0_21 = arith.constant 0 : index
    %c0_22 = arith.constant 0 : index
    %12 = vector.load %arg13[%c0_21, %c0_22] : memref<1x32xf32, #tpu.memory_space<vmem>>, vector<1x32xf32>
    %c0_23 = arith.constant 0 : index
    %c0_24 = arith.constant 0 : index
    %13 = vector.load %arg14[%c0_23, %c0_24] : memref<1x32xf32, #tpu.memory_space<vmem>>, vector<1x32xf32>
    %14 = arith.truncf %1 : vector<16x32xf32> to vector<16x32xbf16>
    %cst = arith.constant dense<0.000000e+00> : vector<16x32xf32>
    %15 = tpu.matmul %14, %4, %cst {dimension_numbers = #tpu.dot_dimension_numbers<[1], [0], [0], [1], [0, 0, 1, 1], [], []>} : vector<16x32xbf16>, vector<32x32xbf16>, vector<16x32xf32> -> vector<16x32xf32>
    %16 = vector.broadcast %5 : vector<1x32xf32> to vector<16x32xf32>
    %17 = arith.addf %15, %16 : vector<16x32xf32>
    %cst_25 = arith.constant 0.353553385 : f32
    %18 = vector.broadcast %cst_25 : f32 to vector<16x32xf32>
    %19 = arith.mulf %17, %18 : vector<16x32xf32>
    %20 = arith.truncf %1 : vector<16x32xf32> to vector<16x32xbf16>
    %cst_26 = arith.constant dense<0.000000e+00> : vector<16x32xf32>
    %21 = tpu.matmul %20, %6, %cst_26 {dimension_numbers = #tpu.dot_dimension_numbers<[1], [0], [0], [1], [0, 0, 1, 1], [], []>} : vector<16x32xbf16>, vector<32x32xbf16>, vector<16x32xf32> -> vector<16x32xf32>
    %22 = vector.broadcast %7 : vector<1x32xf32> to vector<16x32xf32>
    %23 = arith.addf %21, %22 : vector<16x32xf32>
    %24 = arith.truncf %1 : vector<16x32xf32> to vector<16x32xbf16>
    %cst_27 = arith.constant dense<0.000000e+00> : vector<16x32xf32>
    %25 = tpu.matmul %24, %8, %cst_27 {dimension_numbers = #tpu.dot_dimension_numbers<[1], [0], [0], [1], [0, 0, 1, 1], [], []>} : vector<16x32xbf16>, vector<32x32xbf16>, vector<16x32xf32> -> vector<16x32xf32>
    %26 = vector.broadcast %9 : vector<1x32xf32> to vector<16x32xf32>
    %27 = arith.addf %25, %26 : vector<16x32xf32>
    %28 = vector.extract_strided_slice %19 {offsets = [0, 0], sizes = [8, 32], strides = [1, 1]} : vector<16x32xf32> to vector<8x32xf32>
    %29 = vector.extract_strided_slice %23 {offsets = [0, 0], sizes = [8, 32], strides = [1, 1]} : vector<16x32xf32> to vector<8x32xf32>
    %30 = vector.extract_strided_slice %27 {offsets = [0, 0], sizes = [8, 32], strides = [1, 1]} : vector<16x32xf32> to vector<8x32xf32>
    %c0_28 = arith.constant 0 : index
    %c0_29 = arith.constant 0 : index
    %c0_30 = arith.constant 0 : index
    %31 = vector.load %arg3[%c0_28, %c0_29, %c0_30] : memref<2x8x8xf32, #tpu.memory_space<vmem>>, vector<1x8x8xf32>
    %32 = vector.shape_cast %31 : vector<1x8x8xf32> to vector<8x8xf32>
    %cst_31 = arith.constant 0.000000e+00 : f32
    %33 = vector.broadcast %cst_31 : f32 to vector<8x8xf32>
    %34 = arith.cmpf ogt, %32, %33 : vector<8x8xf32>
    %cst_32 = arith.constant 0.000000e+00 : f32
    %cst_33 = arith.constant -1.000000e+09 : f32
    %35 = vector.broadcast %cst_32 : f32 to vector<8x8xf32>
    %36 = vector.broadcast %cst_33 : f32 to vector<8x8xf32>
    %37 = arith.select %34, %35, %36 : vector<8x8xi1>, vector<8x8xf32>
    %cst_34 = arith.constant 0.000000e+00 : f32
    %38 = vector.broadcast %cst_34 : f32 to vector<8x32xf32>
    %39 = vector.extract_strided_slice %28 {offsets = [0, 0], sizes = [8, 8], strides = [1, 1]} : vector<8x32xf32> to vector<8x8xf32>
    %40 = arith.truncf %39 : vector<8x8xf32> to vector<8x8xbf16>
    %41 = vector.extract_strided_slice %29 {offsets = [0, 0], sizes = [8, 8], strides = [1, 1]} : vector<8x32xf32> to vector<8x8xf32>
    %42 = arith.truncf %41 : vector<8x8xf32> to vector<8x8xbf16>
    %43 = vector.extract_strided_slice %30 {offsets = [0, 0], sizes = [8, 8], strides = [1, 1]} : vector<8x32xf32> to vector<8x8xf32>
    %44 = arith.truncf %43 : vector<8x8xf32> to vector<8x8xbf16>
    %cst_35 = arith.constant dense<0.000000e+00> : vector<8x8xf32>
    %45 = tpu.matmul %40, %42, %cst_35 {dimension_numbers = #tpu.dot_dimension_numbers<[1], [1], [0], [0], [0, 0, 1, 0], [], []>} : vector<8x8xbf16>, vector<8x8xbf16>, vector<8x8xf32> -> vector<8x8xf32>
    %46 = arith.addf %45, %37 : vector<8x8xf32>
    %cst_36 = arith.constant dense<0xFF800000> : vector<8xf32>
    %47 = vector.multi_reduction <maximumf>, %46, %cst_36 [1] : vector<8x8xf32> to vector<8xf32>
    %48 = vector.shape_cast %47 : vector<8xf32> to vector<8x1xf32>
    %49 = vector.broadcast %48 : vector<8x1xf32> to vector<8x8xf32>
    %50 = arith.subf %46, %49 : vector<8x8xf32>
    %51 = math.exp %50 : vector<8x8xf32>
    %cst_37 = arith.constant dense<0.000000e+00> : vector<8xf32>
    %52 = vector.multi_reduction <add>, %51, %cst_37 [1] : vector<8x8xf32> to vector<8xf32>
    %53 = vector.shape_cast %52 : vector<8xf32> to vector<8x1xf32>
    %54 = tpu.reciprocal %53 {approx = true} : vector<8x1xf32> -> vector<8x1xf32>
    %55 = vector.broadcast %54 : vector<8x1xf32> to vector<8x8xf32>
    %56 = arith.mulf %51, %55 : vector<8x8xf32>
    %57 = arith.truncf %56 : vector<8x8xf32> to vector<8x8xbf16>
    %cst_38 = arith.constant dense<0.000000e+00> : vector<8x8xf32>
    %58 = tpu.matmul %57, %44, %cst_38 {dimension_numbers = #tpu.dot_dimension_numbers<[1], [0], [0], [1], [0, 0, 1, 1], [], []>} : vector<8x8xbf16>, vector<8x8xbf16>, vector<8x8xf32> -> vector<8x8xf32>
    %59 = arith.truncf %58 : vector<8x8xf32> to vector<8x8xbf16>
    %60 = vector.extract_strided_slice %10 {offsets = [0, 0], sizes = [8, 32], strides = [1, 1]} : vector<32x32xbf16> to vector<8x32xbf16>
    %cst_39 = arith.constant dense<0.000000e+00> : vector<8x32xf32>
    %61 = tpu.matmul %59, %60, %cst_39 {dimension_numbers = #tpu.dot_dimension_numbers<[1], [0], [0], [1], [0, 0, 1, 1], [], []>} : vector<8x8xbf16>, vector<8x32xbf16>, vector<8x32xf32> -> vector<8x32xf32>
    %62 = arith.addf %38, %61 : vector<8x32xf32>
    %63 = vector.extract_strided_slice %28 {offsets = [0, 8], sizes = [8, 8], strides = [1, 1]} : vector<8x32xf32> to vector<8x8xf32>
    %64 = arith.truncf %63 : vector<8x8xf32> to vector<8x8xbf16>
    %65 = vector.extract_strided_slice %29 {offsets = [0, 8], sizes = [8, 8], strides = [1, 1]} : vector<8x32xf32> to vector<8x8xf32>
    %66 = arith.truncf %65 : vector<8x8xf32> to vector<8x8xbf16>
    %67 = vector.extract_strided_slice %30 {offsets = [0, 8], sizes = [8, 8], strides = [1, 1]} : vector<8x32xf32> to vector<8x8xf32>
    %68 = arith.truncf %67 : vector<8x8xf32> to vector<8x8xbf16>
    %cst_40 = arith.constant dense<0.000000e+00> : vector<8x8xf32>
    %69 = tpu.matmul %64, %66, %cst_40 {dimension_numbers = #tpu.dot_dimension_numbers<[1], [1], [0], [0], [0, 0, 1, 0], [], []>} : vector<8x8xbf16>, vector<8x8xbf16>, vector<8x8xf32> -> vector<8x8xf32>
    %70 = arith.addf %69, %37 : vector<8x8xf32>
    %cst_41 = arith.constant dense<0xFF800000> : vector<8xf32>
    %71 = vector.multi_reduction <maximumf>, %70, %cst_41 [1] : vector<8x8xf32> to vector<8xf32>
    %72 = vector.shape_cast %71 : vector<8xf32> to vector<8x1xf32>
    %73 = vector.broadcast %72 : vector<8x1xf32> to vector<8x8xf32>
    %74 = arith.subf %70, %73 : vector<8x8xf32>
    %75 = math.exp %74 : vector<8x8xf32>
    %cst_42 = arith.constant dense<0.000000e+00> : vector<8xf32>
    %76 = vector.multi_reduction <add>, %75, %cst_42 [1] : vector<8x8xf32> to vector<8xf32>
    %77 = vector.shape_cast %76 : vector<8xf32> to vector<8x1xf32>
    %78 = tpu.reciprocal %77 {approx = true} : vector<8x1xf32> -> vector<8x1xf32>
    %79 = vector.broadcast %78 : vector<8x1xf32> to vector<8x8xf32>
    %80 = arith.mulf %75, %79 : vector<8x8xf32>
    %81 = arith.truncf %80 : vector<8x8xf32> to vector<8x8xbf16>
    %cst_43 = arith.constant dense<0.000000e+00> : vector<8x8xf32>
    %82 = tpu.matmul %81, %68, %cst_43 {dimension_numbers = #tpu.dot_dimension_numbers<[1], [0], [0], [1], [0, 0, 1, 1], [], []>} : vector<8x8xbf16>, vector<8x8xbf16>, vector<8x8xf32> -> vector<8x8xf32>
    %83 = arith.truncf %82 : vector<8x8xf32> to vector<8x8xbf16>
    %84 = vector.extract_strided_slice %10 {offsets = [8, 0], sizes = [8, 32], strides = [1, 1]} : vector<32x32xbf16> to vector<8x32xbf16>
    %cst_44 = arith.constant dense<0.000000e+00> : vector<8x32xf32>
    %85 = tpu.matmul %83, %84, %cst_44 {dimension_numbers = #tpu.dot_dimension_numbers<[1], [0], [0], [1], [0, 0, 1, 1], [], []>} : vector<8x8xbf16>, vector<8x32xbf16>, vector<8x32xf32> -> vector<8x32xf32>
    %86 = arith.addf %62, %85 : vector<8x32xf32>
    %87 = vector.extract_strided_slice %28 {offsets = [0, 16], sizes = [8, 8], strides = [1, 1]} : vector<8x32xf32> to vector<8x8xf32>
    %88 = arith.truncf %87 : vector<8x8xf32> to vector<8x8xbf16>
    %89 = vector.extract_strided_slice %29 {offsets = [0, 16], sizes = [8, 8], strides = [1, 1]} : vector<8x32xf32> to vector<8x8xf32>
    %90 = arith.truncf %89 : vector<8x8xf32> to vector<8x8xbf16>
    %91 = vector.extract_strided_slice %30 {offsets = [0, 16], sizes = [8, 8], strides = [1, 1]} : vector<8x32xf32> to vector<8x8xf32>
    %92 = arith.truncf %91 : vector<8x8xf32> to vector<8x8xbf16>
    %cst_45 = arith.constant dense<0.000000e+00> : vector<8x8xf32>
    %93 = tpu.matmul %88, %90, %cst_45 {dimension_numbers = #tpu.dot_dimension_numbers<[1], [1], [0], [0], [0, 0, 1, 0], [], []>} : vector<8x8xbf16>, vector<8x8xbf16>, vector<8x8xf32> -> vector<8x8xf32>
    %94 = arith.addf %93, %37 : vector<8x8xf32>
    %cst_46 = arith.constant dense<0xFF800000> : vector<8xf32>
    %95 = vector.multi_reduction <maximumf>, %94, %cst_46 [1] : vector<8x8xf32> to vector<8xf32>
    %96 = vector.shape_cast %95 : vector<8xf32> to vector<8x1xf32>
    %97 = vector.broadcast %96 : vector<8x1xf32> to vector<8x8xf32>
    %98 = arith.subf %94, %97 : vector<8x8xf32>
    %99 = math.exp %98 : vector<8x8xf32>
    %cst_47 = arith.constant dense<0.000000e+00> : vector<8xf32>
    %100 = vector.multi_reduction <add>, %99, %cst_47 [1] : vector<8x8xf32> to vector<8xf32>
    %101 = vector.shape_cast %100 : vector<8xf32> to vector<8x1xf32>
    %102 = tpu.reciprocal %101 {approx = true} : vector<8x1xf32> -> vector<8x1xf32>
    %103 = vector.broadcast %102 : vector<8x1xf32> to vector<8x8xf32>
    %104 = arith.mulf %99, %103 : vector<8x8xf32>
    %105 = arith.truncf %104 : vector<8x8xf32> to vector<8x8xbf16>
    %cst_48 = arith.constant dense<0.000000e+00> : vector<8x8xf32>
    %106 = tpu.matmul %105, %92, %cst_48 {dimension_numbers = #tpu.dot_dimension_numbers<[1], [0], [0], [1], [0, 0, 1, 1], [], []>} : vector<8x8xbf16>, vector<8x8xbf16>, vector<8x8xf32> -> vector<8x8xf32>
    %107 = arith.truncf %106 : vector<8x8xf32> to vector<8x8xbf16>
    %108 = vector.extract_strided_slice %10 {offsets = [16, 0], sizes = [8, 32], strides = [1, 1]} : vector<32x32xbf16> to vector<8x32xbf16>
    %cst_49 = arith.constant dense<0.000000e+00> : vector<8x32xf32>
    %109 = tpu.matmul %107, %108, %cst_49 {dimension_numbers = #tpu.dot_dimension_numbers<[1], [0], [0], [1], [0, 0, 1, 1], [], []>} : vector<8x8xbf16>, vector<8x32xbf16>, vector<8x32xf32> -> vector<8x32xf32>
    %110 = arith.addf %86, %109 : vector<8x32xf32>
    %111 = vector.extract_strided_slice %28 {offsets = [0, 24], sizes = [8, 8], strides = [1, 1]} : vector<8x32xf32> to vector<8x8xf32>
    %112 = arith.truncf %111 : vector<8x8xf32> to vector<8x8xbf16>
    %113 = vector.extract_strided_slice %29 {offsets = [0, 24], sizes = [8, 8], strides = [1, 1]} : vector<8x32xf32> to vector<8x8xf32>
    %114 = arith.truncf %113 : vector<8x8xf32> to vector<8x8xbf16>
    %115 = vector.extract_strided_slice %30 {offsets = [0, 24], sizes = [8, 8], strides = [1, 1]} : vector<8x32xf32> to vector<8x8xf32>
    %116 = arith.truncf %115 : vector<8x8xf32> to vector<8x8xbf16>
    %cst_50 = arith.constant dense<0.000000e+00> : vector<8x8xf32>
    %117 = tpu.matmul %112, %114, %cst_50 {dimension_numbers = #tpu.dot_dimension_numbers<[1], [1], [0], [0], [0, 0, 1, 0], [], []>} : vector<8x8xbf16>, vector<8x8xbf16>, vector<8x8xf32> -> vector<8x8xf32>
    %118 = arith.addf %117, %37 : vector<8x8xf32>
    %cst_51 = arith.constant dense<0xFF800000> : vector<8xf32>
    %119 = vector.multi_reduction <maximumf>, %118, %cst_51 [1] : vector<8x8xf32> to vector<8xf32>
    %120 = vector.shape_cast %119 : vector<8xf32> to vector<8x1xf32>
    %121 = vector.broadcast %120 : vector<8x1xf32> to vector<8x8xf32>
    %122 = arith.subf %118, %121 : vector<8x8xf32>
    %123 = math.exp %122 : vector<8x8xf32>
    %cst_52 = arith.constant dense<0.000000e+00> : vector<8xf32>
    %124 = vector.multi_reduction <add>, %123, %cst_52 [1] : vector<8x8xf32> to vector<8xf32>
    %125 = vector.shape_cast %124 : vector<8xf32> to vector<8x1xf32>
    %126 = tpu.reciprocal %125 {approx = true} : vector<8x1xf32> -> vector<8x1xf32>
    %127 = vector.broadcast %126 : vector<8x1xf32> to vector<8x8xf32>
    %128 = arith.mulf %123, %127 : vector<8x8xf32>
    %129 = arith.truncf %128 : vector<8x8xf32> to vector<8x8xbf16>
    %cst_53 = arith.constant dense<0.000000e+00> : vector<8x8xf32>
    %130 = tpu.matmul %129, %116, %cst_53 {dimension_numbers = #tpu.dot_dimension_numbers<[1], [0], [0], [1], [0, 0, 1, 1], [], []>} : vector<8x8xbf16>, vector<8x8xbf16>, vector<8x8xf32> -> vector<8x8xf32>
    %131 = arith.truncf %130 : vector<8x8xf32> to vector<8x8xbf16>
    %132 = vector.extract_strided_slice %10 {offsets = [24, 0], sizes = [8, 32], strides = [1, 1]} : vector<32x32xbf16> to vector<8x32xbf16>
    %cst_54 = arith.constant dense<0.000000e+00> : vector<8x32xf32>
    %133 = tpu.matmul %131, %132, %cst_54 {dimension_numbers = #tpu.dot_dimension_numbers<[1], [0], [0], [1], [0, 0, 1, 1], [], []>} : vector<8x8xbf16>, vector<8x32xbf16>, vector<8x32xf32> -> vector<8x32xf32>
    %134 = arith.addf %110, %133 : vector<8x32xf32>
    %135 = vector.extract_strided_slice %19 {offsets = [8, 0], sizes = [8, 32], strides = [1, 1]} : vector<16x32xf32> to vector<8x32xf32>
    %136 = vector.extract_strided_slice %23 {offsets = [8, 0], sizes = [8, 32], strides = [1, 1]} : vector<16x32xf32> to vector<8x32xf32>
    %137 = vector.extract_strided_slice %27 {offsets = [8, 0], sizes = [8, 32], strides = [1, 1]} : vector<16x32xf32> to vector<8x32xf32>
    %c1 = arith.constant 1 : index
    %c0_55 = arith.constant 0 : index
    %c0_56 = arith.constant 0 : index
    %138 = vector.load %arg3[%c1, %c0_55, %c0_56] : memref<2x8x8xf32, #tpu.memory_space<vmem>>, vector<1x8x8xf32>
    %139 = vector.shape_cast %138 : vector<1x8x8xf32> to vector<8x8xf32>
    %cst_57 = arith.constant 0.000000e+00 : f32
    %140 = vector.broadcast %cst_57 : f32 to vector<8x8xf32>
    %141 = arith.cmpf ogt, %139, %140 : vector<8x8xf32>
    %cst_58 = arith.constant 0.000000e+00 : f32
    %cst_59 = arith.constant -1.000000e+09 : f32
    %142 = vector.broadcast %cst_58 : f32 to vector<8x8xf32>
    %143 = vector.broadcast %cst_59 : f32 to vector<8x8xf32>
    %144 = arith.select %141, %142, %143 : vector<8x8xi1>, vector<8x8xf32>
    %cst_60 = arith.constant 0.000000e+00 : f32
    %145 = vector.broadcast %cst_60 : f32 to vector<8x32xf32>
    %146 = vector.extract_strided_slice %135 {offsets = [0, 0], sizes = [8, 8], strides = [1, 1]} : vector<8x32xf32> to vector<8x8xf32>
    %147 = arith.truncf %146 : vector<8x8xf32> to vector<8x8xbf16>
    %148 = vector.extract_strided_slice %136 {offsets = [0, 0], sizes = [8, 8], strides = [1, 1]} : vector<8x32xf32> to vector<8x8xf32>
    %149 = arith.truncf %148 : vector<8x8xf32> to vector<8x8xbf16>
    %150 = vector.extract_strided_slice %137 {offsets = [0, 0], sizes = [8, 8], strides = [1, 1]} : vector<8x32xf32> to vector<8x8xf32>
    %151 = arith.truncf %150 : vector<8x8xf32> to vector<8x8xbf16>
    %cst_61 = arith.constant dense<0.000000e+00> : vector<8x8xf32>
    %152 = tpu.matmul %147, %149, %cst_61 {dimension_numbers = #tpu.dot_dimension_numbers<[1], [1], [0], [0], [0, 0, 1, 0], [], []>} : vector<8x8xbf16>, vector<8x8xbf16>, vector<8x8xf32> -> vector<8x8xf32>
    %153 = arith.addf %152, %144 : vector<8x8xf32>
    %cst_62 = arith.constant dense<0xFF800000> : vector<8xf32>
    %154 = vector.multi_reduction <maximumf>, %153, %cst_62 [1] : vector<8x8xf32> to vector<8xf32>
    %155 = vector.shape_cast %154 : vector<8xf32> to vector<8x1xf32>
    %156 = vector.broadcast %155 : vector<8x1xf32> to vector<8x8xf32>
    %157 = arith.subf %153, %156 : vector<8x8xf32>
    %158 = math.exp %157 : vector<8x8xf32>
    %cst_63 = arith.constant dense<0.000000e+00> : vector<8xf32>
    %159 = vector.multi_reduction <add>, %158, %cst_63 [1] : vector<8x8xf32> to vector<8xf32>
    %160 = vector.shape_cast %159 : vector<8xf32> to vector<8x1xf32>
    %161 = tpu.reciprocal %160 {approx = true} : vector<8x1xf32> -> vector<8x1xf32>
    %162 = vector.broadcast %161 : vector<8x1xf32> to vector<8x8xf32>
    %163 = arith.mulf %158, %162 : vector<8x8xf32>
    %164 = arith.truncf %163 : vector<8x8xf32> to vector<8x8xbf16>
    %cst_64 = arith.constant dense<0.000000e+00> : vector<8x8xf32>
    %165 = tpu.matmul %164, %151, %cst_64 {dimension_numbers = #tpu.dot_dimension_numbers<[1], [0], [0], [1], [0, 0, 1, 1], [], []>} : vector<8x8xbf16>, vector<8x8xbf16>, vector<8x8xf32> -> vector<8x8xf32>
    %166 = arith.truncf %165 : vector<8x8xf32> to vector<8x8xbf16>
    %167 = vector.extract_strided_slice %10 {offsets = [0, 0], sizes = [8, 32], strides = [1, 1]} : vector<32x32xbf16> to vector<8x32xbf16>
    %cst_65 = arith.constant dense<0.000000e+00> : vector<8x32xf32>
    %168 = tpu.matmul %166, %167, %cst_65 {dimension_numbers = #tpu.dot_dimension_numbers<[1], [0], [0], [1], [0, 0, 1, 1], [], []>} : vector<8x8xbf16>, vector<8x32xbf16>, vector<8x32xf32> -> vector<8x32xf32>
    %169 = arith.addf %145, %168 : vector<8x32xf32>
    %170 = vector.extract_strided_slice %135 {offsets = [0, 8], sizes = [8, 8], strides = [1, 1]} : vector<8x32xf32> to vector<8x8xf32>
    %171 = arith.truncf %170 : vector<8x8xf32> to vector<8x8xbf16>
    %172 = vector.extract_strided_slice %136 {offsets = [0, 8], sizes = [8, 8], strides = [1, 1]} : vector<8x32xf32> to vector<8x8xf32>
    %173 = arith.truncf %172 : vector<8x8xf32> to vector<8x8xbf16>
    %174 = vector.extract_strided_slice %137 {offsets = [0, 8], sizes = [8, 8], strides = [1, 1]} : vector<8x32xf32> to vector<8x8xf32>
    %175 = arith.truncf %174 : vector<8x8xf32> to vector<8x8xbf16>
    %cst_66 = arith.constant dense<0.000000e+00> : vector<8x8xf32>
    %176 = tpu.matmul %171, %173, %cst_66 {dimension_numbers = #tpu.dot_dimension_numbers<[1], [1], [0], [0], [0, 0, 1, 0], [], []>} : vector<8x8xbf16>, vector<8x8xbf16>, vector<8x8xf32> -> vector<8x8xf32>
    %177 = arith.addf %176, %144 : vector<8x8xf32>
    %cst_67 = arith.constant dense<0xFF800000> : vector<8xf32>
    %178 = vector.multi_reduction <maximumf>, %177, %cst_67 [1] : vector<8x8xf32> to vector<8xf32>
    %179 = vector.shape_cast %178 : vector<8xf32> to vector<8x1xf32>
    %180 = vector.broadcast %179 : vector<8x1xf32> to vector<8x8xf32>
    %181 = arith.subf %177, %180 : vector<8x8xf32>
    %182 = math.exp %181 : vector<8x8xf32>
    %cst_68 = arith.constant dense<0.000000e+00> : vector<8xf32>
    %183 = vector.multi_reduction <add>, %182, %cst_68 [1] : vector<8x8xf32> to vector<8xf32>
    %184 = vector.shape_cast %183 : vector<8xf32> to vector<8x1xf32>
    %185 = tpu.reciprocal %184 {approx = true} : vector<8x1xf32> -> vector<8x1xf32>
    %186 = vector.broadcast %185 : vector<8x1xf32> to vector<8x8xf32>
    %187 = arith.mulf %182, %186 : vector<8x8xf32>
    %188 = arith.truncf %187 : vector<8x8xf32> to vector<8x8xbf16>
    %cst_69 = arith.constant dense<0.000000e+00> : vector<8x8xf32>
    %189 = tpu.matmul %188, %175, %cst_69 {dimension_numbers = #tpu.dot_dimension_numbers<[1], [0], [0], [1], [0, 0, 1, 1], [], []>} : vector<8x8xbf16>, vector<8x8xbf16>, vector<8x8xf32> -> vector<8x8xf32>
    %190 = arith.truncf %189 : vector<8x8xf32> to vector<8x8xbf16>
    %191 = vector.extract_strided_slice %10 {offsets = [8, 0], sizes = [8, 32], strides = [1, 1]} : vector<32x32xbf16> to vector<8x32xbf16>
    %cst_70 = arith.constant dense<0.000000e+00> : vector<8x32xf32>
    %192 = tpu.matmul %190, %191, %cst_70 {dimension_numbers = #tpu.dot_dimension_numbers<[1], [0], [0], [1], [0, 0, 1, 1], [], []>} : vector<8x8xbf16>, vector<8x32xbf16>, vector<8x32xf32> -> vector<8x32xf32>
    %193 = arith.addf %169, %192 : vector<8x32xf32>
    %194 = vector.extract_strided_slice %135 {offsets = [0, 16], sizes = [8, 8], strides = [1, 1]} : vector<8x32xf32> to vector<8x8xf32>
    %195 = arith.truncf %194 : vector<8x8xf32> to vector<8x8xbf16>
    %196 = vector.extract_strided_slice %136 {offsets = [0, 16], sizes = [8, 8], strides = [1, 1]} : vector<8x32xf32> to vector<8x8xf32>
    %197 = arith.truncf %196 : vector<8x8xf32> to vector<8x8xbf16>
    %198 = vector.extract_strided_slice %137 {offsets = [0, 16], sizes = [8, 8], strides = [1, 1]} : vector<8x32xf32> to vector<8x8xf32>
    %199 = arith.truncf %198 : vector<8x8xf32> to vector<8x8xbf16>
    %cst_71 = arith.constant dense<0.000000e+00> : vector<8x8xf32>
    %200 = tpu.matmul %195, %197, %cst_71 {dimension_numbers = #tpu.dot_dimension_numbers<[1], [1], [0], [0], [0, 0, 1, 0], [], []>} : vector<8x8xbf16>, vector<8x8xbf16>, vector<8x8xf32> -> vector<8x8xf32>
    %201 = arith.addf %200, %144 : vector<8x8xf32>
    %cst_72 = arith.constant dense<0xFF800000> : vector<8xf32>
    %202 = vector.multi_reduction <maximumf>, %201, %cst_72 [1] : vector<8x8xf32> to vector<8xf32>
    %203 = vector.shape_cast %202 : vector<8xf32> to vector<8x1xf32>
    %204 = vector.broadcast %203 : vector<8x1xf32> to vector<8x8xf32>
    %205 = arith.subf %201, %204 : vector<8x8xf32>
    %206 = math.exp %205 : vector<8x8xf32>
    %cst_73 = arith.constant dense<0.000000e+00> : vector<8xf32>
    %207 = vector.multi_reduction <add>, %206, %cst_73 [1] : vector<8x8xf32> to vector<8xf32>
    %208 = vector.shape_cast %207 : vector<8xf32> to vector<8x1xf32>
    %209 = tpu.reciprocal %208 {approx = true} : vector<8x1xf32> -> vector<8x1xf32>
    %210 = vector.broadcast %209 : vector<8x1xf32> to vector<8x8xf32>
    %211 = arith.mulf %206, %210 : vector<8x8xf32>
    %212 = arith.truncf %211 : vector<8x8xf32> to vector<8x8xbf16>
    %cst_74 = arith.constant dense<0.000000e+00> : vector<8x8xf32>
    %213 = tpu.matmul %212, %199, %cst_74 {dimension_numbers = #tpu.dot_dimension_numbers<[1], [0], [0], [1], [0, 0, 1, 1], [], []>} : vector<8x8xbf16>, vector<8x8xbf16>, vector<8x8xf32> -> vector<8x8xf32>
    %214 = arith.truncf %213 : vector<8x8xf32> to vector<8x8xbf16>
    %215 = vector.extract_strided_slice %10 {offsets = [16, 0], sizes = [8, 32], strides = [1, 1]} : vector<32x32xbf16> to vector<8x32xbf16>
    %cst_75 = arith.constant dense<0.000000e+00> : vector<8x32xf32>
    %216 = tpu.matmul %214, %215, %cst_75 {dimension_numbers = #tpu.dot_dimension_numbers<[1], [0], [0], [1], [0, 0, 1, 1], [], []>} : vector<8x8xbf16>, vector<8x32xbf16>, vector<8x32xf32> -> vector<8x32xf32>
    %217 = arith.addf %193, %216 : vector<8x32xf32>
    %218 = vector.extract_strided_slice %135 {offsets = [0, 24], sizes = [8, 8], strides = [1, 1]} : vector<8x32xf32> to vector<8x8xf32>
    %219 = arith.truncf %218 : vector<8x8xf32> to vector<8x8xbf16>
    %220 = vector.extract_strided_slice %136 {offsets = [0, 24], sizes = [8, 8], strides = [1, 1]} : vector<8x32xf32> to vector<8x8xf32>
    %221 = arith.truncf %220 : vector<8x8xf32> to vector<8x8xbf16>
    %222 = vector.extract_strided_slice %137 {offsets = [0, 24], sizes = [8, 8], strides = [1, 1]} : vector<8x32xf32> to vector<8x8xf32>
    %223 = arith.truncf %222 : vector<8x8xf32> to vector<8x8xbf16>
    %cst_76 = arith.constant dense<0.000000e+00> : vector<8x8xf32>
    %224 = tpu.matmul %219, %221, %cst_76 {dimension_numbers = #tpu.dot_dimension_numbers<[1], [1], [0], [0], [0, 0, 1, 0], [], []>} : vector<8x8xbf16>, vector<8x8xbf16>, vector<8x8xf32> -> vector<8x8xf32>
    %225 = arith.addf %224, %144 : vector<8x8xf32>
    %cst_77 = arith.constant dense<0xFF800000> : vector<8xf32>
    %226 = vector.multi_reduction <maximumf>, %225, %cst_77 [1] : vector<8x8xf32> to vector<8xf32>
    %227 = vector.shape_cast %226 : vector<8xf32> to vector<8x1xf32>
    %228 = vector.broadcast %227 : vector<8x1xf32> to vector<8x8xf32>
    %229 = arith.subf %225, %228 : vector<8x8xf32>
    %230 = math.exp %229 : vector<8x8xf32>
    %cst_78 = arith.constant dense<0.000000e+00> : vector<8xf32>
    %231 = vector.multi_reduction <add>, %230, %cst_78 [1] : vector<8x8xf32> to vector<8xf32>
    %232 = vector.shape_cast %231 : vector<8xf32> to vector<8x1xf32>
    %233 = tpu.reciprocal %232 {approx = true} : vector<8x1xf32> -> vector<8x1xf32>
    %234 = vector.broadcast %233 : vector<8x1xf32> to vector<8x8xf32>
    %235 = arith.mulf %230, %234 : vector<8x8xf32>
    %236 = arith.truncf %235 : vector<8x8xf32> to vector<8x8xbf16>
    %cst_79 = arith.constant dense<0.000000e+00> : vector<8x8xf32>
    %237 = tpu.matmul %236, %223, %cst_79 {dimension_numbers = #tpu.dot_dimension_numbers<[1], [0], [0], [1], [0, 0, 1, 1], [], []>} : vector<8x8xbf16>, vector<8x8xbf16>, vector<8x8xf32> -> vector<8x8xf32>
    %238 = arith.truncf %237 : vector<8x8xf32> to vector<8x8xbf16>
    %239 = vector.extract_strided_slice %10 {offsets = [24, 0], sizes = [8, 32], strides = [1, 1]} : vector<32x32xbf16> to vector<8x32xbf16>
    %cst_80 = arith.constant dense<0.000000e+00> : vector<8x32xf32>
    %240 = tpu.matmul %238, %239, %cst_80 {dimension_numbers = #tpu.dot_dimension_numbers<[1], [0], [0], [1], [0, 0, 1, 1], [], []>} : vector<8x8xbf16>, vector<8x32xbf16>, vector<8x32xf32> -> vector<8x32xf32>
    %241 = arith.addf %217, %240 : vector<8x32xf32>
    %242 = tpu.concatenate %134, %241 in 0 : vector<8x32xf32>, vector<8x32xf32> -> vector<16x32xf32>
    %243 = vector.broadcast %11 : vector<1x32xf32> to vector<16x32xf32>
    %244 = arith.addf %242, %243 : vector<16x32xf32>
    %245 = arith.addf %1, %244 : vector<16x32xf32>
    %cst_81 = arith.constant dense<0.000000e+00> : vector<16xf32>
    %246 = vector.multi_reduction <add>, %245, %cst_81 [1] : vector<16x32xf32> to vector<16xf32>
    %247 = vector.shape_cast %246 : vector<16xf32> to vector<16x1xf32>
    %cst_82 = arith.constant 3.200000e+01 : f32
    %248 = vector.broadcast %cst_82 : f32 to vector<16x1xf32>
    %249 = arith.divf %247, %248 : vector<16x1xf32>
    %250 = vector.broadcast %249 : vector<16x1xf32> to vector<16x32xf32>
    %251 = arith.subf %245, %250 : vector<16x32xf32>
    %252 = arith.mulf %251, %251 : vector<16x32xf32>
    %cst_83 = arith.constant dense<0.000000e+00> : vector<16xf32>
    %253 = vector.multi_reduction <add>, %252, %cst_83 [1] : vector<16x32xf32> to vector<16xf32>
    %254 = vector.shape_cast %253 : vector<16xf32> to vector<16x1xf32>
    %cst_84 = arith.constant 3.200000e+01 : f32
    %255 = vector.broadcast %cst_84 : f32 to vector<16x1xf32>
    %256 = arith.divf %254, %255 : vector<16x1xf32>
    %257 = vector.broadcast %249 : vector<16x1xf32> to vector<16x32xf32>
    %258 = arith.subf %245, %257 : vector<16x32xf32>
    %259 = vector.broadcast %12 : vector<1x32xf32> to vector<16x32xf32>
    %260 = arith.mulf %259, %258 : vector<16x32xf32>
    %cst_85 = arith.constant 9.99999997E-7 : f32
    %261 = vector.broadcast %cst_85 : f32 to vector<16x1xf32>
    %262 = arith.addf %256, %261 : vector<16x1xf32>
    %263 = math.rsqrt %262 : vector<16x1xf32>
    %264 = vector.broadcast %263 : vector<16x1xf32> to vector<16x32xf32>
    %265 = arith.mulf %260, %264 : vector<16x32xf32>
    %266 = vector.broadcast %13 : vector<1x32xf32> to vector<16x32xf32>
    %267 = arith.addf %265, %266 : vector<16x32xf32>
    %c0_86 = arith.constant 0 : index
    %c0_87 = arith.constant 0 : index
    %268 = vector.load %arg15[%c0_86, %c0_87] : memref<32x32xbf16, #tpu.memory_space<vmem>>, vector<32x32xbf16>
    %c0_88 = arith.constant 0 : index
    %c0_89 = arith.constant 0 : index
    %269 = vector.load %arg16[%c0_88, %c0_89] : memref<1x32xf32, #tpu.memory_space<vmem>>, vector<1x32xf32>
    %c0_90 = arith.constant 0 : index
    %c0_91 = arith.constant 0 : index
    %270 = vector.load %arg17[%c0_90, %c0_91] : memref<32x32xbf16, #tpu.memory_space<vmem>>, vector<32x32xbf16>
    %c0_92 = arith.constant 0 : index
    %c0_93 = arith.constant 0 : index
    %271 = vector.load %arg18[%c0_92, %c0_93] : memref<1x32xf32, #tpu.memory_space<vmem>>, vector<1x32xf32>
    %c0_94 = arith.constant 0 : index
    %c0_95 = arith.constant 0 : index
    %272 = vector.load %arg19[%c0_94, %c0_95] : memref<32x32xbf16, #tpu.memory_space<vmem>>, vector<32x32xbf16>
    %c0_96 = arith.constant 0 : index
    %c0_97 = arith.constant 0 : index
    %273 = vector.load %arg20[%c0_96, %c0_97] : memref<1x32xf32, #tpu.memory_space<vmem>>, vector<1x32xf32>
    %c0_98 = arith.constant 0 : index
    %c0_99 = arith.constant 0 : index
    %274 = vector.load %arg21[%c0_98, %c0_99] : memref<32x32xbf16, #tpu.memory_space<vmem>>, vector<32x32xbf16>
    %c0_100 = arith.constant 0 : index
    %c0_101 = arith.constant 0 : index
    %275 = vector.load %arg22[%c0_100, %c0_101] : memref<1x32xf32, #tpu.memory_space<vmem>>, vector<1x32xf32>
    %c0_102 = arith.constant 0 : index
    %c0_103 = arith.constant 0 : index
    %276 = vector.load %arg23[%c0_102, %c0_103] : memref<1x32xf32, #tpu.memory_space<vmem>>, vector<1x32xf32>
    %c0_104 = arith.constant 0 : index
    %c0_105 = arith.constant 0 : index
    %277 = vector.load %arg24[%c0_104, %c0_105] : memref<1x32xf32, #tpu.memory_space<vmem>>, vector<1x32xf32>
    %278 = arith.truncf %267 : vector<16x32xf32> to vector<16x32xbf16>
    %cst_106 = arith.constant dense<0.000000e+00> : vector<16x32xf32>
    %279 = tpu.matmul %278, %268, %cst_106 {dimension_numbers = #tpu.dot_dimension_numbers<[1], [0], [0], [1], [0, 0, 1, 1], [], []>} : vector<16x32xbf16>, vector<32x32xbf16>, vector<16x32xf32> -> vector<16x32xf32>
    %280 = vector.broadcast %269 : vector<1x32xf32> to vector<16x32xf32>
    %281 = arith.addf %279, %280 : vector<16x32xf32>
    %cst_107 = arith.constant 0.353553385 : f32
    %282 = vector.broadcast %cst_107 : f32 to vector<16x32xf32>
    %283 = arith.mulf %281, %282 : vector<16x32xf32>
    %284 = arith.truncf %3 : vector<32x32xf32> to vector<32x32xbf16>
    %cst_108 = arith.constant dense<0.000000e+00> : vector<32x32xf32>
    %285 = tpu.matmul %284, %270, %cst_108 {dimension_numbers = #tpu.dot_dimension_numbers<[1], [0], [0], [1], [0, 0, 1, 1], [], []>} : vector<32x32xbf16>, vector<32x32xbf16>, vector<32x32xf32> -> vector<32x32xf32>
    %286 = vector.broadcast %271 : vector<1x32xf32> to vector<32x32xf32>
    %287 = arith.addf %285, %286 : vector<32x32xf32>
    %288 = arith.truncf %3 : vector<32x32xf32> to vector<32x32xbf16>
    %cst_109 = arith.constant dense<0.000000e+00> : vector<32x32xf32>
    %289 = tpu.matmul %288, %272, %cst_109 {dimension_numbers = #tpu.dot_dimension_numbers<[1], [0], [0], [1], [0, 0, 1, 1], [], []>} : vector<32x32xbf16>, vector<32x32xbf16>, vector<32x32xf32> -> vector<32x32xf32>
    %290 = vector.broadcast %273 : vector<1x32xf32> to vector<32x32xf32>
    %291 = arith.addf %289, %290 : vector<32x32xf32>
    %292 = vector.extract_strided_slice %283 {offsets = [0, 0], sizes = [8, 32], strides = [1, 1]} : vector<16x32xf32> to vector<8x32xf32>
    %293 = vector.extract_strided_slice %287 {offsets = [0, 0], sizes = [16, 32], strides = [1, 1]} : vector<32x32xf32> to vector<16x32xf32>
    %294 = vector.extract_strided_slice %291 {offsets = [0, 0], sizes = [16, 32], strides = [1, 1]} : vector<32x32xf32> to vector<16x32xf32>
    %c0_110 = arith.constant 0 : index
    %c0_111 = arith.constant 0 : index
    %c0_112 = arith.constant 0 : index
    %295 = vector.load %arg4[%c0_110, %c0_111, %c0_112] : memref<2x8x16xf32, #tpu.memory_space<vmem>>, vector<1x8x16xf32>
    %296 = vector.shape_cast %295 : vector<1x8x16xf32> to vector<8x16xf32>
    %cst_113 = arith.constant 0.000000e+00 : f32
    %297 = vector.broadcast %cst_113 : f32 to vector<8x16xf32>
    %298 = arith.cmpf ogt, %296, %297 : vector<8x16xf32>
    %cst_114 = arith.constant 0.000000e+00 : f32
    %cst_115 = arith.constant -1.000000e+09 : f32
    %299 = vector.broadcast %cst_114 : f32 to vector<8x16xf32>
    %300 = vector.broadcast %cst_115 : f32 to vector<8x16xf32>
    %301 = arith.select %298, %299, %300 : vector<8x16xi1>, vector<8x16xf32>
    %cst_116 = arith.constant 0.000000e+00 : f32
    %302 = vector.broadcast %cst_116 : f32 to vector<8x32xf32>
    %303 = vector.extract_strided_slice %292 {offsets = [0, 0], sizes = [8, 8], strides = [1, 1]} : vector<8x32xf32> to vector<8x8xf32>
    %304 = arith.truncf %303 : vector<8x8xf32> to vector<8x8xbf16>
    %305 = vector.extract_strided_slice %293 {offsets = [0, 0], sizes = [16, 8], strides = [1, 1]} : vector<16x32xf32> to vector<16x8xf32>
    %306 = arith.truncf %305 : vector<16x8xf32> to vector<16x8xbf16>
    %307 = vector.extract_strided_slice %294 {offsets = [0, 0], sizes = [16, 8], strides = [1, 1]} : vector<16x32xf32> to vector<16x8xf32>
    %308 = arith.truncf %307 : vector<16x8xf32> to vector<16x8xbf16>
    %cst_117 = arith.constant dense<0.000000e+00> : vector<8x16xf32>
    %309 = tpu.matmul %304, %306, %cst_117 {dimension_numbers = #tpu.dot_dimension_numbers<[1], [1], [0], [0], [0, 0, 1, 0], [], []>} : vector<8x8xbf16>, vector<16x8xbf16>, vector<8x16xf32> -> vector<8x16xf32>
    %310 = arith.addf %309, %301 : vector<8x16xf32>
    %cst_118 = arith.constant dense<0xFF800000> : vector<8xf32>
    %311 = vector.multi_reduction <maximumf>, %310, %cst_118 [1] : vector<8x16xf32> to vector<8xf32>
    %312 = vector.shape_cast %311 : vector<8xf32> to vector<8x1xf32>
    %313 = vector.broadcast %312 : vector<8x1xf32> to vector<8x16xf32>
    %314 = arith.subf %310, %313 : vector<8x16xf32>
    %315 = math.exp %314 : vector<8x16xf32>
    %cst_119 = arith.constant dense<0.000000e+00> : vector<8xf32>
    %316 = vector.multi_reduction <add>, %315, %cst_119 [1] : vector<8x16xf32> to vector<8xf32>
    %317 = vector.shape_cast %316 : vector<8xf32> to vector<8x1xf32>
    %318 = tpu.reciprocal %317 {approx = true} : vector<8x1xf32> -> vector<8x1xf32>
    %319 = vector.broadcast %318 : vector<8x1xf32> to vector<8x16xf32>
    %320 = arith.mulf %315, %319 : vector<8x16xf32>
    %321 = arith.truncf %320 : vector<8x16xf32> to vector<8x16xbf16>
    %cst_120 = arith.constant dense<0.000000e+00> : vector<8x8xf32>
    %322 = tpu.matmul %321, %308, %cst_120 {dimension_numbers = #tpu.dot_dimension_numbers<[1], [0], [0], [1], [0, 0, 1, 1], [], []>} : vector<8x16xbf16>, vector<16x8xbf16>, vector<8x8xf32> -> vector<8x8xf32>
    %323 = arith.truncf %322 : vector<8x8xf32> to vector<8x8xbf16>
    %324 = vector.extract_strided_slice %274 {offsets = [0, 0], sizes = [8, 32], strides = [1, 1]} : vector<32x32xbf16> to vector<8x32xbf16>
    %cst_121 = arith.constant dense<0.000000e+00> : vector<8x32xf32>
    %325 = tpu.matmul %323, %324, %cst_121 {dimension_numbers = #tpu.dot_dimension_numbers<[1], [0], [0], [1], [0, 0, 1, 1], [], []>} : vector<8x8xbf16>, vector<8x32xbf16>, vector<8x32xf32> -> vector<8x32xf32>
    %326 = arith.addf %302, %325 : vector<8x32xf32>
    %327 = vector.extract_strided_slice %292 {offsets = [0, 8], sizes = [8, 8], strides = [1, 1]} : vector<8x32xf32> to vector<8x8xf32>
    %328 = arith.truncf %327 : vector<8x8xf32> to vector<8x8xbf16>
    %329 = vector.extract_strided_slice %293 {offsets = [0, 8], sizes = [16, 8], strides = [1, 1]} : vector<16x32xf32> to vector<16x8xf32>
    %330 = arith.truncf %329 : vector<16x8xf32> to vector<16x8xbf16>
    %331 = vector.extract_strided_slice %294 {offsets = [0, 8], sizes = [16, 8], strides = [1, 1]} : vector<16x32xf32> to vector<16x8xf32>
    %332 = arith.truncf %331 : vector<16x8xf32> to vector<16x8xbf16>
    %cst_122 = arith.constant dense<0.000000e+00> : vector<8x16xf32>
    %333 = tpu.matmul %328, %330, %cst_122 {dimension_numbers = #tpu.dot_dimension_numbers<[1], [1], [0], [0], [0, 0, 1, 0], [], []>} : vector<8x8xbf16>, vector<16x8xbf16>, vector<8x16xf32> -> vector<8x16xf32>
    %334 = arith.addf %333, %301 : vector<8x16xf32>
    %cst_123 = arith.constant dense<0xFF800000> : vector<8xf32>
    %335 = vector.multi_reduction <maximumf>, %334, %cst_123 [1] : vector<8x16xf32> to vector<8xf32>
    %336 = vector.shape_cast %335 : vector<8xf32> to vector<8x1xf32>
    %337 = vector.broadcast %336 : vector<8x1xf32> to vector<8x16xf32>
    %338 = arith.subf %334, %337 : vector<8x16xf32>
    %339 = math.exp %338 : vector<8x16xf32>
    %cst_124 = arith.constant dense<0.000000e+00> : vector<8xf32>
    %340 = vector.multi_reduction <add>, %339, %cst_124 [1] : vector<8x16xf32> to vector<8xf32>
    %341 = vector.shape_cast %340 : vector<8xf32> to vector<8x1xf32>
    %342 = tpu.reciprocal %341 {approx = true} : vector<8x1xf32> -> vector<8x1xf32>
    %343 = vector.broadcast %342 : vector<8x1xf32> to vector<8x16xf32>
    %344 = arith.mulf %339, %343 : vector<8x16xf32>
    %345 = arith.truncf %344 : vector<8x16xf32> to vector<8x16xbf16>
    %cst_125 = arith.constant dense<0.000000e+00> : vector<8x8xf32>
    %346 = tpu.matmul %345, %332, %cst_125 {dimension_numbers = #tpu.dot_dimension_numbers<[1], [0], [0], [1], [0, 0, 1, 1], [], []>} : vector<8x16xbf16>, vector<16x8xbf16>, vector<8x8xf32> -> vector<8x8xf32>
    %347 = arith.truncf %346 : vector<8x8xf32> to vector<8x8xbf16>
    %348 = vector.extract_strided_slice %274 {offsets = [8, 0], sizes = [8, 32], strides = [1, 1]} : vector<32x32xbf16> to vector<8x32xbf16>
    %cst_126 = arith.constant dense<0.000000e+00> : vector<8x32xf32>
    %349 = tpu.matmul %347, %348, %cst_126 {dimension_numbers = #tpu.dot_dimension_numbers<[1], [0], [0], [1], [0, 0, 1, 1], [], []>} : vector<8x8xbf16>, vector<8x32xbf16>, vector<8x32xf32> -> vector<8x32xf32>
    %350 = arith.addf %326, %349 : vector<8x32xf32>
    %351 = vector.extract_strided_slice %292 {offsets = [0, 16], sizes = [8, 8], strides = [1, 1]} : vector<8x32xf32> to vector<8x8xf32>
    %352 = arith.truncf %351 : vector<8x8xf32> to vector<8x8xbf16>
    %353 = vector.extract_strided_slice %293 {offsets = [0, 16], sizes = [16, 8], strides = [1, 1]} : vector<16x32xf32> to vector<16x8xf32>
    %354 = arith.truncf %353 : vector<16x8xf32> to vector<16x8xbf16>
    %355 = vector.extract_strided_slice %294 {offsets = [0, 16], sizes = [16, 8], strides = [1, 1]} : vector<16x32xf32> to vector<16x8xf32>
    %356 = arith.truncf %355 : vector<16x8xf32> to vector<16x8xbf16>
    %cst_127 = arith.constant dense<0.000000e+00> : vector<8x16xf32>
    %357 = tpu.matmul %352, %354, %cst_127 {dimension_numbers = #tpu.dot_dimension_numbers<[1], [1], [0], [0], [0, 0, 1, 0], [], []>} : vector<8x8xbf16>, vector<16x8xbf16>, vector<8x16xf32> -> vector<8x16xf32>
    %358 = arith.addf %357, %301 : vector<8x16xf32>
    %cst_128 = arith.constant dense<0xFF800000> : vector<8xf32>
    %359 = vector.multi_reduction <maximumf>, %358, %cst_128 [1] : vector<8x16xf32> to vector<8xf32>
    %360 = vector.shape_cast %359 : vector<8xf32> to vector<8x1xf32>
    %361 = vector.broadcast %360 : vector<8x1xf32> to vector<8x16xf32>
    %362 = arith.subf %358, %361 : vector<8x16xf32>
    %363 = math.exp %362 : vector<8x16xf32>
    %cst_129 = arith.constant dense<0.000000e+00> : vector<8xf32>
    %364 = vector.multi_reduction <add>, %363, %cst_129 [1] : vector<8x16xf32> to vector<8xf32>
    %365 = vector.shape_cast %364 : vector<8xf32> to vector<8x1xf32>
    %366 = tpu.reciprocal %365 {approx = true} : vector<8x1xf32> -> vector<8x1xf32>
    %367 = vector.broadcast %366 : vector<8x1xf32> to vector<8x16xf32>
    %368 = arith.mulf %363, %367 : vector<8x16xf32>
    %369 = arith.truncf %368 : vector<8x16xf32> to vector<8x16xbf16>
    %cst_130 = arith.constant dense<0.000000e+00> : vector<8x8xf32>
    %370 = tpu.matmul %369, %356, %cst_130 {dimension_numbers = #tpu.dot_dimension_numbers<[1], [0], [0], [1], [0, 0, 1, 1], [], []>} : vector<8x16xbf16>, vector<16x8xbf16>, vector<8x8xf32> -> vector<8x8xf32>
    %371 = arith.truncf %370 : vector<8x8xf32> to vector<8x8xbf16>
    %372 = vector.extract_strided_slice %274 {offsets = [16, 0], sizes = [8, 32], strides = [1, 1]} : vector<32x32xbf16> to vector<8x32xbf16>
    %cst_131 = arith.constant dense<0.000000e+00> : vector<8x32xf32>
    %373 = tpu.matmul %371, %372, %cst_131 {dimension_numbers = #tpu.dot_dimension_numbers<[1], [0], [0], [1], [0, 0, 1, 1], [], []>} : vector<8x8xbf16>, vector<8x32xbf16>, vector<8x32xf32> -> vector<8x32xf32>
    %374 = arith.addf %350, %373 : vector<8x32xf32>
    %375 = vector.extract_strided_slice %292 {offsets = [0, 24], sizes = [8, 8], strides = [1, 1]} : vector<8x32xf32> to vector<8x8xf32>
    %376 = arith.truncf %375 : vector<8x8xf32> to vector<8x8xbf16>
    %377 = vector.extract_strided_slice %293 {offsets = [0, 24], sizes = [16, 8], strides = [1, 1]} : vector<16x32xf32> to vector<16x8xf32>
    %378 = arith.truncf %377 : vector<16x8xf32> to vector<16x8xbf16>
    %379 = vector.extract_strided_slice %294 {offsets = [0, 24], sizes = [16, 8], strides = [1, 1]} : vector<16x32xf32> to vector<16x8xf32>
    %380 = arith.truncf %379 : vector<16x8xf32> to vector<16x8xbf16>
    %cst_132 = arith.constant dense<0.000000e+00> : vector<8x16xf32>
    %381 = tpu.matmul %376, %378, %cst_132 {dimension_numbers = #tpu.dot_dimension_numbers<[1], [1], [0], [0], [0, 0, 1, 0], [], []>} : vector<8x8xbf16>, vector<16x8xbf16>, vector<8x16xf32> -> vector<8x16xf32>
    %382 = arith.addf %381, %301 : vector<8x16xf32>
    %cst_133 = arith.constant dense<0xFF800000> : vector<8xf32>
    %383 = vector.multi_reduction <maximumf>, %382, %cst_133 [1] : vector<8x16xf32> to vector<8xf32>
    %384 = vector.shape_cast %383 : vector<8xf32> to vector<8x1xf32>
    %385 = vector.broadcast %384 : vector<8x1xf32> to vector<8x16xf32>
    %386 = arith.subf %382, %385 : vector<8x16xf32>
    %387 = math.exp %386 : vector<8x16xf32>
    %cst_134 = arith.constant dense<0.000000e+00> : vector<8xf32>
    %388 = vector.multi_reduction <add>, %387, %cst_134 [1] : vector<8x16xf32> to vector<8xf32>
    %389 = vector.shape_cast %388 : vector<8xf32> to vector<8x1xf32>
    %390 = tpu.reciprocal %389 {approx = true} : vector<8x1xf32> -> vector<8x1xf32>
    %391 = vector.broadcast %390 : vector<8x1xf32> to vector<8x16xf32>
    %392 = arith.mulf %387, %391 : vector<8x16xf32>
    %393 = arith.truncf %392 : vector<8x16xf32> to vector<8x16xbf16>
    %cst_135 = arith.constant dense<0.000000e+00> : vector<8x8xf32>
    %394 = tpu.matmul %393, %380, %cst_135 {dimension_numbers = #tpu.dot_dimension_numbers<[1], [0], [0], [1], [0, 0, 1, 1], [], []>} : vector<8x16xbf16>, vector<16x8xbf16>, vector<8x8xf32> -> vector<8x8xf32>
    %395 = arith.truncf %394 : vector<8x8xf32> to vector<8x8xbf16>
    %396 = vector.extract_strided_slice %274 {offsets = [24, 0], sizes = [8, 32], strides = [1, 1]} : vector<32x32xbf16> to vector<8x32xbf16>
    %cst_136 = arith.constant dense<0.000000e+00> : vector<8x32xf32>
    %397 = tpu.matmul %395, %396, %cst_136 {dimension_numbers = #tpu.dot_dimension_numbers<[1], [0], [0], [1], [0, 0, 1, 1], [], []>} : vector<8x8xbf16>, vector<8x32xbf16>, vector<8x32xf32> -> vector<8x32xf32>
    %398 = arith.addf %374, %397 : vector<8x32xf32>
    %399 = vector.extract_strided_slice %283 {offsets = [8, 0], sizes = [8, 32], strides = [1, 1]} : vector<16x32xf32> to vector<8x32xf32>
    %400 = vector.extract_strided_slice %287 {offsets = [16, 0], sizes = [16, 32], strides = [1, 1]} : vector<32x32xf32> to vector<16x32xf32>
    %401 = vector.extract_strided_slice %291 {offsets = [16, 0], sizes = [16, 32], strides = [1, 1]} : vector<32x32xf32> to vector<16x32xf32>
    %c1_137 = arith.constant 1 : index
    %c0_138 = arith.constant 0 : index
    %c0_139 = arith.constant 0 : index
    %402 = vector.load %arg4[%c1_137, %c0_138, %c0_139] : memref<2x8x16xf32, #tpu.memory_space<vmem>>, vector<1x8x16xf32>
    %403 = vector.shape_cast %402 : vector<1x8x16xf32> to vector<8x16xf32>
    %cst_140 = arith.constant 0.000000e+00 : f32
    %404 = vector.broadcast %cst_140 : f32 to vector<8x16xf32>
    %405 = arith.cmpf ogt, %403, %404 : vector<8x16xf32>
    %cst_141 = arith.constant 0.000000e+00 : f32
    %cst_142 = arith.constant -1.000000e+09 : f32
    %406 = vector.broadcast %cst_141 : f32 to vector<8x16xf32>
    %407 = vector.broadcast %cst_142 : f32 to vector<8x16xf32>
    %408 = arith.select %405, %406, %407 : vector<8x16xi1>, vector<8x16xf32>
    %cst_143 = arith.constant 0.000000e+00 : f32
    %409 = vector.broadcast %cst_143 : f32 to vector<8x32xf32>
    %410 = vector.extract_strided_slice %399 {offsets = [0, 0], sizes = [8, 8], strides = [1, 1]} : vector<8x32xf32> to vector<8x8xf32>
    %411 = arith.truncf %410 : vector<8x8xf32> to vector<8x8xbf16>
    %412 = vector.extract_strided_slice %400 {offsets = [0, 0], sizes = [16, 8], strides = [1, 1]} : vector<16x32xf32> to vector<16x8xf32>
    %413 = arith.truncf %412 : vector<16x8xf32> to vector<16x8xbf16>
    %414 = vector.extract_strided_slice %401 {offsets = [0, 0], sizes = [16, 8], strides = [1, 1]} : vector<16x32xf32> to vector<16x8xf32>
    %415 = arith.truncf %414 : vector<16x8xf32> to vector<16x8xbf16>
    %cst_144 = arith.constant dense<0.000000e+00> : vector<8x16xf32>
    %416 = tpu.matmul %411, %413, %cst_144 {dimension_numbers = #tpu.dot_dimension_numbers<[1], [1], [0], [0], [0, 0, 1, 0], [], []>} : vector<8x8xbf16>, vector<16x8xbf16>, vector<8x16xf32> -> vector<8x16xf32>
    %417 = arith.addf %416, %408 : vector<8x16xf32>
    %cst_145 = arith.constant dense<0xFF800000> : vector<8xf32>
    %418 = vector.multi_reduction <maximumf>, %417, %cst_145 [1] : vector<8x16xf32> to vector<8xf32>
    %419 = vector.shape_cast %418 : vector<8xf32> to vector<8x1xf32>
    %420 = vector.broadcast %419 : vector<8x1xf32> to vector<8x16xf32>
    %421 = arith.subf %417, %420 : vector<8x16xf32>
    %422 = math.exp %421 : vector<8x16xf32>
    %cst_146 = arith.constant dense<0.000000e+00> : vector<8xf32>
    %423 = vector.multi_reduction <add>, %422, %cst_146 [1] : vector<8x16xf32> to vector<8xf32>
    %424 = vector.shape_cast %423 : vector<8xf32> to vector<8x1xf32>
    %425 = tpu.reciprocal %424 {approx = true} : vector<8x1xf32> -> vector<8x1xf32>
    %426 = vector.broadcast %425 : vector<8x1xf32> to vector<8x16xf32>
    %427 = arith.mulf %422, %426 : vector<8x16xf32>
    %428 = arith.truncf %427 : vector<8x16xf32> to vector<8x16xbf16>
    %cst_147 = arith.constant dense<0.000000e+00> : vector<8x8xf32>
    %429 = tpu.matmul %428, %415, %cst_147 {dimension_numbers = #tpu.dot_dimension_numbers<[1], [0], [0], [1], [0, 0, 1, 1], [], []>} : vector<8x16xbf16>, vector<16x8xbf16>, vector<8x8xf32> -> vector<8x8xf32>
    %430 = arith.truncf %429 : vector<8x8xf32> to vector<8x8xbf16>
    %431 = vector.extract_strided_slice %274 {offsets = [0, 0], sizes = [8, 32], strides = [1, 1]} : vector<32x32xbf16> to vector<8x32xbf16>
    %cst_148 = arith.constant dense<0.000000e+00> : vector<8x32xf32>
    %432 = tpu.matmul %430, %431, %cst_148 {dimension_numbers = #tpu.dot_dimension_numbers<[1], [0], [0], [1], [0, 0, 1, 1], [], []>} : vector<8x8xbf16>, vector<8x32xbf16>, vector<8x32xf32> -> vector<8x32xf32>
    %433 = arith.addf %409, %432 : vector<8x32xf32>
    %434 = vector.extract_strided_slice %399 {offsets = [0, 8], sizes = [8, 8], strides = [1, 1]} : vector<8x32xf32> to vector<8x8xf32>
    %435 = arith.truncf %434 : vector<8x8xf32> to vector<8x8xbf16>
    %436 = vector.extract_strided_slice %400 {offsets = [0, 8], sizes = [16, 8], strides = [1, 1]} : vector<16x32xf32> to vector<16x8xf32>
    %437 = arith.truncf %436 : vector<16x8xf32> to vector<16x8xbf16>
    %438 = vector.extract_strided_slice %401 {offsets = [0, 8], sizes = [16, 8], strides = [1, 1]} : vector<16x32xf32> to vector<16x8xf32>
    %439 = arith.truncf %438 : vector<16x8xf32> to vector<16x8xbf16>
    %cst_149 = arith.constant dense<0.000000e+00> : vector<8x16xf32>
    %440 = tpu.matmul %435, %437, %cst_149 {dimension_numbers = #tpu.dot_dimension_numbers<[1], [1], [0], [0], [0, 0, 1, 0], [], []>} : vector<8x8xbf16>, vector<16x8xbf16>, vector<8x16xf32> -> vector<8x16xf32>
    %441 = arith.addf %440, %408 : vector<8x16xf32>
    %cst_150 = arith.constant dense<0xFF800000> : vector<8xf32>
    %442 = vector.multi_reduction <maximumf>, %441, %cst_150 [1] : vector<8x16xf32> to vector<8xf32>
    %443 = vector.shape_cast %442 : vector<8xf32> to vector<8x1xf32>
    %444 = vector.broadcast %443 : vector<8x1xf32> to vector<8x16xf32>
    %445 = arith.subf %441, %444 : vector<8x16xf32>
    %446 = math.exp %445 : vector<8x16xf32>
    %cst_151 = arith.constant dense<0.000000e+00> : vector<8xf32>
    %447 = vector.multi_reduction <add>, %446, %cst_151 [1] : vector<8x16xf32> to vector<8xf32>
    %448 = vector.shape_cast %447 : vector<8xf32> to vector<8x1xf32>
    %449 = tpu.reciprocal %448 {approx = true} : vector<8x1xf32> -> vector<8x1xf32>
    %450 = vector.broadcast %449 : vector<8x1xf32> to vector<8x16xf32>
    %451 = arith.mulf %446, %450 : vector<8x16xf32>
    %452 = arith.truncf %451 : vector<8x16xf32> to vector<8x16xbf16>
    %cst_152 = arith.constant dense<0.000000e+00> : vector<8x8xf32>
    %453 = tpu.matmul %452, %439, %cst_152 {dimension_numbers = #tpu.dot_dimension_numbers<[1], [0], [0], [1], [0, 0, 1, 1], [], []>} : vector<8x16xbf16>, vector<16x8xbf16>, vector<8x8xf32> -> vector<8x8xf32>
    %454 = arith.truncf %453 : vector<8x8xf32> to vector<8x8xbf16>
    %455 = vector.extract_strided_slice %274 {offsets = [8, 0], sizes = [8, 32], strides = [1, 1]} : vector<32x32xbf16> to vector<8x32xbf16>
    %cst_153 = arith.constant dense<0.000000e+00> : vector<8x32xf32>
    %456 = tpu.matmul %454, %455, %cst_153 {dimension_numbers = #tpu.dot_dimension_numbers<[1], [0], [0], [1], [0, 0, 1, 1], [], []>} : vector<8x8xbf16>, vector<8x32xbf16>, vector<8x32xf32> -> vector<8x32xf32>
    %457 = arith.addf %433, %456 : vector<8x32xf32>
    %458 = vector.extract_strided_slice %399 {offsets = [0, 16], sizes = [8, 8], strides = [1, 1]} : vector<8x32xf32> to vector<8x8xf32>
    %459 = arith.truncf %458 : vector<8x8xf32> to vector<8x8xbf16>
    %460 = vector.extract_strided_slice %400 {offsets = [0, 16], sizes = [16, 8], strides = [1, 1]} : vector<16x32xf32> to vector<16x8xf32>
    %461 = arith.truncf %460 : vector<16x8xf32> to vector<16x8xbf16>
    %462 = vector.extract_strided_slice %401 {offsets = [0, 16], sizes = [16, 8], strides = [1, 1]} : vector<16x32xf32> to vector<16x8xf32>
    %463 = arith.truncf %462 : vector<16x8xf32> to vector<16x8xbf16>
    %cst_154 = arith.constant dense<0.000000e+00> : vector<8x16xf32>
    %464 = tpu.matmul %459, %461, %cst_154 {dimension_numbers = #tpu.dot_dimension_numbers<[1], [1], [0], [0], [0, 0, 1, 0], [], []>} : vector<8x8xbf16>, vector<16x8xbf16>, vector<8x16xf32> -> vector<8x16xf32>
    %465 = arith.addf %464, %408 : vector<8x16xf32>
    %cst_155 = arith.constant dense<0xFF800000> : vector<8xf32>
    %466 = vector.multi_reduction <maximumf>, %465, %cst_155 [1] : vector<8x16xf32> to vector<8xf32>
    %467 = vector.shape_cast %466 : vector<8xf32> to vector<8x1xf32>
    %468 = vector.broadcast %467 : vector<8x1xf32> to vector<8x16xf32>
    %469 = arith.subf %465, %468 : vector<8x16xf32>
    %470 = math.exp %469 : vector<8x16xf32>
    %cst_156 = arith.constant dense<0.000000e+00> : vector<8xf32>
    %471 = vector.multi_reduction <add>, %470, %cst_156 [1] : vector<8x16xf32> to vector<8xf32>
    %472 = vector.shape_cast %471 : vector<8xf32> to vector<8x1xf32>
    %473 = tpu.reciprocal %472 {approx = true} : vector<8x1xf32> -> vector<8x1xf32>
    %474 = vector.broadcast %473 : vector<8x1xf32> to vector<8x16xf32>
    %475 = arith.mulf %470, %474 : vector<8x16xf32>
    %476 = arith.truncf %475 : vector<8x16xf32> to vector<8x16xbf16>
    %cst_157 = arith.constant dense<0.000000e+00> : vector<8x8xf32>
    %477 = tpu.matmul %476, %463, %cst_157 {dimension_numbers = #tpu.dot_dimension_numbers<[1], [0], [0], [1], [0, 0, 1, 1], [], []>} : vector<8x16xbf16>, vector<16x8xbf16>, vector<8x8xf32> -> vector<8x8xf32>
    %478 = arith.truncf %477 : vector<8x8xf32> to vector<8x8xbf16>
    %479 = vector.extract_strided_slice %274 {offsets = [16, 0], sizes = [8, 32], strides = [1, 1]} : vector<32x32xbf16> to vector<8x32xbf16>
    %cst_158 = arith.constant dense<0.000000e+00> : vector<8x32xf32>
    %480 = tpu.matmul %478, %479, %cst_158 {dimension_numbers = #tpu.dot_dimension_numbers<[1], [0], [0], [1], [0, 0, 1, 1], [], []>} : vector<8x8xbf16>, vector<8x32xbf16>, vector<8x32xf32> -> vector<8x32xf32>
    %481 = arith.addf %457, %480 : vector<8x32xf32>
    %482 = vector.extract_strided_slice %399 {offsets = [0, 24], sizes = [8, 8], strides = [1, 1]} : vector<8x32xf32> to vector<8x8xf32>
    %483 = arith.truncf %482 : vector<8x8xf32> to vector<8x8xbf16>
    %484 = vector.extract_strided_slice %400 {offsets = [0, 24], sizes = [16, 8], strides = [1, 1]} : vector<16x32xf32> to vector<16x8xf32>
    %485 = arith.truncf %484 : vector<16x8xf32> to vector<16x8xbf16>
    %486 = vector.extract_strided_slice %401 {offsets = [0, 24], sizes = [16, 8], strides = [1, 1]} : vector<16x32xf32> to vector<16x8xf32>
    %487 = arith.truncf %486 : vector<16x8xf32> to vector<16x8xbf16>
    %cst_159 = arith.constant dense<0.000000e+00> : vector<8x16xf32>
    %488 = tpu.matmul %483, %485, %cst_159 {dimension_numbers = #tpu.dot_dimension_numbers<[1], [1], [0], [0], [0, 0, 1, 0], [], []>} : vector<8x8xbf16>, vector<16x8xbf16>, vector<8x16xf32> -> vector<8x16xf32>
    %489 = arith.addf %488, %408 : vector<8x16xf32>
    %cst_160 = arith.constant dense<0xFF800000> : vector<8xf32>
    %490 = vector.multi_reduction <maximumf>, %489, %cst_160 [1] : vector<8x16xf32> to vector<8xf32>
    %491 = vector.shape_cast %490 : vector<8xf32> to vector<8x1xf32>
    %492 = vector.broadcast %491 : vector<8x1xf32> to vector<8x16xf32>
    %493 = arith.subf %489, %492 : vector<8x16xf32>
    %494 = math.exp %493 : vector<8x16xf32>
    %cst_161 = arith.constant dense<0.000000e+00> : vector<8xf32>
    %495 = vector.multi_reduction <add>, %494, %cst_161 [1] : vector<8x16xf32> to vector<8xf32>
    %496 = vector.shape_cast %495 : vector<8xf32> to vector<8x1xf32>
    %497 = tpu.reciprocal %496 {approx = true} : vector<8x1xf32> -> vector<8x1xf32>
    %498 = vector.broadcast %497 : vector<8x1xf32> to vector<8x16xf32>
    %499 = arith.mulf %494, %498 : vector<8x16xf32>
    %500 = arith.truncf %499 : vector<8x16xf32> to vector<8x16xbf16>
    %cst_162 = arith.constant dense<0.000000e+00> : vector<8x8xf32>
    %501 = tpu.matmul %500, %487, %cst_162 {dimension_numbers = #tpu.dot_dimension_numbers<[1], [0], [0], [1], [0, 0, 1, 1], [], []>} : vector<8x16xbf16>, vector<16x8xbf16>, vector<8x8xf32> -> vector<8x8xf32>
    %502 = arith.truncf %501 : vector<8x8xf32> to vector<8x8xbf16>
    %503 = vector.extract_strided_slice %274 {offsets = [24, 0], sizes = [8, 32], strides = [1, 1]} : vector<32x32xbf16> to vector<8x32xbf16>
    %cst_163 = arith.constant dense<0.000000e+00> : vector<8x32xf32>
    %504 = tpu.matmul %502, %503, %cst_163 {dimension_numbers = #tpu.dot_dimension_numbers<[1], [0], [0], [1], [0, 0, 1, 1], [], []>} : vector<8x8xbf16>, vector<8x32xbf16>, vector<8x32xf32> -> vector<8x32xf32>
    %505 = arith.addf %481, %504 : vector<8x32xf32>
    %506 = tpu.concatenate %398, %505 in 0 : vector<8x32xf32>, vector<8x32xf32> -> vector<16x32xf32>
    %507 = vector.broadcast %275 : vector<1x32xf32> to vector<16x32xf32>
    %508 = arith.addf %506, %507 : vector<16x32xf32>
    %509 = arith.addf %267, %508 : vector<16x32xf32>
    %cst_164 = arith.constant dense<0.000000e+00> : vector<16xf32>
    %510 = vector.multi_reduction <add>, %509, %cst_164 [1] : vector<16x32xf32> to vector<16xf32>
    %511 = vector.shape_cast %510 : vector<16xf32> to vector<16x1xf32>
    %cst_165 = arith.constant 3.200000e+01 : f32
    %512 = vector.broadcast %cst_165 : f32 to vector<16x1xf32>
    %513 = arith.divf %511, %512 : vector<16x1xf32>
    %514 = vector.broadcast %513 : vector<16x1xf32> to vector<16x32xf32>
    %515 = arith.subf %509, %514 : vector<16x32xf32>
    %516 = arith.mulf %515, %515 : vector<16x32xf32>
    %cst_166 = arith.constant dense<0.000000e+00> : vector<16xf32>
    %517 = vector.multi_reduction <add>, %516, %cst_166 [1] : vector<16x32xf32> to vector<16xf32>
    %518 = vector.shape_cast %517 : vector<16xf32> to vector<16x1xf32>
    %cst_167 = arith.constant 3.200000e+01 : f32
    %519 = vector.broadcast %cst_167 : f32 to vector<16x1xf32>
    %520 = arith.divf %518, %519 : vector<16x1xf32>
    %521 = vector.broadcast %513 : vector<16x1xf32> to vector<16x32xf32>
    %522 = arith.subf %509, %521 : vector<16x32xf32>
    %523 = vector.broadcast %276 : vector<1x32xf32> to vector<16x32xf32>
    %524 = arith.mulf %523, %522 : vector<16x32xf32>
    %cst_168 = arith.constant 9.99999997E-7 : f32
    %525 = vector.broadcast %cst_168 : f32 to vector<16x1xf32>
    %526 = arith.addf %520, %525 : vector<16x1xf32>
    %527 = math.rsqrt %526 : vector<16x1xf32>
    %528 = vector.broadcast %527 : vector<16x1xf32> to vector<16x32xf32>
    %529 = arith.mulf %524, %528 : vector<16x32xf32>
    %530 = vector.broadcast %277 : vector<1x32xf32> to vector<16x32xf32>
    %531 = arith.addf %529, %530 : vector<16x32xf32>
    %c0_169 = arith.constant 0 : index
    %c0_170 = arith.constant 0 : index
    %532 = vector.load %arg25[%c0_169, %c0_170] : memref<32x64xbf16, #tpu.memory_space<vmem>>, vector<32x64xbf16>
    %533 = arith.truncf %531 : vector<16x32xf32> to vector<16x32xbf16>
    %cst_171 = arith.constant dense<0.000000e+00> : vector<16x64xf32>
    %534 = tpu.matmul %533, %532, %cst_171 {dimension_numbers = #tpu.dot_dimension_numbers<[1], [0], [0], [1], [0, 0, 1, 1], [], []>} : vector<16x32xbf16>, vector<32x64xbf16>, vector<16x64xf32> -> vector<16x64xf32>
    %c0_172 = arith.constant 0 : index
    %c0_173 = arith.constant 0 : index
    %535 = vector.load %arg26[%c0_172, %c0_173] : memref<1x64xf32, #tpu.memory_space<vmem>>, vector<1x64xf32>
    %536 = vector.broadcast %535 : vector<1x64xf32> to vector<16x64xf32>
    %537 = arith.addf %534, %536 : vector<16x64xf32>
    %cst_174 = arith.constant 0.000000e+00 : f32
    %538 = vector.broadcast %cst_174 : f32 to vector<16x64xf32>
    %539 = arith.maximumf %537, %538 : vector<16x64xf32>
    %c0_175 = arith.constant 0 : index
    %c0_176 = arith.constant 0 : index
    %540 = vector.load %arg27[%c0_175, %c0_176] : memref<64x32xbf16, #tpu.memory_space<vmem>>, vector<64x32xbf16>
    %541 = arith.truncf %539 : vector<16x64xf32> to vector<16x64xbf16>
    %cst_177 = arith.constant dense<0.000000e+00> : vector<16x32xf32>
    %542 = tpu.matmul %541, %540, %cst_177 {dimension_numbers = #tpu.dot_dimension_numbers<[1], [0], [0], [1], [0, 0, 1, 1], [], []>} : vector<16x64xbf16>, vector<64x32xbf16>, vector<16x32xf32> -> vector<16x32xf32>
    %c0_178 = arith.constant 0 : index
    %c0_179 = arith.constant 0 : index
    %543 = vector.load %arg28[%c0_178, %c0_179] : memref<1x32xf32, #tpu.memory_space<vmem>>, vector<1x32xf32>
    %544 = vector.broadcast %543 : vector<1x32xf32> to vector<16x32xf32>
    %545 = arith.addf %542, %544 : vector<16x32xf32>
    %546 = vector.extract_strided_slice %545 {offsets = [0, 0], sizes = [1, 32], strides = [1, 1]} : vector<16x32xf32> to vector<1x32xf32>
    %547 = vector.extract_strided_slice %545 {offsets = [1, 0], sizes = [1, 32], strides = [1, 1]} : vector<16x32xf32> to vector<1x32xf32>
    %548 = vector.extract_strided_slice %545 {offsets = [2, 0], sizes = [1, 32], strides = [1, 1]} : vector<16x32xf32> to vector<1x32xf32>
    %549 = vector.extract_strided_slice %545 {offsets = [3, 0], sizes = [1, 32], strides = [1, 1]} : vector<16x32xf32> to vector<1x32xf32>
    %550 = vector.extract_strided_slice %545 {offsets = [4, 0], sizes = [1, 32], strides = [1, 1]} : vector<16x32xf32> to vector<1x32xf32>
    %551 = vector.extract_strided_slice %545 {offsets = [5, 0], sizes = [1, 32], strides = [1, 1]} : vector<16x32xf32> to vector<1x32xf32>
    %552 = vector.extract_strided_slice %545 {offsets = [6, 0], sizes = [1, 32], strides = [1, 1]} : vector<16x32xf32> to vector<1x32xf32>
    %553 = vector.extract_strided_slice %545 {offsets = [7, 0], sizes = [1, 32], strides = [1, 1]} : vector<16x32xf32> to vector<1x32xf32>
    %554 = tpu.concatenate %546, %547, %548, %549, %550, %551, %552, %553 in 1 : vector<1x32xf32>, vector<1x32xf32>, vector<1x32xf32>, vector<1x32xf32>, vector<1x32xf32>, vector<1x32xf32>, vector<1x32xf32>, vector<1x32xf32> -> vector<1x256xf32>
    %555 = vector.extract_strided_slice %545 {offsets = [8, 0], sizes = [1, 32], strides = [1, 1]} : vector<16x32xf32> to vector<1x32xf32>
    %556 = vector.extract_strided_slice %545 {offsets = [9, 0], sizes = [1, 32], strides = [1, 1]} : vector<16x32xf32> to vector<1x32xf32>
    %557 = vector.extract_strided_slice %545 {offsets = [10, 0], sizes = [1, 32], strides = [1, 1]} : vector<16x32xf32> to vector<1x32xf32>
    %558 = vector.extract_strided_slice %545 {offsets = [11, 0], sizes = [1, 32], strides = [1, 1]} : vector<16x32xf32> to vector<1x32xf32>
    %559 = vector.extract_strided_slice %545 {offsets = [12, 0], sizes = [1, 32], strides = [1, 1]} : vector<16x32xf32> to vector<1x32xf32>
    %560 = vector.extract_strided_slice %545 {offsets = [13, 0], sizes = [1, 32], strides = [1, 1]} : vector<16x32xf32> to vector<1x32xf32>
    %561 = vector.extract_strided_slice %545 {offsets = [14, 0], sizes = [1, 32], strides = [1, 1]} : vector<16x32xf32> to vector<1x32xf32>
    %562 = vector.extract_strided_slice %545 {offsets = [15, 0], sizes = [1, 32], strides = [1, 1]} : vector<16x32xf32> to vector<1x32xf32>
    %563 = tpu.concatenate %555, %556, %557, %558, %559, %560, %561, %562 in 1 : vector<1x32xf32>, vector<1x32xf32>, vector<1x32xf32>, vector<1x32xf32>, vector<1x32xf32>, vector<1x32xf32>, vector<1x32xf32>, vector<1x32xf32> -> vector<1x256xf32>
    %564 = tpu.concatenate %554, %563 in 0 : vector<1x256xf32>, vector<1x256xf32> -> vector<2x256xf32>
    %c0_180 = arith.constant 0 : index
    %c0_181 = arith.constant 0 : index
    %c0_182 = arith.constant 0 : index
    %565 = vector.load %arg29[%c0_180, %c0_181, %c0_182] : memref<1x2x256xf32, #tpu.memory_space<vmem>>, vector<1x2x256xf32>
    %566 = vector.shape_cast %565 : vector<1x2x256xf32> to vector<2x256xf32>
    %567 = vector.shape_cast %564 : vector<2x256xf32> to vector<1x2x256xf32>
    tpu.vector_store %arg29[%c0_180, %c0_181, %c0_182], %567 {strides = array<i32>} : memref<1x2x256xf32, #tpu.memory_space<vmem>>, vector<1x2x256xf32>,
    return
  }
  func.func @transform_0(%arg0: i32) -> (i32, i32, i32) {
    %c0_i32 = arith.constant 0 : i32
    %c0_i32_0 = arith.constant 0 : i32
    %c0_i32_1 = arith.constant 0 : i32
    return %arg0, %c0_i32, %c0_i32_0 : i32, i32, i32
  }
  func.func @transform_1(%arg0: i32) -> (i32, i32, i32) {
    %c0_i32 = arith.constant 0 : i32
    %c0_i32_0 = arith.constant 0 : i32
    %c0_i32_1 = arith.constant 0 : i32
    return %arg0, %c0_i32, %c0_i32_0 : i32, i32, i32
  }
  func.func @transform_2(%arg0: i32) -> (i32, i32, i32) {
    %c0_i32 = arith.constant 0 : i32
    %c0_i32_0 = arith.constant 0 : i32
    %c0_i32_1 = arith.constant 0 : i32
    return %arg0, %c0_i32, %c0_i32_0 : i32, i32, i32
  }
  func.func @transform_3(%arg0: i32) -> (i32, i32, i32) {
    %c0_i32 = arith.constant 0 : i32
    %c0_i32_0 = arith.constant 0 : i32
    %c0_i32_1 = arith.constant 0 : i32
    return %arg0, %c0_i32, %c0_i32_0 : i32, i32, i32
  }
  func.func @transform_4(%arg0: i32) -> (i32, i32) {
    %c0_i32 = arith.constant 0 : i32
    %c0_i32_0 = arith.constant 0 : i32
    %c0_i32_1 = arith.constant 0 : i32
    return %c0_i32, %c0_i32_0 : i32, i32
  }
  func.func @transform_5(%arg0: i32) -> (i32, i32) {
    %c0_i32 = arith.constant 0 : i32
    %c0_i32_0 = arith.constant 0 : i32
    %c0_i32_1 = arith.constant 0 : i32
    return %c0_i32, %c0_i32_0 : i32, i32
  }
  func.func @transform_6(%arg0: i32) -> (i32, i32) {
    %c0_i32 = arith.constant 0 : i32
    %c0_i32_0 = arith.constant 0 : i32
    %c0_i32_1 = arith.constant 0 : i32
    return %c0_i32, %c0_i32_0 : i32, i32
  }
  func.func @transform_7(%arg0: i32) -> (i32, i32) {
    %c0_i32 = arith.constant 0 : i32
    %c0_i32_0 = arith.constant 0 : i32
    %c0_i32_1 = arith.constant 0 : i32
    return %c0_i32, %c0_i32_0 : i32, i32
  }
  func.func @transform_8(%arg0: i32) -> (i32, i32) {
    %c0_i32 = arith.constant 0 : i32
    %c0_i32_0 = arith.constant 0 : i32
    %c0_i32_1 = arith.constant 0 : i32
    return %c0_i32, %c0_i32_0 : i32, i32
  }
  func.func @transform_9(%arg0: i32) -> (i32, i32) {
    %c0_i32 = arith.constant 0 : i32
    %c0_i32_0 = arith.constant 0 : i32
    %c0_i32_1 = arith.constant 0 : i32
    return %c0_i32, %c0_i32_0 : i32, i32
  }
  func.func @transform_10(%arg0: i32) -> (i32, i32) {
    %c0_i32 = arith.constant 0 : i32
    %c0_i32_0 = arith.constant 0 : i32
    %c0_i32_1 = arith.constant 0 : i32
    return %c0_i32, %c0_i32_0 : i32, i32
  }
  func.func @transform_11(%arg0: i32) -> (i32, i32) {
    %c0_i32 = arith.constant 0 : i32
    %c0_i32_0 = arith.constant 0 : i32
    %c0_i32_1 = arith.constant 0 : i32
    return %c0_i32, %c0_i32_0 : i32, i32
  }
  func.func @transform_12(%arg0: i32) -> (i32, i32) {
    %c0_i32 = arith.constant 0 : i32
    %c0_i32_0 = arith.constant 0 : i32
    %c0_i32_1 = arith.constant 0 : i32
    return %c0_i32, %c0_i32_0 : i32, i32
  }
  func.func @transform_13(%arg0: i32) -> (i32, i32) {
    %c0_i32 = arith.constant 0 : i32
    %c0_i32_0 = arith.constant 0 : i32
    %c0_i32_1 = arith.constant 0 : i32
    return %c0_i32, %c0_i32_0 : i32, i32
  }
  func.func @transform_14(%arg0: i32) -> (i32, i32) {
    %c0_i32 = arith.constant 0 : i32
    %c0_i32_0 = arith.constant 0 : i32
    %c0_i32_1 = arith.constant 0 : i32
    return %c0_i32, %c0_i32_0 : i32, i32
  }
  func.func @transform_15(%arg0: i32) -> (i32, i32) {
    %c0_i32 = arith.constant 0 : i32
    %c0_i32_0 = arith.constant 0 : i32
    %c0_i32_1 = arith.constant 0 : i32
    return %c0_i32, %c0_i32_0 : i32, i32
  }
  func.func @transform_16(%arg0: i32) -> (i32, i32) {
    %c0_i32 = arith.constant 0 : i32
    %c0_i32_0 = arith.constant 0 : i32
    %c0_i32_1 = arith.constant 0 : i32
    return %c0_i32, %c0_i32_0 : i32, i32
  }
  func.func @transform_17(%arg0: i32) -> (i32, i32) {
    %c0_i32 = arith.constant 0 : i32
    %c0_i32_0 = arith.constant 0 : i32
    %c0_i32_1 = arith.constant 0 : i32
    return %c0_i32, %c0_i32_0 : i32, i32
  }
  func.func @transform_18(%arg0: i32) -> (i32, i32) {
    %c0_i32 = arith.constant 0 : i32
    %c0_i32_0 = arith.constant 0 : i32
    %c0_i32_1 = arith.constant 0 : i32
    return %c0_i32, %c0_i32_0 : i32, i32
  }
  func.func @transform_19(%arg0: i32) -> (i32, i32) {
    %c0_i32 = arith.constant 0 : i32
    %c0_i32_0 = arith.constant 0 : i32
    %c0_i32_1 = arith.constant 0 : i32
    return %c0_i32, %c0_i32_0 : i32, i32
  }
  func.func @transform_20(%arg0: i32) -> (i32, i32) {
    %c0_i32 = arith.constant 0 : i32
    %c0_i32_0 = arith.constant 0 : i32
    %c0_i32_1 = arith.constant 0 : i32
    return %c0_i32, %c0_i32_0 : i32, i32
  }
  func.func @transform_21(%arg0: i32) -> (i32, i32) {
    %c0_i32 = arith.constant 0 : i32
    %c0_i32_0 = arith.constant 0 : i32
    %c0_i32_1 = arith.constant 0 : i32
    return %c0_i32, %c0_i32_0 : i32, i32
  }
  func.func @transform_22(%arg0: i32) -> (i32, i32) {
    %c0_i32 = arith.constant 0 : i32
    %c0_i32_0 = arith.constant 0 : i32
    %c0_i32_1 = arith.constant 0 : i32
    return %c0_i32, %c0_i32_0 : i32, i32
  }
  func.func @transform_23(%arg0: i32) -> (i32, i32) {
    %c0_i32 = arith.constant 0 : i32
    %c0_i32_0 = arith.constant 0 : i32
    %c0_i32_1 = arith.constant 0 : i32
    return %c0_i32, %c0_i32_0 : i32, i32
  }
  func.func @transform_24(%arg0: i32) -> (i32, i32) {
    %c0_i32 = arith.constant 0 : i32
    %c0_i32_0 = arith.constant 0 : i32
    %c0_i32_1 = arith.constant 0 : i32
    return %c0_i32, %c0_i32_0 : i32, i32
  }
  func.func @transform_25(%arg0: i32) -> (i32, i32) {
    %c0_i32 = arith.constant 0 : i32
    %c0_i32_0 = arith.constant 0 : i32
    %c0_i32_1 = arith.constant 0 : i32
    return %c0_i32, %c0_i32_0 : i32, i32
  }
  func.func @transform_26(%arg0: i32) -> (i32, i32) {
    %c0_i32 = arith.constant 0 : i32
    %c0_i32_0 = arith.constant 0 : i32
    %c0_i32_1 = arith.constant 0 : i32
    return %c0_i32, %c0_i32_0 : i32, i32
  }
  func.func @transform_27(%arg0: i32) -> (i32, i32) {
    %c0_i32 = arith.constant 0 : i32
    %c0_i32_0 = arith.constant 0 : i32
    %c0_i32_1 = arith.constant 0 : i32
    return %c0_i32, %c0_i32_0 : i32, i32
  }
  func.func @transform_28(%arg0: i32) -> (i32, i32, i32) {
    %c0_i32 = arith.constant 0 : i32
    %c0_i32_0 = arith.constant 0 : i32
    %c0_i32_1 = arith.constant 0 : i32
    return %arg0, %c0_i32, %c0_i32_0 : i32, i32, i32
  }
}

</mosaic_0001>

<llo_original>
// kernel: tpu_custom_call.1
$region0: #{tpu_custom_call.1}
  #allocation0 [shape = 'u32[]', space=smem, size = 0x4, offset = 0x4, fixed_abs, tag = 'smem constant byte address 0x4 - core index']
  #allocation1 [shape = 'u32[144,128]{1,0:T(1,128)}', space=vmem, size = 0x12000, scoped, tag = 'internal scratch']
  %s0 = inlined_call_operand.vmem [shape: f32[4,8,32], index: 0, kind: input, shape index: {}]
  %s1 = inlined_call_operand.hbm [shape: f32[4,16,32], index: 1, kind: input, shape index: {}]
  %s2 = inlined_call_operand.hbm [shape: f32[4,8,8], index: 2, kind: input, shape index: {}]
  %s3 = inlined_call_operand.hbm [shape: f32[4,8,16], index: 3, kind: input, shape index: {}]
  %s4 = inlined_call_operand.vmem [shape: bf16[32,32], index: 4, kind: input, shape index: {}]
  %s5 = inlined_call_operand.hbm [shape: f32[1,32], index: 5, kind: input, shape index: {}]
  %s6 = inlined_call_operand.hbm [shape: bf16[32,32], index: 6, kind: input, shape index: {}]
  %s7 = inlined_call_operand.hbm [shape: f32[1,32], index: 7, kind: input, shape index: {}]
  %s8 = inlined_call_operand.hbm [shape: bf16[32,32], index: 8, kind: input, shape index: {}]
  %s9 = inlined_call_operand.hbm [shape: f32[1,32], index: 9, kind: input, shape index: {}]
  %s10 = inlined_call_operand.vmem [shape: bf16[32,32], index: 10, kind: input, shape index: {}]
  %s11 = inlined_call_operand.hbm [shape: f32[1,32], index: 11, kind: input, shape index: {}]
  %s12 = inlined_call_operand.hbm [shape: f32[1,32], index: 12, kind: input, shape index: {}]
  %s13 = inlined_call_operand.hbm [shape: f32[1,32], index: 13, kind: input, shape index: {}]
  %s14 = inlined_call_operand.hbm [shape: bf16[32,32], index: 14, kind: input, shape index: {}]
  %s15 = inlined_call_operand.hbm [shape: f32[1,32], index: 15, kind: input, shape index: {}]
  %s16 = inlined_call_operand.hbm [shape: bf16[32,32], index: 16, kind: input, shape index: {}]
  %s17 = inlined_call_operand.hbm [shape: f32[1,32], index: 17, kind: input, shape index: {}]
  %s18 = inlined_call_operand.hbm [shape: bf16[32,32], index: 18, kind: input, shape index: {}]
  %s19 = inlined_call_operand.vmem [shape: f32[1,32], index: 19, kind: input, shape index: {}]
  %s20 = inlined_call_operand.hbm [shape: bf16[32,32], index: 20, kind: input, shape index: {}]
  %s21 = inlined_call_operand.vmem [shape: f32[1,32], index: 21, kind: input, shape index: {}]
  %s22 = inlined_call_operand.vmem [shape: f32[1,32], index: 22, kind: input, shape index: {}]
  %s23 = inlined_call_operand.vmem [shape: f32[1,32], index: 23, kind: input, shape index: {}]
  %s24 = inlined_call_operand.hbm [shape: bf16[32,64], index: 24, kind: input, shape index: {}]
  %s25 = inlined_call_operand.vmem [shape: f32[1,64], index: 25, kind: input, shape index: {}]
  %s26 = inlined_call_operand.vmem [shape: bf16[64,32], index: 26, kind: input, shape index: {}]
  %s27 = inlined_call_operand.vmem [shape: f32[1,32], index: 27, kind: input, shape index: {}]
  %s28 = inlined_call_operand.hbm [shape: f32[2,2,256], index: 28, kind: output, shape index: {}]
  %s29 = sld [smem:[#allocation0]]
  $region217: #{tpu_custom_call.1} parent=0
    _
  %s31 = ssub.s32 1, %s29
  %s32 = scalar_select 0, %s31, %s29
  $region1: #{tpu_custom_call.1} parent=0
    #allocation2 [shape = 'u8[32768]{0}', space=vmem, size = 0x8000, scoped, tag = 'input window, operand 1']
    #allocation3 [shape = 's32[2]{0}', space=sflag, size = 0x8, scoped, tag = 'scoped memory for tpu_custom_call.1']
    #allocation4 [shape = 's32[2]{0}', space=sflag, size = 0x8, scoped, tag = 'scoped memory for tpu_custom_call.1']
    #allocation5 [shape = 'u8[16384]{0}', space=vmem, size = 0x4000, scoped, tag = 'input window, operand 2']
    #allocation6 [shape = 's32[2]{0}', space=sflag, size = 0x8, scoped, tag = 'scoped memory for tpu_custom_call.1']
    #allocation7 [shape = 'u8[16384]{0}', space=vmem, size = 0x4000, scoped, tag = 'input window, operand 3']
    #allocation8 [shape = 'u8[512]{0}', space=vmem, size = 0x400, scoped, tag = 'input window, operand 5, single buffered']
    #allocation9 [shape = 's32[1]{0}', space=sflag, size = 0x4, scoped, tag = 'scoped memory for tpu_custom_call.1']
    #allocation10 [shape = 'u8[8192]{0}', space=vmem, size = 0x2000, scoped, tag = 'input window, operand 6, single buffered']
    #allocation11 [shape = 'u8[512]{0}', space=vmem, size = 0x400, scoped, tag = 'input window, operand 7, single buffered']
    #allocation12 [shape = 's32[1]{0}', space=sflag, size = 0x4, scoped, tag = 'scoped memory for tpu_custom_call.1']
    #allocation13 [shape = 'u8[8192]{0}', space=vmem, size = 0x2000, scoped, tag = 'input window, operand 8, single buffered']
    #allocation14 [shape = 'u8[512]{0}', space=vmem, size = 0x400, scoped, tag = 'input window, operand 9, single buffered']
    #allocation15 [shape = 's32[1]{0}', space=sflag, size = 0x4, scoped, tag = 'scoped memory for tpu_custom_call.1']
    #allocation16 [shape = 'u8[512]{0}', space=vmem, size = 0x400, scoped, tag = 'input window, operand 11, single buffered']
    #allocation17 [shape = 'u8[512]{0}', space=vmem, size = 0x400, scoped, tag = 'input window, operand 12, single buffered']
    #allocation18 [shape = 's32[1]{0}', space=sflag, size = 0x4, scoped, tag = 'scoped memory for tpu_custom_call.1']
    #allocation19 [shape = 'u8[512]{0}', space=vmem, size = 0x400, scoped, tag = 'input window, operand 13, single buffered']
    #allocation20 [shape = 'u8[8192]{0}', space=vmem, size = 0x2000, scoped, tag = 'input window, operand 14, single buffered']
    #allocation21 [shape = 's32[1]{0}', space=sflag, size = 0x4, scoped, tag = 'scoped memory for tpu_custom_call.1']
    #allocation22 [shape = 'u8[512]{0}', space=vmem, size = 0x400, scoped, tag = 'input window, operand 15, single buffered']
    #allocation23 [shape = 'u8[8192]{0}', space=vmem, size = 0x2000, scoped, tag = 'input window, operand 16, single buffered']
    #allocation24 [shape = 's32[1]{0}', space=sflag, size = 0x4, scoped, tag = 'scoped memory for tpu_custom_call.1']
    #allocation25 [shape = 'u8[512]{0}', space=vmem, size = 0x400, scoped, tag = 'input window, operand 17, single buffered']
    #allocation26 [shape = 'u8[8192]{0}', space=vmem, size = 0x2000, scoped, tag = 'input window, operand 18, single buffered']
    #allocation27 [shape = 's32[1]{0}', space=sflag, size = 0x4, scoped, tag = 'scoped memory for tpu_custom_call.1']
    #allocation28 [shape = 'u8[8192]{0}', space=vmem, size = 0x2000, scoped, tag = 'input window, operand 20, single buffered']
    #allocation29 [shape = 'u8[8192]{0}', space=vmem, size = 0x2000, scoped, tag = 'input window, operand 24, single buffered']
    #allocation30 [shape = 's32[1]{0}', space=sflag, size = 0x4, scoped, tag = 'scoped memory for tpu_custom_call.1']
    #allocation31 [shape = 'u8[4096]{0}', space=vmem, size = 0x1000, scoped, tag = 'output window, operand 0']
    %33 = vsyncpa [#allocation3], 0
    %s34 = scalar_lea.sflag [#allocation3], 1
    %35 = vsyncpa %s34, 0
    %36 = vsyncpa [#allocation6], 0
    %s37 = scalar_lea.sflag [#allocation6], 1
    %38 = vsyncpa %s37, 0
    %39 = vsyncpa [#allocation9], 0
    %40 = vsyncpa [#allocation12], 0
    %41 = vsyncpa [#allocation15], 0
    %42 = vsyncpa [#allocation18], 0
    %43 = vsyncpa [#allocation21], 0
    %44 = vsyncpa [#allocation24], 0
    %45 = vsyncpa [#allocation27], 0
    %46 = vsyncpa [#allocation30], 0
    %47 = vsyncpa [#allocation4], 0
    %s48 = scalar_lea.sflag [#allocation4], 1
    %49 = vsyncpa %s48, 0
    loop: start=0, step=1, limit=4
    $region2: #{tpu_custom_call.1} parent=1 // loop_pre_header
      _
    $region3: #{tpu_custom_call.1} parent=1 // loop_header
      %s51 = sphi 0, %s55
      %p52 = scmp.ge.s32.totalorder %s51, 4
      %s61 = sphi 0, %s63
      %s64 = sphi 0, %s61
      %s65 = sphi 0, %s64
      %s81 = sphi 0, %s65
      %s87 = sphi 0, %s89
      %s90 = sphi 0, %s87
      %s91 = sphi 0, %s90
      %s107 = sphi 0, %s91
      %s113 = sphi 0, %s115
      %s116 = sphi 0, %s113
      %s117 = sphi 0, %s116
      %s133 = sphi 0, %s117
      %s139 = sphi 0, %s141
      %s142 = sphi 0, %s139
      %s143 = sphi 0, %s142
      %s159 = sphi 0, %s143
      %s163 = sphi 0, %s163
      %s165 = sphi 0, %s163
      %s166 = sphi 0, %s165
      %s180 = sphi 0, %s166
      %s184 = sphi 0, %s184
      %s186 = sphi 0, %s184
      %s187 = sphi 0, %s186
      %s201 = sphi 0, %s187
      %s205 = sphi 0, %s205
      %s207 = sphi 0, %s205
      %s208 = sphi 0, %s207
      %s222 = sphi 0, %s208
      %s226 = sphi 0, %s226
      %s228 = sphi 0, %s226
      %s229 = sphi 0, %s228
      %s243 = sphi 0, %s229
      %s247 = sphi 0, %s247
      %s249 = sphi 0, %s247
      %s250 = sphi 0, %s249
      %s264 = sphi 0, %s250
      %s268 = sphi 0, %s268
      %s270 = sphi 0, %s268
      %s271 = sphi 0, %s270
      %s285 = sphi 0, %s271
      %s289 = sphi 0, %s289
      %s291 = sphi 0, %s289
      %s292 = sphi 0, %s291
      %s306 = sphi 0, %s292
      %s310 = sphi 0, %s310
      %s312 = sphi 0, %s310
      %s313 = sphi 0, %s312
      %s327 = sphi 0, %s313
      %s331 = sphi 0, %s331
      %s333 = sphi 0, %s331
      %s334 = sphi 0, %s333
      %s348 = sphi 0, %s334
      %s352 = sphi 0, %s352
      %s354 = sphi 0, %s352
      %s355 = sphi 0, %s354
      %s369 = sphi 0, %s355
      %s373 = sphi 0, %s373
      %s375 = sphi 0, %s373
      %s376 = sphi 0, %s375
      %s390 = sphi 0, %s376
      %s394 = sphi 0, %s394
      %s396 = sphi 0, %s394
      %s397 = sphi 0, %s396
      %s411 = sphi 0, %s397
      %s415 = sphi 0, %s415
      %s417 = sphi 0, %s415
      %s418 = sphi 0, %s417
      %s432 = sphi 0, %s418
      %s436 = sphi 0, %s436
      %s438 = sphi 0, %s436
      %s439 = sphi 0, %s438
      %s453 = sphi 0, %s439
      %s457 = sphi 0, %s457
      %s459 = sphi 0, %s457
      %s460 = sphi 0, %s459
      %s474 = sphi 0, %s460
      %s478 = sphi 0, %s478
      %s480 = sphi 0, %s478
      %s481 = sphi 0, %s480
      %s495 = sphi 0, %s481
      %s499 = sphi 0, %s499
      %s501 = sphi 0, %s499
      %s502 = sphi 0, %s501
      %s516 = sphi 0, %s502
      %s520 = sphi 0, %s520
      %s522 = sphi 0, %s520
      %s523 = sphi 0, %s522
      %s537 = sphi 0, %s523
      %s541 = sphi 0, %s541
      %s543 = sphi 0, %s541
      %s544 = sphi 0, %s543
      %s558 = sphi 0, %s544
      %s562 = sphi 0, %s562
      %s564 = sphi 0, %s562
      %s565 = sphi 0, %s564
      %s579 = sphi 0, %s565
      %s583 = sphi 0, %s583
      %s585 = sphi 0, %s583
      %s586 = sphi 0, %s585
      %s600 = sphi 0, %s586
      %s604 = sphi 0, %s604
      %s606 = sphi 0, %s604
      %s607 = sphi 0, %s606
      %s621 = sphi 0, %s607
      %s625 = sphi 0, %s625
      %s627 = sphi 0, %s625
      %s628 = sphi 0, %s627
      %s642 = sphi 0, %s628
      %s646 = sphi 0, %s646
      %s648 = sphi 0, %s646
      %s649 = sphi 0, %s648
      %s663 = sphi 0, %s649
      %s669 = sphi 0, %s671
      %s672 = sphi 0, %s669
      %s673 = sphi 0, %s672
      %s689 = sphi 0, %s673
    $region4: #{tpu_custom_call.1} parent=1 // loop_header_branch
      %54 = sbr.rel (%p52) target = $region8
    $region5: #{tpu_custom_call.1} parent=1 // loop_body
      %s56 = ssub.s32 %s51, 1
      %s57 = ssub.s32 %s51, 2
      %s58 = sadd.s32 %s51, 1
      %s59 = ssub.s32 %s51, %s58
      %p60 = scmp.eq.s32.totalorder %s59, 0
      %s62 = sadd.s32 %s61, 1
      %s63 = scalar_select %p60, %s61, %s62
      %p66 = pneg %p60
      %p67 = scmp.eq.s32.totalorder %s51, 1
      %p68 = por %p66, %p67
      %p69 = scmp.ne.s32.totalorder %s61, %s64
      %p70 = scmp.eq.s32.totalorder %s51, 0
      %p71 = por %p69, %p70
      %p72 = scmp.ne.s32.totalorder %s61, %s64
      %p73 = scmp.eq.s32.totalorder %s56, 1
      %p74 = por %p72, %p73
      %p75 = scmp.ne.s32.totalorder %s64, %s65
      %p76 = scmp.eq.s32.totalorder %s56, 0
      %p77 = por %p75, %p76
      %p78 = scmp.ne.s32.totalorder %s64, %s65
      %p79 = scmp.eq.s32.totalorder %s57, 1
      %p80 = por %p78, %p79
      %p82 = scmp.ne.s32.totalorder %s65, %s81
      %p83 = scmp.eq.s32.totalorder %s57, 0
      %p84 = por %p82, %p83
      %s85 = ssub.s32 %s51, %s58
      %p86 = scmp.eq.s32.totalorder %s85, 0
      %s88 = sadd.s32 %s87, 1
      %s89 = scalar_select %p86, %s87, %s88
      %p92 = pneg %p86
      %p93 = scmp.eq.s32.totalorder %s51, 1
      %p94 = por %p92, %p93
      %p95 = scmp.ne.s32.totalorder %s87, %s90
      %p96 = scmp.eq.s32.totalorder %s51, 0
      %p97 = por %p95, %p96
      %p98 = scmp.ne.s32.totalorder %s87, %s90
      %p99 = scmp.eq.s32.totalorder %s56, 1
      %p100 = por %p98, %p99
      %p101 = scmp.ne.s32.totalorder %s90, %s91
      %p102 = scmp.eq.s32.totalorder %s56, 0
      %p103 = por %p101, %p102
      %p104 = scmp.ne.s32.totalorder %s90, %s91
      %p105 = scmp.eq.s32.totalorder %s57, 1
      %p106 = por %p104, %p105
      %p108 = scmp.ne.s32.totalorder %s91, %s107
      %p109 = scmp.eq.s32.totalorder %s57, 0
      %p110 = por %p108, %p109
      %s111 = ssub.s32 %s51, %s58
      %p112 = scmp.eq.s32.totalorder %s111, 0
      %s114 = sadd.s32 %s113, 1
      %s115 = scalar_select %p112, %s113, %s114
      %p118 = pneg %p112
      %p119 = scmp.eq.s32.totalorder %s51, 1
      %p120 = por %p118, %p119
      %p121 = scmp.ne.s32.totalorder %s113, %s116
      %p122 = scmp.eq.s32.totalorder %s51, 0
      %p123 = por %p121, %p122
      %p124 = scmp.ne.s32.totalorder %s113, %s116
      %p125 = scmp.eq.s32.totalorder %s56, 1
      %p126 = por %p124, %p125
      %p127 = scmp.ne.s32.totalorder %s116, %s117
      %p128 = scmp.eq.s32.totalorder %s56, 0
      %p129 = por %p127, %p128
      %p130 = scmp.ne.s32.totalorder %s116, %s117
      %p131 = scmp.eq.s32.totalorder %s57, 1
      %p132 = por %p130, %p131
      %p134 = scmp.ne.s32.totalorder %s117, %s133
      %p135 = scmp.eq.s32.totalorder %s57, 0
      %p136 = por %p134, %p135
      %s137 = ssub.s32 %s51, %s58
      %p138 = scmp.eq.s32.totalorder %s137, 0
      %s140 = sadd.s32 %s139, 1
      %s141 = scalar_select %p138, %s139, %s140
      %p144 = pneg %p138
      %p145 = scmp.eq.s32.totalorder %s51, 1
      %p146 = por %p144, %p145
      %p147 = scmp.ne.s32.totalorder %s139, %s142
      %p148 = scmp.eq.s32.totalorder %s51, 0
      %p149 = por %p147, %p148
      %p150 = scmp.ne.s32.totalorder %s139, %s142
      %p151 = scmp.eq.s32.totalorder %s56, 1
      %p152 = por %p150, %p151
      %p153 = scmp.ne.s32.totalorder %s142, %s143
      %p154 = scmp.eq.s32.totalorder %s56, 0
      %p155 = por %p153, %p154
      %p156 = scmp.ne.s32.totalorder %s142, %s143
      %p157 = scmp.eq.s32.totalorder %s57, 1
      %p158 = por %p156, %p157
      %p160 = scmp.ne.s32.totalorder %s143, %s159
      %p161 = scmp.eq.s32.totalorder %s57, 0
      %p162 = por %p160, %p161
      %s164 = sadd.s32 %s163, 1
      %p167 = scmp.eq.s32.totalorder %s51, 1
      %p168 = scmp.ne.s32.totalorder %s163, %s165
      %p169 = scmp.eq.s32.totalorder %s51, 0
      %p170 = por %p168, %p169
      %p171 = scmp.ne.s32.totalorder %s163, %s165
      %p172 = scmp.eq.s32.totalorder %s56, 1
      %p173 = por %p171, %p172
      %p174 = scmp.ne.s32.totalorder %s165, %s166
      %p175 = scmp.eq.s32.totalorder %s56, 0
      %p176 = por %p174, %p175
      %p177 = scmp.ne.s32.totalorder %s165, %s166
      %p178 = scmp.eq.s32.totalorder %s57, 1
      %p179 = por %p177, %p178
      %p181 = scmp.ne.s32.totalorder %s166, %s180
      %p182 = scmp.eq.s32.totalorder %s57, 0
      %p183 = por %p181, %p182
      %s185 = sadd.s32 %s184, 1
      %p188 = scmp.eq.s32.totalorder %s51, 1
      %p189 = scmp.ne.s32.totalorder %s184, %s186
      %p190 = scmp.eq.s32.totalorder %s51, 0
      %p191 = por %p189, %p190
      %p192 = scmp.ne.s32.totalorder %s184, %s186
      %p193 = scmp.eq.s32.totalorder %s56, 1
      %p194 = por %p192, %p193
      %p195 = scmp.ne.s32.totalorder %s186, %s187
      %p196 = scmp.eq.s32.totalorder %s56, 0
      %p197 = por %p195, %p196
      %p198 = scmp.ne.s32.totalorder %s186, %s187
      %p199 = scmp.eq.s32.totalorder %s57, 1
      %p200 = por %p198, %p199
      %p202 = scmp.ne.s32.totalorder %s187, %s201
      %p203 = scmp.eq.s32.totalorder %s57, 0
      %p204 = por %p202, %p203
      %s206 = sadd.s32 %s205, 1
      %p209 = scmp.eq.s32.totalorder %s51, 1
      %p210 = scmp.ne.s32.totalorder %s205, %s207
      %p211 = scmp.eq.s32.totalorder %s51, 0
      %p212 = por %p210, %p211
      %p213 = scmp.ne.s32.totalorder %s205, %s207
      %p214 = scmp.eq.s32.totalorder %s56, 1
      %p215 = por %p213, %p214
      %p216 = scmp.ne.s32.totalorder %s207, %s208
      %p217 = scmp.eq.s32.totalorder %s56, 0
      %p218 = por %p216, %p217
      %p219 = scmp.ne.s32.totalorder %s207, %s208
      %p220 = scmp.eq.s32.totalorder %s57, 1
      %p221 = por %p219, %p220
      %p223 = scmp.ne.s32.totalorder %s208, %s222
      %p224 = scmp.eq.s32.totalorder %s57, 0
      %p225 = por %p223, %p224
      %s227 = sadd.s32 %s226, 1
      %p230 = scmp.eq.s32.totalorder %s51, 1
      %p231 = scmp.ne.s32.totalorder %s226, %s228
      %p232 = scmp.eq.s32.totalorder %s51, 0
      %p233 = por %p231, %p232
      %p234 = scmp.ne.s32.totalorder %s226, %s228
      %p235 = scmp.eq.s32.totalorder %s56, 1
      %p236 = por %p234, %p235
      %p237 = scmp.ne.s32.totalorder %s228, %s229
      %p238 = scmp.eq.s32.totalorder %s56, 0
      %p239 = por %p237, %p238
      %p240 = scmp.ne.s32.totalorder %s228, %s229
      %p241 = scmp.eq.s32.totalorder %s57, 1
      %p242 = por %p240, %p241
      %p244 = scmp.ne.s32.totalorder %s229, %s243
      %p245 = scmp.eq.s32.totalorder %s57, 0
      %p246 = por %p244, %p245
      %s248 = sadd.s32 %s247, 1
      %p251 = scmp.eq.s32.totalorder %s51, 1
      %p252 = scmp.ne.s32.totalorder %s247, %s249
      %p253 = scmp.eq.s32.totalorder %s51, 0
      %p254 = por %p252, %p253
      %p255 = scmp.ne.s32.totalorder %s247, %s249
      %p256 = scmp.eq.s32.totalorder %s56, 1
      %p257 = por %p255, %p256
      %p258 = scmp.ne.s32.totalorder %s249, %s250
      %p259 = scmp.eq.s32.totalorder %s56, 0
      %p260 = por %p258, %p259
      %p261 = scmp.ne.s32.totalorder %s249, %s250
      %p262 = scmp.eq.s32.totalorder %s57, 1
      %p263 = por %p261, %p262
      %p265 = scmp.ne.s32.totalorder %s250, %s264
      %p266 = scmp.eq.s32.totalorder %s57, 0
      %p267 = por %p265, %p266
      %s269 = sadd.s32 %s268, 1
      %p272 = scmp.eq.s32.totalorder %s51, 1
      %p273 = scmp.ne.s32.totalorder %s268, %s270
      %p274 = scmp.eq.s32.totalorder %s51, 0
      %p275 = por %p273, %p274
      %p276 = scmp.ne.s32.totalorder %s268, %s270
      %p277 = scmp.eq.s32.totalorder %s56, 1
      %p278 = por %p276, %p277
      %p279 = scmp.ne.s32.totalorder %s270, %s271
      %p280 = scmp.eq.s32.totalorder %s56, 0
      %p281 = por %p279, %p280
      %p282 = scmp.ne.s32.totalorder %s270, %s271
      %p283 = scmp.eq.s32.totalorder %s57, 1
      %p284 = por %p282, %p283
      %p286 = scmp.ne.s32.totalorder %s271, %s285
      %p287 = scmp.eq.s32.totalorder %s57, 0
      %p288 = por %p286, %p287
      %s290 = sadd.s32 %s289, 1
      %p293 = scmp.eq.s32.totalorder %s51, 1
      %p294 = scmp.ne.s32.totalorder %s289, %s291
      %p295 = scmp.eq.s32.totalorder %s51, 0
      %p296 = por %p294, %p295
      %p297 = scmp.ne.s32.totalorder %s289, %s291
      %p298 = scmp.eq.s32.totalorder %s56, 1
      %p299 = por %p297, %p298
      %p300 = scmp.ne.s32.totalorder %s291, %s292
      %p301 = scmp.eq.s32.totalorder %s56, 0
      %p302 = por %p300, %p301
      %p303 = scmp.ne.s32.totalorder %s291, %s292
      %p304 = scmp.eq.s32.totalorder %s57, 1
      %p305 = por %p303, %p304
      %p307 = scmp.ne.s32.totalorder %s292, %s306
      %p308 = scmp.eq.s32.totalorder %s57, 0
      %p309 = por %p307, %p308
      %s311 = sadd.s32 %s310, 1
      %p314 = scmp.eq.s32.totalorder %s51, 1
      %p315 = scmp.ne.s32.totalorder %s310, %s312
      %p316 = scmp.eq.s32.totalorder %s51, 0
      %p317 = por %p315, %p316
      %p318 = scmp.ne.s32.totalorder %s310, %s312
      %p319 = scmp.eq.s32.totalorder %s56, 1
      %p320 = por %p318, %p319
      %p321 = scmp.ne.s32.totalorder %s312, %s313
      %p322 = scmp.eq.s32.totalorder %s56, 0
      %p323 = por %p321, %p322
      %p324 = scmp.ne.s32.totalorder %s312, %s313
      %p325 = scmp.eq.s32.totalorder %s57, 1
      %p326 = por %p324, %p325
      %p328 = scmp.ne.s32.totalorder %s313, %s327
      %p329 = scmp.eq.s32.totalorder %s57, 0
      %p330 = por %p328, %p329
      %s332 = sadd.s32 %s331, 1
      %p335 = scmp.eq.s32.totalorder %s51, 1
      %p336 = scmp.ne.s32.totalorder %s331, %s333
      %p337 = scmp.eq.s32.totalorder %s51, 0
      %p338 = por %p336, %p337
      %p339 = scmp.ne.s32.totalorder %s331, %s333
      %p340 = scmp.eq.s32.totalorder %s56, 1
      %p341 = por %p339, %p340
      %p342 = scmp.ne.s32.totalorder %s333, %s334
      %p343 = scmp.eq.s32.totalorder %s56, 0
      %p344 = por %p342, %p343
      %p345 = scmp.ne.s32.totalorder %s333, %s334
      %p346 = scmp.eq.s32.totalorder %s57, 1
      %p347 = por %p345, %p346
      %p349 = scmp.ne.s32.totalorder %s334, %s348
      %p350 = scmp.eq.s32.totalorder %s57, 0
      %p351 = por %p349, %p350
      %s353 = sadd.s32 %s352, 1
      %p356 = scmp.eq.s32.totalorder %s51, 1
      %p357 = scmp.ne.s32.totalorder %s352, %s354
      %p358 = scmp.eq.s32.totalorder %s51, 0
      %p359 = por %p357, %p358
      %p360 = scmp.ne.s32.totalorder %s352, %s354
      %p361 = scmp.eq.s32.totalorder %s56, 1
      %p362 = por %p360, %p361
      %p363 = scmp.ne.s32.totalorder %s354, %s355
      %p364 = scmp.eq.s32.totalorder %s56, 0
      %p365 = por %p363, %p364
      %p366 = scmp.ne.s32.totalorder %s354, %s355
      %p367 = scmp.eq.s32.totalorder %s57, 1
      %p368 = por %p366, %p367
      %p370 = scmp.ne.s32.totalorder %s355, %s369
      %p371 = scmp.eq.s32.totalorder %s57, 0
      %p372 = por %p370, %p371
      %s374 = sadd.s32 %s373, 1
      %p377 = scmp.eq.s32.totalorder %s51, 1
      %p378 = scmp.ne.s32.totalorder %s373, %s375
      %p379 = scmp.eq.s32.totalorder %s51, 0
      %p380 = por %p378, %p379
      %p381 = scmp.ne.s32.totalorder %s373, %s375
      %p382 = scmp.eq.s32.totalorder %s56, 1
      %p383 = por %p381, %p382
      %p384 = scmp.ne.s32.totalorder %s375, %s376
      %p385 = scmp.eq.s32.totalorder %s56, 0
      %p386 = por %p384, %p385
      %p387 = scmp.ne.s32.totalorder %s375, %s376
      %p388 = scmp.eq.s32.totalorder %s57, 1
      %p389 = por %p387, %p388
      %p391 = scmp.ne.s32.totalorder %s376, %s390
      %p392 = scmp.eq.s32.totalorder %s57, 0
      %p393 = por %p391, %p392
      %s395 = sadd.s32 %s394, 1
      %p398 = scmp.eq.s32.totalorder %s51, 1
      %p399 = scmp.ne.s32.totalorder %s394, %s396
      %p400 = scmp.eq.s32.totalorder %s51, 0
      %p401 = por %p399, %p400
      %p402 = scmp.ne.s32.totalorder %s394, %s396
      %p403 = scmp.eq.s32.totalorder %s56, 1
      %p404 = por %p402, %p403
      %p405 = scmp.ne.s32.totalorder %s396, %s397
      %p406 = scmp.eq.s32.totalorder %s56, 0
      %p407 = por %p405, %p406
      %p408 = scmp.ne.s32.totalorder %s396, %s397
      %p409 = scmp.eq.s32.totalorder %s57, 1
      %p410 = por %p408, %p409
      %p412 = scmp.ne.s32.totalorder %s397, %s411
      %p413 = scmp.eq.s32.totalorder %s57, 0
      %p414 = por %p412, %p413
      %s416 = sadd.s32 %s415, 1
      %p419 = scmp.eq.s32.totalorder %s51, 1
      %p420 = scmp.ne.s32.totalorder %s415, %s417
      %p421 = scmp.eq.s32.totalorder %s51, 0
      %p422 = por %p420, %p421
      %p423 = scmp.ne.s32.totalorder %s415, %s417
      %p424 = scmp.eq.s32.totalorder %s56, 1
      %p425 = por %p423, %p424
      %p426 = scmp.ne.s32.totalorder %s417, %s418
      %p427 = scmp.eq.s32.totalorder %s56, 0
      %p428 = por %p426, %p427
      %p429 = scmp.ne.s32.totalorder %s417, %s418
      %p430 = scmp.eq.s32.totalorder %s57, 1
      %p431 = por %p429, %p430
      %p433 = scmp.ne.s32.totalorder %s418, %s432
      %p434 = scmp.eq.s32.totalorder %s57, 0
      %p435 = por %p433, %p434
      %s437 = sadd.s32 %s436, 1
      %p440 = scmp.eq.s32.totalorder %s51, 1
      %p441 = scmp.ne.s32.totalorder %s436, %s438
      %p442 = scmp.eq.s32.totalorder %s51, 0
      %p443 = por %p441, %p442
      %p444 = scmp.ne.s32.totalorder %s436, %s438
      %p445 = scmp.eq.s32.totalorder %s56, 1
      %p446 = por %p444, %p445
      %p447 = scmp.ne.s32.totalorder %s438, %s439
      %p448 = scmp.eq.s32.totalorder %s56, 0
      %p449 = por %p447, %p448
      %p450 = scmp.ne.s32.totalorder %s438, %s439
      %p451 = scmp.eq.s32.totalorder %s57, 1
      %p452 = por %p450, %p451
      %p454 = scmp.ne.s32.totalorder %s439, %s453
      %p455 = scmp.eq.s32.totalorder %s57, 0
      %p456 = por %p454, %p455
      %s458 = sadd.s32 %s457, 1
      %p461 = scmp.eq.s32.totalorder %s51, 1
      %p462 = scmp.ne.s32.totalorder %s457, %s459
      %p463 = scmp.eq.s32.totalorder %s51, 0
      %p464 = por %p462, %p463
      %p465 = scmp.ne.s32.totalorder %s457, %s459
      %p466 = scmp.eq.s32.totalorder %s56, 1
      %p467 = por %p465, %p466
      %p468 = scmp.ne.s32.totalorder %s459, %s460
      %p469 = scmp.eq.s32.totalorder %s56, 0
      %p470 = por %p468, %p469
      %p471 = scmp.ne.s32.totalorder %s459, %s460
      %p472 = scmp.eq.s32.totalorder %s57, 1
      %p473 = por %p471, %p472
      %p475 = scmp.ne.s32.totalorder %s460, %s474
      %p476 = scmp.eq.s32.totalorder %s57, 0
      %p477 = por %p475, %p476
      %s479 = sadd.s32 %s478, 1
      %p482 = scmp.eq.s32.totalorder %s51, 1
      %p483 = scmp.ne.s32.totalorder %s478, %s480
      %p484 = scmp.eq.s32.totalorder %s51, 0
      %p485 = por %p483, %p484
      %p486 = scmp.ne.s32.totalorder %s478, %s480
      %p487 = scmp.eq.s32.totalorder %s56, 1
      %p488 = por %p486, %p487
      %p489 = scmp.ne.s32.totalorder %s480, %s481
      %p490 = scmp.eq.s32.totalorder %s56, 0
      %p491 = por %p489, %p490
      %p492 = scmp.ne.s32.totalorder %s480, %s481
      %p493 = scmp.eq.s32.totalorder %s57, 1
      %p494 = por %p492, %p493
      %p496 = scmp.ne.s32.totalorder %s481, %s495
      %p497 = scmp.eq.s32.totalorder %s57, 0
      %p498 = por %p496, %p497
      %s500 = sadd.s32 %s499, 1
      %p503 = scmp.eq.s32.totalorder %s51, 1
      %p504 = scmp.ne.s32.totalorder %s499, %s501
      %p505 = scmp.eq.s32.totalorder %s51, 0
      %p506 = por %p504, %p505
      %p507 = scmp.ne.s32.totalorder %s499, %s501
      %p508 = scmp.eq.s32.totalorder %s56, 1
      %p509 = por %p507, %p508
      %p510 = scmp.ne.s32.totalorder %s501, %s502
      %p511 = scmp.eq.s32.totalorder %s56, 0
      %p512 = por %p510, %p511
      %p513 = scmp.ne.s32.totalorder %s501, %s502
      %p514 = scmp.eq.s32.totalorder %s57, 1
      %p515 = por %p513, %p514
      %p517 = scmp.ne.s32.totalorder %s502, %s516
      %p518 = scmp.eq.s32.totalorder %s57, 0
      %p519 = por %p517, %p518
      %s521 = sadd.s32 %s520, 1
      %p524 = scmp.eq.s32.totalorder %s51, 1
      %p525 = scmp.ne.s32.totalorder %s520, %s522
      %p526 = scmp.eq.s32.totalorder %s51, 0
      %p527 = por %p525, %p526
      %p528 = scmp.ne.s32.totalorder %s520, %s522
      %p529 = scmp.eq.s32.totalorder %s56, 1
      %p530 = por %p528, %p529
      %p531 = scmp.ne.s32.totalorder %s522, %s523
      %p532 = scmp.eq.s32.totalorder %s56, 0
      %p533 = por %p531, %p532
      %p534 = scmp.ne.s32.totalorder %s522, %s523
      %p535 = scmp.eq.s32.totalorder %s57, 1
      %p536 = por %p534, %p535
      %p538 = scmp.ne.s32.totalorder %s523, %s537
      %p539 = scmp.eq.s32.totalorder %s57, 0
      %p540 = por %p538, %p539
      %s542 = sadd.s32 %s541, 1
      %p545 = scmp.eq.s32.totalorder %s51, 1
      %p546 = scmp.ne.s32.totalorder %s541, %s543
      %p547 = scmp.eq.s32.totalorder %s51, 0
      %p548 = por %p546, %p547
      %p549 = scmp.ne.s32.totalorder %s541, %s543
      %p550 = scmp.eq.s32.totalorder %s56, 1
      %p551 = por %p549, %p550
      %p552 = scmp.ne.s32.totalorder %s543, %s544
      %p553 = scmp.eq.s32.totalorder %s56, 0
      %p554 = por %p552, %p553
      %p555 = scmp.ne.s32.totalorder %s543, %s544
      %p556 = scmp.eq.s32.totalorder %s57, 1
      %p557 = por %p555, %p556
      %p559 = scmp.ne.s32.totalorder %s544, %s558
      %p560 = scmp.eq.s32.totalorder %s57, 0
      %p561 = por %p559, %p560
      %s563 = sadd.s32 %s562, 1
      %p566 = scmp.eq.s32.totalorder %s51, 1
      %p567 = scmp.ne.s32.totalorder %s562, %s564
      %p568 = scmp.eq.s32.totalorder %s51, 0
      %p569 = por %p567, %p568
      %p570 = scmp.ne.s32.totalorder %s562, %s564
      %p571 = scmp.eq.s32.totalorder %s56, 1
      %p572 = por %p570, %p571
      %p573 = scmp.ne.s32.totalorder %s564, %s565
      %p574 = scmp.eq.s32.totalorder %s56, 0
      %p575 = por %p573, %p574
      %p576 = scmp.ne.s32.totalorder %s564, %s565
      %p577 = scmp.eq.s32.totalorder %s57, 1
      %p578 = por %p576, %p577
      %p580 = scmp.ne.s32.totalorder %s565, %s579
      %p581 = scmp.eq.s32.totalorder %s57, 0
      %p582 = por %p580, %p581
      %s584 = sadd.s32 %s583, 1
      %p587 = scmp.eq.s32.totalorder %s51, 1
      %p588 = scmp.ne.s32.totalorder %s583, %s585
      %p589 = scmp.eq.s32.totalorder %s51, 0
      %p590 = por %p588, %p589
      %p591 = scmp.ne.s32.totalorder %s583, %s585
      %p592 = scmp.eq.s32.totalorder %s56, 1
      %p593 = por %p591, %p592
      %p594 = scmp.ne.s32.totalorder %s585, %s586
      %p595 = scmp.eq.s32.totalorder %s56, 0
      %p596 = por %p594, %p595
      %p597 = scmp.ne.s32.totalorder %s585, %s586
      %p598 = scmp.eq.s32.totalorder %s57, 1
      %p599 = por %p597, %p598
      %p601 = scmp.ne.s32.totalorder %s586, %s600
      %p602 = scmp.eq.s32.totalorder %s57, 0
      %p603 = por %p601, %p602
      %s605 = sadd.s32 %s604, 1
      %p608 = scmp.eq.s32.totalorder %s51, 1
      %p609 = scmp.ne.s32.totalorder %s604, %s606
      %p610 = scmp.eq.s32.totalorder %s51, 0
      %p611 = por %p609, %p610
      %p612 = scmp.ne.s32.totalorder %s604, %s606
      %p613 = scmp.eq.s32.totalorder %s56, 1
      %p614 = por %p612, %p613
      %p615 = scmp.ne.s32.totalorder %s606, %s607
      %p616 = scmp.eq.s32.totalorder %s56, 0
      %p617 = por %p615, %p616
      %p618 = scmp.ne.s32.totalorder %s606, %s607
      %p619 = scmp.eq.s32.totalorder %s57, 1
      %p620 = por %p618, %p619
      %p622 = scmp.ne.s32.totalorder %s607, %s621
      %p623 = scmp.eq.s32.totalorder %s57, 0
      %p624 = por %p622, %p623
      %s626 = sadd.s32 %s625, 1
      %p629 = scmp.eq.s32.totalorder %s51, 1
      %p630 = scmp.ne.s32.totalorder %s625, %s627
      %p631 = scmp.eq.s32.totalorder %s51, 0
      %p632 = por %p630, %p631
      %p633 = scmp.ne.s32.totalorder %s625, %s627
      %p634 = scmp.eq.s32.totalorder %s56, 1
      %p635 = por %p633, %p634
      %p636 = scmp.ne.s32.totalorder %s627, %s628
      %p637 = scmp.eq.s32.totalorder %s56, 0
      %p638 = por %p636, %p637
      %p639 = scmp.ne.s32.totalorder %s627, %s628
      %p640 = scmp.eq.s32.totalorder %s57, 1
      %p641 = por %p639, %p640
      %p643 = scmp.ne.s32.totalorder %s628, %s642
      %p644 = scmp.eq.s32.totalorder %s57, 0
      %p645 = por %p643, %p644
      %s647 = sadd.s32 %s646, 1
      %p650 = scmp.eq.s32.totalorder %s51, 1
      %p651 = scmp.ne.s32.totalorder %s646, %s648
      %p652 = scmp.eq.s32.totalorder %s51, 0
      %p653 = por %p651, %p652
      %p654 = scmp.ne.s32.totalorder %s646, %s648
      %p655 = scmp.eq.s32.totalorder %s56, 1
      %p656 = por %p654, %p655
      %p657 = scmp.ne.s32.totalorder %s648, %s649
      %p658 = scmp.eq.s32.totalorder %s56, 0
      %p659 = por %p657, %p658
      %p660 = scmp.ne.s32.totalorder %s648, %s649
      %p661 = scmp.eq.s32.totalorder %s57, 1
      %p662 = por %p660, %p661
      %p664 = scmp.ne.s32.totalorder %s649, %s663
      %p665 = scmp.eq.s32.totalorder %s57, 0
      %p666 = por %p664, %p665
      %s667 = ssub.s32 %s51, %s58
      %p668 = scmp.eq.s32.totalorder %s667, 0
      %s670 = sadd.s32 %s669, 1
      %s671 = scalar_select %p668, %s669, %s670
      %p674 = pneg %p668
      %p675 = scmp.eq.s32.totalorder %s51, 1
      %p676 = por %p674, %p675
      %p677 = scmp.ne.s32.totalorder %s669, %s672
      %p678 = scmp.eq.s32.totalorder %s51, 0
      %p679 = por %p677, %p678
      %p680 = scmp.ne.s32.totalorder %s669, %s672
      %p681 = scmp.eq.s32.totalorder %s56, 1
      %p682 = por %p680, %p681
      %p683 = scmp.ne.s32.totalorder %s672, %s673
      %p684 = scmp.eq.s32.totalorder %s56, 0
      %p685 = por %p683, %p684
      %p686 = scmp.ne.s32.totalorder %s672, %s673
      %p687 = scmp.eq.s32.totalorder %s57, 1
      %p688 = por %p686, %p687
      %p690 = scmp.ne.s32.totalorder %s673, %s689
      %p691 = scmp.eq.s32.totalorder %s57, 0
      %p692 = por %p690, %p691
      %p693 = scmp.le.s32.totalorder 1, %s51
      %p694 = scmp.lt.s32.totalorder %s51, 3
      %p695 = pnand %p693, %p694
      %p696 = pneg %p695
      // Predicated region
      $region9: #{tpu_custom_call.1} parent=5 // pred_check
        _
      $region10: #{tpu_custom_call.1} parent=5 // pred_check_branch
        %698 = sbr.rel (%p695) target = $region12
      $region11: #{tpu_custom_call.1} parent=5 // pred_region
        %s699 = ssub.s32 %s51, 1
        // Predicated region
        $region13: #{tpu_custom_call.1} parent=11 // pred_check
          %p700 = pneg %p176
        $region14: #{tpu_custom_call.1} parent=11 // pred_check_branch
          %702 = sbr.rel (%p700) target = $region16
        $region15: #{tpu_custom_call.1} parent=11 // pred_region
          _
        $region16: #{tpu_custom_call.1} parent=11 // pred_fallthru
          _
        // Predicated region
        $region17: #{tpu_custom_call.1} parent=11 // pred_check
          %p703 = pneg %p197
        $region18: #{tpu_custom_call.1} parent=11 // pred_check_branch
          %705 = sbr.rel (%p703) target = $region20
        $region19: #{tpu_custom_call.1} parent=11 // pred_region
          %s707 = ssub.s32 16, 16
          %708 = vsyncadd [#allocation9], %s707
          %s710 = sshll.u32 [#allocation8], 4
          %s711 = int_to_ptr.vmem [resolvable:$true] %s710
          %713 = dma.hbm_to_vmem [thread:$0]  %s5, 16, %s711, [#allocation9]
        $region20: #{tpu_custom_call.1} parent=11 // pred_fallthru
          _
        // Predicated region
        $region21: #{tpu_custom_call.1} parent=11 // pred_check
          %p714 = pneg %p218
        $region22: #{tpu_custom_call.1} parent=11 // pred_check_branch
          %716 = sbr.rel (%p714) target = $region24
        $region23: #{tpu_custom_call.1} parent=11 // pred_region
          %s718 = ssub.s32 256, 256
          %719 = vsyncadd [#allocation9], %s718
          %s720 = sshll.u32 [#allocation10], 4
          %s721 = int_to_ptr.vmem [resolvable:$true] %s720
          %726 = dma.hbm_to_vmem [thread:$0]  %s6, 256, %s721, [#allocation9], 64, 64, 4
        $region24: #{tpu_custom_call.1} parent=11 // pred_fallthru
          _
        // Predicated region
        $region25: #{tpu_custom_call.1} parent=11 // pred_check
          %p727 = pneg %p239
        $region26: #{tpu_custom_call.1} parent=11 // pred_check_branch
          %729 = sbr.rel (%p727) target = $region28
        $region27: #{tpu_custom_call.1} parent=11 // pred_region
          %s731 = ssub.s32 16, 16
          %732 = vsyncadd [#allocation12], %s731
          %s734 = sshll.u32 [#allocation11], 4
          %s735 = int_to_ptr.vmem [resolvable:$true] %s734
          %737 = dma.hbm_to_vmem [thread:$0]  %s7, 16, %s735, [#allocation12]
        $region28: #{tpu_custom_call.1} parent=11 // pred_fallthru
          _
        // Predicated region
        $region29: #{tpu_custom_call.1} parent=11 // pred_check
          %p738 = pneg %p260
        $region30: #{tpu_custom_call.1} parent=11 // pred_check_branch
          %740 = sbr.rel (%p738) target = $region32
        $region31: #{tpu_custom_call.1} parent=11 // pred_region
          %s742 = ssub.s32 256, 256
          %743 = vsyncadd [#allocation12], %s742
          %s744 = sshll.u32 [#allocation13], 4
          %s745 = int_to_ptr.vmem [resolvable:$true] %s744
          %750 = dma.hbm_to_vmem [thread:$0]  %s8, 256, %s745, [#allocation12], 64, 64, 4
        $region32: #{tpu_custom_call.1} parent=11 // pred_fallthru
          _
        // Predicated region
        $region33: #{tpu_custom_call.1} parent=11 // pred_check
          %p751 = pneg %p281
        $region34: #{tpu_custom_call.1} parent=11 // pred_check_branch
          %753 = sbr.rel (%p751) target = $region36
        $region35: #{tpu_custom_call.1} parent=11 // pred_region
          %s755 = ssub.s32 16, 16
          %756 = vsyncadd [#allocation15], %s755
          %s758 = sshll.u32 [#allocation14], 4
          %s759 = int_to_ptr.vmem [resolvable:$true] %s758
          %761 = dma.hbm_to_vmem [thread:$0]  %s9, 16, %s759, [#allocation15]
        $region36: #{tpu_custom_call.1} parent=11 // pred_fallthru
          _
        // Predicated region
        $region37: #{tpu_custom_call.1} parent=11 // pred_check
          %p762 = pneg %p302
        $region38: #{tpu_custom_call.1} parent=11 // pred_check_branch
          %764 = sbr.rel (%p762) target = $region40
        $region39: #{tpu_custom_call.1} parent=11 // pred_region
          _
        $region40: #{tpu_custom_call.1} parent=11 // pred_fallthru
          _
        // Predicated region
        $region41: #{tpu_custom_call.1} parent=11 // pred_check
          %p765 = pneg %p323
        $region42: #{tpu_custom_call.1} parent=11 // pred_check_branch
          %767 = sbr.rel (%p765) target = $region44
        $region43: #{tpu_custom_call.1} parent=11 // pred_region
          %s769 = ssub.s32 16, 16
          %770 = vsyncadd [#allocation15], %s769
          %s772 = sshll.u32 [#allocation16], 4
          %s773 = int_to_ptr.vmem [resolvable:$true] %s772
          %775 = dma.hbm_to_vmem [thread:$0]  %s11, 16, %s773, [#allocation15]
        $region44: #{tpu_custom_call.1} parent=11 // pred_fallthru
          _
        // Predicated region
        $region45: #{tpu_custom_call.1} parent=11 // pred_check
          %p776 = pneg %p344
        $region46: #{tpu_custom_call.1} parent=11 // pred_check_branch
          %778 = sbr.rel (%p776) target = $region48
        $region47: #{tpu_custom_call.1} parent=11 // pred_region
          %s780 = ssub.s32 16, 16
          %781 = vsyncadd [#allocation18], %s780
          %s783 = sshll.u32 [#allocation17], 4
          %s784 = int_to_ptr.vmem [resolvable:$true] %s783
          %786 = dma.hbm_to_vmem [thread:$0]  %s12, 16, %s784, [#allocation18]
        $region48: #{tpu_custom_call.1} parent=11 // pred_fallthru
          _
        // Predicated region
        $region49: #{tpu_custom_call.1} parent=11 // pred_check
          %p787 = pneg %p365
        $region50: #{tpu_custom_call.1} parent=11 // pred_check_branch
          %789 = sbr.rel (%p787) target = $region52
        $region51: #{tpu_custom_call.1} parent=11 // pred_region
          %s791 = ssub.s32 16, 16
          %792 = vsyncadd [#allocation18], %s791
          %s794 = sshll.u32 [#allocation19], 4
          %s795 = int_to_ptr.vmem [resolvable:$true] %s794
          %797 = dma.hbm_to_vmem [thread:$0]  %s13, 16, %s795, [#allocation18]
        $region52: #{tpu_custom_call.1} parent=11 // pred_fallthru
          _
        // Predicated region
        $region53: #{tpu_custom_call.1} parent=11 // pred_check
          %p798 = pneg %p386
        $region54: #{tpu_custom_call.1} parent=11 // pred_check_branch
          %800 = sbr.rel (%p798) target = $region56
        $region55: #{tpu_custom_call.1} parent=11 // pred_region
          %s802 = ssub.s32 256, 256
          %803 = vsyncadd [#allocation21], %s802
          %s804 = sshll.u32 [#allocation20], 4
          %s805 = int_to_ptr.vmem [resolvable:$true] %s804
          %810 = dma.hbm_to_vmem [thread:$0]  %s14, 256, %s805, [#allocation21], 64, 64, 4
        $region56: #{tpu_custom_call.1} parent=11 // pred_fallthru
          _
        // Predicated region
        $region57: #{tpu_custom_call.1} parent=11 // pred_check
          %p811 = pneg %p407
        $region58: #{tpu_custom_call.1} parent=11 // pred_check_branch
          %813 = sbr.rel (%p811) target = $region60
        $region59: #{tpu_custom_call.1} parent=11 // pred_region
          %s815 = ssub.s32 16, 16
          %816 = vsyncadd [#allocation21], %s815
          %s818 = sshll.u32 [#allocation22], 4
          %s819 = int_to_ptr.vmem [resolvable:$true] %s818
          %821 = dma.hbm_to_vmem [thread:$0]  %s15, 16, %s819, [#allocation21]
        $region60: #{tpu_custom_call.1} parent=11 // pred_fallthru
          _
        // Predicated region
        $region61: #{tpu_custom_call.1} parent=11 // pred_check
          %p822 = pneg %p428
        $region62: #{tpu_custom_call.1} parent=11 // pred_check_branch
          %824 = sbr.rel (%p822) target = $region64
        $region63: #{tpu_custom_call.1} parent=11 // pred_region
          %s826 = ssub.s32 256, 256
          %827 = vsyncadd [#allocation24], %s826
          %s828 = sshll.u32 [#allocation23], 4
          %s829 = int_to_ptr.vmem [resolvable:$true] %s828
          %834 = dma.hbm_to_vmem [thread:$0]  %s16, 256, %s829, [#allocation24], 64, 64, 4
        $region64: #{tpu_custom_call.1} parent=11 // pred_fallthru
          _
        // Predicated region
        $region65: #{tpu_custom_call.1} parent=11 // pred_check
          %p835 = pneg %p449
        $region66: #{tpu_custom_call.1} parent=11 // pred_check_branch
          %837 = sbr.rel (%p835) target = $region68
        $region67: #{tpu_custom_call.1} parent=11 // pred_region
          %s839 = ssub.s32 16, 16
          %840 = vsyncadd [#allocation24], %s839
          %s842 = sshll.u32 [#allocation25], 4
          %s843 = int_to_ptr.vmem [resolvable:$true] %s842
          %845 = dma.hbm_to_vmem [thread:$0]  %s17, 16, %s843, [#allocation24]
        $region68: #{tpu_custom_call.1} parent=11 // pred_fallthru
          _
        // Predicated region
        $region69: #{tpu_custom_call.1} parent=11 // pred_check
          %p846 = pneg %p470
        $region70: #{tpu_custom_call.1} parent=11 // pred_check_branch
          %848 = sbr.rel (%p846) target = $region72
        $region71: #{tpu_custom_call.1} parent=11 // pred_region
          %s850 = ssub.s32 256, 256
          %851 = vsyncadd [#allocation27], %s850
          %s852 = sshll.u32 [#allocation26], 4
          %s853 = int_to_ptr.vmem [resolvable:$true] %s852
          %858 = dma.hbm_to_vmem [thread:$0]  %s18, 256, %s853, [#allocation27], 64, 64, 4
        $region72: #{tpu_custom_call.1} parent=11 // pred_fallthru
          _
        // Predicated region
        $region73: #{tpu_custom_call.1} parent=11 // pred_check
          %p859 = pneg %p491
        $region74: #{tpu_custom_call.1} parent=11 // pred_check_branch
          %861 = sbr.rel (%p859) target = $region76
        $region75: #{tpu_custom_call.1} parent=11 // pred_region
          _
        $region76: #{tpu_custom_call.1} parent=11 // pred_fallthru
          _
        // Predicated region
        $region77: #{tpu_custom_call.1} parent=11 // pred_check
          %p862 = pneg %p512
        $region78: #{tpu_custom_call.1} parent=11 // pred_check_branch
          %864 = sbr.rel (%p862) target = $region80
        $region79: #{tpu_custom_call.1} parent=11 // pred_region
          %s866 = ssub.s32 256, 256
          %867 = vsyncadd [#allocation27], %s866
          %s868 = sshll.u32 [#allocation28], 4
          %s869 = int_to_ptr.vmem [resolvable:$true] %s868
          %874 = dma.hbm_to_vmem [thread:$0]  %s20, 256, %s869, [#allocation27], 64, 64, 4
        $region80: #{tpu_custom_call.1} parent=11 // pred_fallthru
          _
        // Predicated region
        $region81: #{tpu_custom_call.1} parent=11 // pred_check
          %p875 = pneg %p533
        $region82: #{tpu_custom_call.1} parent=11 // pred_check_branch
          %877 = sbr.rel (%p875) target = $region84
        $region83: #{tpu_custom_call.1} parent=11 // pred_region
          _
        $region84: #{tpu_custom_call.1} parent=11 // pred_fallthru
          _
        // Predicated region
        $region85: #{tpu_custom_call.1} parent=11 // pred_check
          %p878 = pneg %p554
        $region86: #{tpu_custom_call.1} parent=11 // pred_check_branch
          %880 = sbr.rel (%p878) target = $region88
        $region87: #{tpu_custom_call.1} parent=11 // pred_region
          _
        $region88: #{tpu_custom_call.1} parent=11 // pred_fallthru
          _
        // Predicated region
        $region89: #{tpu_custom_call.1} parent=11 // pred_check
          %p881 = pneg %p575
        $region90: #{tpu_custom_call.1} parent=11 // pred_check_branch
          %883 = sbr.rel (%p881) target = $region92
        $region91: #{tpu_custom_call.1} parent=11 // pred_region
          _
        $region92: #{tpu_custom_call.1} parent=11 // pred_fallthru
          _
        // Predicated region
        $region93: #{tpu_custom_call.1} parent=11 // pred_check
          %p884 = pneg %p596
        $region94: #{tpu_custom_call.1} parent=11 // pred_check_branch
          %886 = sbr.rel (%p884) target = $region96
        $region95: #{tpu_custom_call.1} parent=11 // pred_region
          %s888 = ssub.s32 256, 256
          %889 = vsyncadd [#allocation30], %s888
          %s890 = sshll.u32 [#allocation29], 4
          %s891 = int_to_ptr.vmem [resolvable:$true] %s890
          %896 = dma.hbm_to_vmem [thread:$0]  %s24, 256, %s891, [#allocation30], 64, 64, 4
        $region96: #{tpu_custom_call.1} parent=11 // pred_fallthru
          _
        // Predicated region
        $region97: #{tpu_custom_call.1} parent=11 // pred_check
          %p897 = pneg %p617
        $region98: #{tpu_custom_call.1} parent=11 // pred_check_branch
          %899 = sbr.rel (%p897) target = $region100
        $region99: #{tpu_custom_call.1} parent=11 // pred_region
          _
        $region100: #{tpu_custom_call.1} parent=11 // pred_fallthru
          _
        // Predicated region
        $region101: #{tpu_custom_call.1} parent=11 // pred_check
          %p900 = pneg %p638
        $region102: #{tpu_custom_call.1} parent=11 // pred_check_branch
          %902 = sbr.rel (%p900) target = $region104
        $region103: #{tpu_custom_call.1} parent=11 // pred_region
          _
        $region104: #{tpu_custom_call.1} parent=11 // pred_fallthru
          _
        // Predicated region
        $region105: #{tpu_custom_call.1} parent=11 // pred_check
          %p903 = pneg %p659
        $region106: #{tpu_custom_call.1} parent=11 // pred_check_branch
          %905 = sbr.rel (%p903) target = $region108
        $region107: #{tpu_custom_call.1} parent=11 // pred_region
          _
        $region108: #{tpu_custom_call.1} parent=11 // pred_fallthru
          _
      $region12: #{tpu_custom_call.1} parent=5 // pred_fallthru
        _
      %p906 = scmp.lt.s32.totalorder %s51, 2
      // Predicated region
      $region109: #{tpu_custom_call.1} parent=5 // pred_check
        %p907 = pneg %p906
      $region110: #{tpu_custom_call.1} parent=5 // pred_check_branch
        %909 = sbr.rel (%p907) target = $region112
      $region111: #{tpu_custom_call.1} parent=5 // pred_region
        // Predicated region
        $region113: #{tpu_custom_call.1} parent=111 // pred_check
          %p910 = pneg %p71
        $region114: #{tpu_custom_call.1} parent=111 // pred_check_branch
          %912 = sbr.rel (%p910) target = $region116
        $region115: #{tpu_custom_call.1} parent=111 // pred_region
          %s913 = smul.u32 2, %s51
          %p914 = scmp.lt.s32.totalorder %s913, 3
          %s915 = scalar_select %p914, %s913, 3
          %s916 = smul.addr %s915, 8
          %s917 = scalar_lea.vmem %s0, %s916
          %s918 = smul.u32 2, %s51
        $region116: #{tpu_custom_call.1} parent=111 // pred_fallthru
          _
        // Predicated region
        $region117: #{tpu_custom_call.1} parent=111 // pred_check
          %p919 = pneg %p97
        $region118: #{tpu_custom_call.1} parent=111 // pred_check_branch
          %921 = sbr.rel (%p919) target = $region120
        $region119: #{tpu_custom_call.1} parent=111 // pred_region
          %s922 = sand.u32 %s87, 1
          %s923 = scalar_lea.sflag [#allocation3], %s922
          %s924 = sand.u32 %s87, 1
          %s925 = smul.addr %s924, 32
          %s926 = scalar_lea.vmem [#allocation2], %s925
          %s927 = smul.u32 2, %s51
          %s929 = ssub.s32 512, 512
          %930 = vsyncadd %s923, %s929
          %s931 = smul.addr %s927, 2
          %s932 = smul.addr %s931, 128
          %s933 = scalar_lea.hbm %s1, %s932
          %s934 = sshll.u32 %s926, 4
          %s935 = int_to_ptr.vmem [resolvable:$true] %s934
          %940 = dma.hbm_to_vmem [thread:$0]  %s933, 512, %s935, %s923, 128, 128, 8
        $region120: #{tpu_custom_call.1} parent=111 // pred_fallthru
          _
        // Predicated region
        $region121: #{tpu_custom_call.1} parent=111 // pred_check
          %p941 = pneg %p123
        $region122: #{tpu_custom_call.1} parent=111 // pred_check_branch
          %943 = sbr.rel (%p941) target = $region124
        $region123: #{tpu_custom_call.1} parent=111 // pred_region
          %s944 = sand.u32 %s51, 1
          %s945 = scalar_lea.sflag [#allocation6], %s944
          %s946 = sand.u32 %s113, 1
          %s947 = smul.addr %s946, 16
          %s948 = scalar_lea.vmem [#allocation5], %s947
          %s949 = smul.u32 2, %s51
          %s951 = ssub.s32 256, 256
          %952 = vsyncadd %s945, %s951
          %s953 = smul.addr %s949, 128
          %s954 = scalar_lea.hbm %s2, %s953
          %s955 = sshll.u32 %s948, 4
          %s956 = int_to_ptr.vmem [resolvable:$true] %s955
          %961 = dma.hbm_to_vmem [thread:$0]  %s954, 256, %s956, %s945, 128, 128, 8
        $region124: #{tpu_custom_call.1} parent=111 // pred_fallthru
          _
        // Predicated region
        $region125: #{tpu_custom_call.1} parent=111 // pred_check
          %p962 = pneg %p149
        $region126: #{tpu_custom_call.1} parent=111 // pred_check_branch
          %964 = sbr.rel (%p962) target = $region128
        $region127: #{tpu_custom_call.1} parent=111 // pred_region
          %s965 = sand.u32 %s51, 1
          %s966 = scalar_lea.sflag [#allocation6], %s965
          %s967 = sand.u32 %s139, 1
          %s968 = smul.addr %s967, 16
          %s969 = scalar_lea.vmem [#allocation7], %s968
          %s970 = smul.u32 2, %s51
          %s972 = ssub.s32 256, 256
          %973 = vsyncadd %s966, %s972
          %s974 = smul.addr %s970, 128
          %s975 = scalar_lea.hbm %s3, %s974
          %s976 = sshll.u32 %s969, 4
          %s977 = int_to_ptr.vmem [resolvable:$true] %s976
          %982 = dma.hbm_to_vmem [thread:$0]  %s975, 256, %s977, %s966, 128, 128, 8
        $region128: #{tpu_custom_call.1} parent=111 // pred_fallthru
          _
      $region112: #{tpu_custom_call.1} parent=5 // pred_fallthru
        _
      %p983 = scmp.le.s32.totalorder 1, %s51
      %p984 = scmp.lt.s32.totalorder %s51, 3
      %p985 = pnand %p983, %p984
      %p986 = pneg %p985
      // Predicated region
      $region129: #{tpu_custom_call.1} parent=5 // pred_check
        _
      $region130: #{tpu_custom_call.1} parent=5 // pred_check_branch
        %988 = sbr.rel (%p985) target = $region132
      $region131: #{tpu_custom_call.1} parent=5 // pred_region
        %s989 = ssub.s32 %s51, 1
        %s990 = sand.u32 %s90, 1
        %s991 = scalar_lea.sflag [#allocation3], %s990
        %s992 = sand.u32 %s90, 1
        %s993 = smul.addr %s992, 32
        %s994 = scalar_lea.vmem [#allocation2], %s993
        // Predicated region
        $region133: #{tpu_custom_call.1} parent=131 // pred_check
          %p995 = pneg %p103
        $region134: #{tpu_custom_call.1} parent=131 // pred_check_branch
          %997 = sbr.rel (%p995) target = $region136
        $region135: #{tpu_custom_call.1} parent=131 // pred_region
          %998 = dma.done %s991, 512
        $region136: #{tpu_custom_call.1} parent=131 // pred_fallthru
          _
        %s999 = sand.u32 %s56, 1
        %s1000 = scalar_lea.sflag [#allocation6], %s999
        %s1001 = sand.u32 %s116, 1
        %s1002 = smul.addr %s1001, 16
        %s1003 = scalar_lea.vmem [#allocation5], %s1002
        // Predicated region
        $region137: #{tpu_custom_call.1} parent=131 // pred_check
          %p1004 = pneg %p129
        $region138: #{tpu_custom_call.1} parent=131 // pred_check_branch
          %1006 = sbr.rel (%p1004) target = $region140
        $region139: #{tpu_custom_call.1} parent=131 // pred_region
          %1007 = dma.done %s1000, 256
        $region140: #{tpu_custom_call.1} parent=131 // pred_fallthru
          _
        %s1008 = sand.u32 %s56, 1
        %s1009 = scalar_lea.sflag [#allocation6], %s1008
        %s1010 = sand.u32 %s142, 1
        %s1011 = smul.addr %s1010, 16
        %s1012 = scalar_lea.vmem [#allocation7], %s1011
        // Predicated region
        $region141: #{tpu_custom_call.1} parent=131 // pred_check
          %p1013 = pneg %p155
        $region142: #{tpu_custom_call.1} parent=131 // pred_check_branch
          %1015 = sbr.rel (%p1013) target = $region144
        $region143: #{tpu_custom_call.1} parent=131 // pred_region
          %1016 = dma.done %s1009, 256
        $region144: #{tpu_custom_call.1} parent=131 // pred_fallthru
          _
        // Predicated region
        $region145: #{tpu_custom_call.1} parent=131 // pred_check
          %p1017 = pneg %p197
        $region146: #{tpu_custom_call.1} parent=131 // pred_check_branch
          %1019 = sbr.rel (%p1017) target = $region148
        $region147: #{tpu_custom_call.1} parent=131 // pred_region
          %1020 = dma.done [#allocation9], 16
        $region148: #{tpu_custom_call.1} parent=131 // pred_fallthru
          _
        // Predicated region
        $region149: #{tpu_custom_call.1} parent=131 // pred_check
          %p1021 = pneg %p218
        $region150: #{tpu_custom_call.1} parent=131 // pred_check_branch
          %1023 = sbr.rel (%p1021) target = $region152
        $region151: #{tpu_custom_call.1} parent=131 // pred_region
          %1024 = dma.done [#allocation9], 256
        $region152: #{tpu_custom_call.1} parent=131 // pred_fallthru
          _
        // Predicated region
        $region153: #{tpu_custom_call.1} parent=131 // pred_check
          %p1025 = pneg %p239
        $region154: #{tpu_custom_call.1} parent=131 // pred_check_branch
          %1027 = sbr.rel (%p1025) target = $region156
        $region155: #{tpu_custom_call.1} parent=131 // pred_region
          %1028 = dma.done [#allocation12], 16
        $region156: #{tpu_custom_call.1} parent=131 // pred_fallthru
          _
        // Predicated region
        $region157: #{tpu_custom_call.1} parent=131 // pred_check
          %p1029 = pneg %p260
        $region158: #{tpu_custom_call.1} parent=131 // pred_check_branch
          %1031 = sbr.rel (%p1029) target = $region160
        $region159: #{tpu_custom_call.1} parent=131 // pred_region
          %1032 = dma.done [#allocation12], 256
        $region160: #{tpu_custom_call.1} parent=131 // pred_fallthru
          _
        // Predicated region
        $region161: #{tpu_custom_call.1} parent=131 // pred_check
          %p1033 = pneg %p281
        $region162: #{tpu_custom_call.1} parent=131 // pred_check_branch
          %1035 = sbr.rel (%p1033) target = $region164
        $region163: #{tpu_custom_call.1} parent=131 // pred_region
          %1036 = dma.done [#allocation15], 16
        $region164: #{tpu_custom_call.1} parent=131 // pred_fallthru
          _
        // Predicated region
        $region165: #{tpu_custom_call.1} parent=131 // pred_check
          %p1037 = pneg %p323
        $region166: #{tpu_custom_call.1} parent=131 // pred_check_branch
          %1039 = sbr.rel (%p1037) target = $region168
        $region167: #{tpu_custom_call.1} parent=131 // pred_region
          %1040 = dma.done [#allocation15], 16
        $region168: #{tpu_custom_call.1} parent=131 // pred_fallthru
          _
        // Predicated region
        $region169: #{tpu_custom_call.1} parent=131 // pred_check
          %p1041 = pneg %p344
        $region170: #{tpu_custom_call.1} parent=131 // pred_check_branch
          %1043 = sbr.rel (%p1041) target = $region172
        $region171: #{tpu_custom_call.1} parent=131 // pred_region
          %1044 = dma.done [#allocation18], 16
        $region172: #{tpu_custom_call.1} parent=131 // pred_fallthru
          _
        // Predicated region
        $region173: #{tpu_custom_call.1} parent=131 // pred_check
          %p1045 = pneg %p365
        $region174: #{tpu_custom_call.1} parent=131 // pred_check_branch
          %1047 = sbr.rel (%p1045) target = $region176
        $region175: #{tpu_custom_call.1} parent=131 // pred_region
          %1048 = dma.done [#allocation18], 16
        $region176: #{tpu_custom_call.1} parent=131 // pred_fallthru
          _
        // Predicated region
        $region177: #{tpu_custom_call.1} parent=131 // pred_check
          %p1049 = pneg %p386
        $region178: #{tpu_custom_call.1} parent=131 // pred_check_branch
          %1051 = sbr.rel (%p1049) target = $region180
        $region179: #{tpu_custom_call.1} parent=131 // pred_region
          %1052 = dma.done [#allocation21], 256
        $region180: #{tpu_custom_call.1} parent=131 // pred_fallthru
          _
        // Predicated region
        $region181: #{tpu_custom_call.1} parent=131 // pred_check
          %p1053 = pneg %p407
        $region182: #{tpu_custom_call.1} parent=131 // pred_check_branch
          %1055 = sbr.rel (%p1053) target = $region184
        $region183: #{tpu_custom_call.1} parent=131 // pred_region
          %1056 = dma.done [#allocation21], 16
        $region184: #{tpu_custom_call.1} parent=131 // pred_fallthru
          _
        // Predicated region
        $region185: #{tpu_custom_call.1} parent=131 // pred_check
          %p1057 = pneg %p428
        $region186: #{tpu_custom_call.1} parent=131 // pred_check_branch
          %1059 = sbr.rel (%p1057) target = $region188
        $region187: #{tpu_custom_call.1} parent=131 // pred_region
          %1060 = dma.done [#allocation24], 256
        $region188: #{tpu_custom_call.1} parent=131 // pred_fallthru
          _
        // Predicated region
        $region189: #{tpu_custom_call.1} parent=131 // pred_check
          %p1061 = pneg %p449
        $region190: #{tpu_custom_call.1} parent=131 // pred_check_branch
          %1063 = sbr.rel (%p1061) target = $region192
        $region191: #{tpu_custom_call.1} parent=131 // pred_region
          %1064 = dma.done [#allocation24], 16
        $region192: #{tpu_custom_call.1} parent=131 // pred_fallthru
          _
        // Predicated region
        $region193: #{tpu_custom_call.1} parent=131 // pred_check
          %p1065 = pneg %p470
        $region194: #{tpu_custom_call.1} parent=131 // pred_check_branch
          %1067 = sbr.rel (%p1065) target = $region196
        $region195: #{tpu_custom_call.1} parent=131 // pred_region
          %1068 = dma.done [#allocation27], 256
        $region196: #{tpu_custom_call.1} parent=131 // pred_fallthru
          _
        // Predicated region
        $region197: #{tpu_custom_call.1} parent=131 // pred_check
          %p1069 = pneg %p512
        $region198: #{tpu_custom_call.1} parent=131 // pred_check_branch
          %1071 = sbr.rel (%p1069) target = $region200
        $region199: #{tpu_custom_call.1} parent=131 // pred_region
          %1072 = dma.done [#allocation27], 256
        $region200: #{tpu_custom_call.1} parent=131 // pred_fallthru
          _
        // Predicated region
        $region201: #{tpu_custom_call.1} parent=131 // pred_check
          %p1073 = pneg %p596
        $region202: #{tpu_custom_call.1} parent=131 // pred_check_branch
          %1075 = sbr.rel (%p1073) target = $region204
        $region203: #{tpu_custom_call.1} parent=131 // pred_region
          %1076 = dma.done [#allocation30], 256
        $region204: #{tpu_custom_call.1} parent=131 // pred_fallthru
          _
        %s1077 = smul.u32 2, %s56
        %p1078 = scmp.lt.s32.totalorder %s1077, 3
        %s1079 = scalar_select %p1078, %s1077, 3
        %s1080 = smul.addr %s1079, 8
        %s1081 = scalar_lea.vmem %s0, %s1080
        %p1082 = pneg %p77
        %p1083 = pneg %p74
        %s1084 = sand.u32 %s90, 1
        %s1085 = scalar_lea.sflag [#allocation3], %s1084
        %s1086 = sand.u32 %s90, 1
        %s1087 = smul.addr %s1086, 32
        %s1088 = scalar_lea.vmem [#allocation2], %s1087
        %p1089 = pneg %p103
        %p1090 = pneg %p100
        %s1091 = sand.u32 %s56, 1
        %s1092 = scalar_lea.sflag [#allocation6], %s1091
        %s1093 = sand.u32 %s116, 1
        %s1094 = smul.addr %s1093, 16
        %s1095 = scalar_lea.vmem [#allocation5], %s1094
        %p1096 = pneg %p129
        %p1097 = pneg %p126
        %s1098 = sand.u32 %s56, 1
        %s1099 = scalar_lea.sflag [#allocation6], %s1098
        %s1100 = sand.u32 %s142, 1
        %s1101 = smul.addr %s1100, 16
        %s1102 = scalar_lea.vmem [#allocation7], %s1101
        %p1103 = pneg %p155
        %p1104 = pneg %p152
        %p1105 = pneg %p176
        %p1106 = pneg %p173
        %p1107 = pneg %p197
        %p1108 = pneg %p194
        %p1109 = pneg %p218
        %p1110 = pneg %p215
        %p1111 = pneg %p239
        %p1112 = pneg %p236
        %p1113 = pneg %p260
        %p1114 = pneg %p257
        %p1115 = pneg %p281
        %p1116 = pneg %p278
        %p1117 = pneg %p302
        %p1118 = pneg %p299
        %p1119 = pneg %p323
        %p1120 = pneg %p320
        %p1121 = pneg %p344
        %p1122 = pneg %p341
        %p1123 = pneg %p365
        %p1124 = pneg %p362
        %p1125 = pneg %p386
        %p1126 = pneg %p383
        %p1127 = pneg %p407
        %p1128 = pneg %p404
        %p1129 = pneg %p428
        %p1130 = pneg %p425
        %p1131 = pneg %p449
        %p1132 = pneg %p446
        %p1133 = pneg %p470
        %p1134 = pneg %p467
        %p1135 = pneg %p491
        %p1136 = pneg %p488
        %p1137 = pneg %p512
        %p1138 = pneg %p509
        %p1139 = pneg %p533
        %p1140 = pneg %p530
        %p1141 = pneg %p554
        %p1142 = pneg %p551
        %p1143 = pneg %p575
        %p1144 = pneg %p572
        %p1145 = pneg %p596
        %p1146 = pneg %p593
        %p1147 = pneg %p617
        %p1148 = pneg %p614
        %p1149 = pneg %p638
        %p1150 = pneg %p635
        %p1151 = pneg %p659
        %p1152 = pneg %p656
        %p1153 = pneg %p685
        %p1154 = pneg %p682
        %s1155 = sand.u32 %s672, 1
        %s1156 = scalar_lea.sflag [#allocation4], %s1155
        %s1157 = sand.u32 %s672, 1
        %s1158 = smul.addr %s1157, 4
        %s1159 = scalar_lea.vmem [#allocation31], %s1158
        %s1160 = smul.u32 2, %s56
        %p1161 = scmp.lt.s32.totalorder %s1160, 3
        %s1162 = scalar_select %p1161, %s1160, 3
        %s1163 = smul.addr %s1162, 8
        %s1164 = scalar_lea.vmem %s0, %s1163
        %s1165 = smul.u32 2, %s56
        %s1166 = smul.u32 2, %s56
        %s1167 = smul.u32 2, %s56
        %s1168 = smul.u32 2, %s56
        %v1170 = vld [vmem:[%s1164] sm:$0xff]
        %v1171 = vld [vmem:[%s1164 + $0x8] sm:$0xff]
        %v1172 = vld [vmem:[%s994] sm:$0xff]
        %v1173 = vld [vmem:[%s994 + $0x8] sm:$0xff]
        %v1174 = vld [vmem:[%s994 + $0x10] sm:$0xff]
        %v1175 = vld [vmem:[%s994 + $0x18] sm:$0xff]
        %v1176 = vld [vmem:[%s4] sm:$0xf]
        %v1177 = vld [vmem:[%s4 + $0x4] sm:$0xf]
        %v1178 = vld [vmem:[%s4 + $0x8] sm:$0xf]
        %v1179 = vld [vmem:[%s4 + $0xc] sm:$0xf]
        %v1180 = vld [vmem:[#allocation8] sm:$0x1]
        %v1181 = vld [vmem:[#allocation10] sm:$0xf]
        %v1182 = vld [vmem:[#allocation10 + $0x4] sm:$0xf]
        %v1183 = vld [vmem:[#allocation10 + $0x8] sm:$0xf]
        %v1184 = vld [vmem:[#allocation10 + $0xc] sm:$0xf]
        %v1185 = vld [vmem:[#allocation11] sm:$0x1]
        %v1186 = vld [vmem:[#allocation13] sm:$0xf]
        %v1187 = vld [vmem:[#allocation13 + $0x4] sm:$0xf]
        %v1188 = vld [vmem:[#allocation13 + $0x8] sm:$0xf]
        %v1189 = vld [vmem:[#allocation13 + $0xc] sm:$0xf]
        %v1190 = vld [vmem:[#allocation14] sm:$0x1]
        %v1191 = vld [vmem:[%s10] sm:$0xf]
        %v1192 = vld [vmem:[%s10 + $0x4] sm:$0xf]
        %v1193 = vld [vmem:[%s10 + $0x8] sm:$0xf]
        %v1194 = vld [vmem:[%s10 + $0xc] sm:$0xf]
        %v1195 = vld [vmem:[#allocation16] sm:$0x1]
        %v1196 = vld [vmem:[#allocation17] sm:$0x1]
        %v1197 = vld [vmem:[#allocation19] sm:$0x1]
        %v1198 = vpack.c.bf16 %v1171, %v1170
        %v1200 = vlaneseq
        %v1201 = vshrl.u32 %v1200, 7
        %v1202 = vsub.s32 0, %v1201
        %v1203 = vrot.slane %v1180, %v1202
        %v1209 = vunpack.c.l.b16 %v1176
        %v1210 = vunpack.c.l.b16 %v1177
        %v1211 = vunpack.c.l.b16 %v1178
        %v1212 = vunpack.c.l.b16 %v1179
        %v1213 = vpack.c.b16 %v1210, %v1209
        %v1214 = vpack.c.b16 %v1212, %v1211
        %vm1217 = vcmask 261120
        %v1219 = vsel %vm1217, %v1198, 0
        %1221 = vmatprep.subr.bf16.mxu0 0
        %1222 = vmatpush1.bf16.msra.mxu0 0
        %1223 = vmatprep.subr.bf16.mxu0 0
        %1224 = vmatpush1.bf16.msra.mxu0 0
        %1225 = vmatprep.subr.bf16.mxu0 0
        %1226 = vmatpush1.bf16.msra.mxu0 0
        %1227 = vmatprep.subr.bf16.mxu0 0
        %1228 = vmatpush1.bf16.msra.mxu0 0
        %1229 = vmatprep.subr.bf16.mxu0 0
        %1230 = vmatpush1.bf16.msra.mxu0 0
        %1231 = vmatprep.subr.bf16.mxu0 0
        %1232 = vmatpush1.bf16.msra.mxu0 0
        %1233 = vmatprep.subr.bf16.mxu0 0
        %1234 = vmatpush1.bf16.msra.mxu0 %v1214
        %1235 = vmatprep.subr.bf16.mxu0 0
        %1236 = vmatpush1.bf16.msra.mxu0 %v1213
        %1237 = vmatprep.subr.bf16.mxu0 0
        %1238 = vmatpush2.bf16.msra.mxu0 0
        %1239 = vmatprep.subr.bf16.mxu0 0
        %1240 = vmatpush2.bf16.msra.mxu0 0
        %1241 = vmatprep.subr.bf16.mxu0 0
        %1242 = vmatpush2.bf16.msra.mxu0 0
        %1243 = vmatprep.subr.bf16.mxu0 0
        %1244 = vmatpush2.bf16.msra.mxu0 0
        %1245 = vmatprep.subr.bf16.mxu0 0
        %1246 = vmatpush2.bf16.msra.mxu0 0
        %1247 = vmatprep.subr.bf16.mxu0 0
        %1248 = vmatpush2.bf16.msra.mxu0 0
        %1249 = vmatprep.subr.bf16.mxu0 0
        %1250 = vmatpush2.bf16.msra.mxu0 0
        %1251 = vmatprep.subr.bf16.mxu0 0
        %1252 = vmatpush2.bf16.msra.mxu0 0
        %1253 = vmatprep.mubr.bf16.mxu0 0
        %1254 = vmatmul.mubr.bf16.gmra.mxu0 %v1219
        %v1255 = vpop.f32.mrf.mxu0
        %v1256 = vadd.f32 %v1203, %v1255
        %v1257 = vpop.f32.mrf.mxu0
        %v1258 = vpop.f32.mrf.mxu0
        %v1259 = vadd.f32 %v1203, %v1258
        %v1260 = vpop.f32.mrf.mxu0
        %1261 = vdwg.mxu0
        %v1262 = vmul.f32 %v1256, 0.35355338
        %v1263 = vmul.f32 %v1259, 0.35355338
        %v1265 = vlaneseq
        %v1266 = vshrl.u32 %v1265, 7
        %v1267 = vsub.s32 0, %v1266
        %v1268 = vrot.slane %v1185, %v1267
        %v1274 = vunpack.c.l.b16 %v1181
        %v1275 = vunpack.c.l.b16 %v1182
        %v1276 = vunpack.c.l.b16 %v1183
        %v1277 = vunpack.c.l.b16 %v1184
        %v1278 = vpack.c.b16 %v1275, %v1274
        %v1279 = vpack.c.b16 %v1277, %v1276
        %1282 = vmatprep.subr.bf16.mxu0 0
        %1283 = vmatpush1.bf16.msra.mxu0 0
        %1284 = vmatprep.subr.bf16.mxu0 0
        %1285 = vmatpush1.bf16.msra.mxu0 0
        %1286 = vmatprep.subr.bf16.mxu0 0
        %1287 = vmatpush1.bf16.msra.mxu0 0
        %1288 = vmatprep.subr.bf16.mxu0 0
        %1289 = vmatpush1.bf16.msra.mxu0 0
        %1290 = vmatprep.subr.bf16.mxu0 0
        %1291 = vmatpush1.bf16.msra.mxu0 0
        %1292 = vmatprep.subr.bf16.mxu0 0
        %1293 = vmatpush1.bf16.msra.mxu0 0
        %1294 = vmatprep.subr.bf16.mxu0 0
        %1295 = vmatpush1.bf16.msra.mxu0 %v1279
        %1296 = vmatprep.subr.bf16.mxu0 0
        %1297 = vmatpush1.bf16.msra.mxu0 %v1278
        %1298 = vmatprep.subr.bf16.mxu0 0
        %1299 = vmatpush2.bf16.msra.mxu0 0
        %1300 = vmatprep.subr.bf16.mxu0 0
        %1301 = vmatpush2.bf16.msra.mxu0 0
        %1302 = vmatprep.subr.bf16.mxu0 0
        %1303 = vmatpush2.bf16.msra.mxu0 0
        %1304 = vmatprep.subr.bf16.mxu0 0
        %1305 = vmatpush2.bf16.msra.mxu0 0
        %1306 = vmatprep.subr.bf16.mxu0 0
        %1307 = vmatpush2.bf16.msra.mxu0 0
        %1308 = vmatprep.subr.bf16.mxu0 0
        %1309 = vmatpush2.bf16.msra.mxu0 0
        %1310 = vmatprep.subr.bf16.mxu0 0
        %1311 = vmatpush2.bf16.msra.mxu0 0
        %1312 = vmatprep.subr.bf16.mxu0 0
        %1313 = vmatpush2.bf16.msra.mxu0 0
        %1314 = vmatprep.mubr.bf16.mxu0 0
        %1315 = vmatmul.mubr.bf16.gmra.mxu0 %v1219
        %v1316 = vpop.f32.mrf.mxu0
        %v1317 = vadd.f32 %v1268, %v1316
        %v1318 = vpop.f32.mrf.mxu0
        %v1319 = vpop.f32.mrf.mxu0
        %v1320 = vadd.f32 %v1268, %v1319
        %v1321 = vpop.f32.mrf.mxu0
        %1322 = vdwg.mxu0
        %v1324 = vlaneseq
        %v1325 = vshrl.u32 %v1324, 7
        %v1326 = vsub.s32 0, %v1325
        %v1327 = vrot.slane %v1190, %v1326
        %v1333 = vunpack.c.l.b16 %v1186
        %v1334 = vunpack.c.l.b16 %v1187
        %v1335 = vunpack.c.l.b16 %v1188
        %v1336 = vunpack.c.l.b16 %v1189
        %v1337 = vpack.c.b16 %v1334, %v1333
        %v1338 = vpack.c.b16 %v1336, %v1335
        %1341 = vmatprep.subr.bf16.mxu0 0
        %1342 = vmatpush1.bf16.msra.mxu0 0
        %1343 = vmatprep.subr.bf16.mxu0 0
        %1344 = vmatpush1.bf16.msra.mxu0 0
        %1345 = vmatprep.subr.bf16.mxu0 0
        %1346 = vmatpush1.bf16.msra.mxu0 0
        %1347 = vmatprep.subr.bf16.mxu0 0
        %1348 = vmatpush1.bf16.msra.mxu0 0
        %1349 = vmatprep.subr.bf16.mxu0 0
        %1350 = vmatpush1.bf16.msra.mxu0 0
        %1351 = vmatprep.subr.bf16.mxu0 0
        %1352 = vmatpush1.bf16.msra.mxu0 0
        %1353 = vmatprep.subr.bf16.mxu0 0
        %1354 = vmatpush1.bf16.msra.mxu0 %v1338
        %1355 = vmatprep.subr.bf16.mxu0 0
        %1356 = vmatpush1.bf16.msra.mxu0 %v1337
        %1357 = vmatprep.subr.bf16.mxu0 0
        %1358 = vmatpush2.bf16.msra.mxu0 0
        %1359 = vmatprep.subr.bf16.mxu0 0
        %1360 = vmatpush2.bf16.msra.mxu0 0
        %1361 = vmatprep.subr.bf16.mxu0 0
        %1362 = vmatpush2.bf16.msra.mxu0 0
        %1363 = vmatprep.subr.bf16.mxu0 0
        %1364 = vmatpush2.bf16.msra.mxu0 0
        %1365 = vmatprep.subr.bf16.mxu0 0
        %1366 = vmatpush2.bf16.msra.mxu0 0
        %1367 = vmatprep.subr.bf16.mxu0 0
        %1368 = vmatpush2.bf16.msra.mxu0 0
        %1369 = vmatprep.subr.bf16.mxu0 0
        %1370 = vmatpush2.bf16.msra.mxu0 0
        %1371 = vmatprep.subr.bf16.mxu0 0
        %1372 = vmatpush2.bf16.msra.mxu0 0
        %1373 = vmatprep.mubr.bf16.mxu0 0
        %1374 = vmatmul.mubr.bf16.gmra.mxu0 %v1219
        %v1375 = vpop.f32.mrf.mxu0
        %v1376 = vadd.f32 %v1327, %v1375
        %v1377 = vpop.f32.mrf.mxu0
        %v1378 = vpop.f32.mrf.mxu0
        %v1379 = vadd.f32 %v1327, %v1378
        %v1380 = vpop.f32.mrf.mxu0
        %1381 = vdwg.mxu0
        %v1382 = vld [vmem:[%s1003] sm:$0xff]
        %vm1383 = vcmp.gt.f32.partialorder %v1382, 0.0
        %v1384 = vsel %vm1383, 0.0, -1e+09
        %v1385 = vpack.c.bf16 %v1262, %v1262
        %v1386 = vpack.c.bf16 %v1317, %v1317
        %v1387 = vpack.c.bf16 %v1376, %v1376
        %vm1388 = vcmask 64512
        %v1390 = vsel %vm1388, %v1385, 0
        %v1393 = vsel %vm1388, %v1386, 0
        %1395 = vmatprep.subr.bf16.mxu0 0
        %1396 = vmatpush1.bf16.xpose.msra.mxu0 0
        %1397 = vmatprep.subr.bf16.mxu0 0
        %1398 = vmatpush1.bf16.xpose.msra.mxu0 0
        %1399 = vmatprep.subr.bf16.mxu0 0
        %1400 = vmatpush1.bf16.xpose.msra.mxu0 0
        %1401 = vmatprep.subr.bf16.mxu0 0
        %1402 = vmatpush1.bf16.xpose.msra.mxu0 0
        %1403 = vmatprep.subr.bf16.mxu0 0
        %1404 = vmatpush1.bf16.xpose.msra.mxu0 0
        %1405 = vmatprep.subr.bf16.mxu0 0
        %1406 = vmatpush1.bf16.xpose.msra.mxu0 0
        %1407 = vmatprep.subr.bf16.mxu0 0
        %1408 = vmatpush1.bf16.xpose.msra.mxu0 0
        %1409 = vmatprep.subr.bf16.mxu0 0
        %1410 = vmatpush1.bf16.xpose.msra.mxu0 %v1393
        %1411 = vmatprep.subr.bf16.mxu0 0
        %1412 = vmatpush2.bf16.xpose.msra.mxu0 0
        %1413 = vmatprep.subr.bf16.mxu0 0
        %1414 = vmatpush2.bf16.xpose.msra.mxu0 0
        %1415 = vmatprep.subr.bf16.mxu0 0
        %1416 = vmatpush2.bf16.xpose.msra.mxu0 0
        %1417 = vmatprep.subr.bf16.mxu0 0
        %1418 = vmatpush2.bf16.xpose.msra.mxu0 0
        %1419 = vmatprep.subr.bf16.mxu0 0
        %1420 = vmatpush2.bf16.xpose.msra.mxu0 0
        %1421 = vmatprep.subr.bf16.mxu0 0
        %1422 = vmatpush2.bf16.xpose.msra.mxu0 0
        %1423 = vmatprep.subr.bf16.mxu0 0
        %1424 = vmatpush2.bf16.xpose.msra.mxu0 0
        %1425 = vmatprep.subr.bf16.mxu0 0
        %1426 = vmatpush2.bf16.xpose.msra.mxu0 0
        %1427 = vmatprep.mubr.bf16.mxu0 0
        %1428 = vmatmul.mubr.bf16.gmra.mxu0 %v1390
        %v1429 = vpop.f32.mrf.mxu0
        %v1430 = vadd.f32 %v1384, %v1429
        %v1431 = vpop.f32.mrf.mxu0
        %v1432 = vpop.f32.mrf.mxu0
        %v1433 = vpop.f32.mrf.mxu0
        %1434 = vdwg.mxu0
        %v1435 = vsel %vm1388, %v1430, -inf
        %1436 = vmax.xlane.f32.xlu0 %v1435
        %v1437 = vpop.xlane.xlu0 %1436
        %v1438 = vsub.f32 %v1430, %v1437
        %v1439 = vmul.f32 %v1438, 1.442695
        %v1440 = vpow.pop %v1439
        %v1441 = vsel %vm1388, %v1440, 0.0
        %1442 = vadd.xlane.f32.xlu0 %v1441
        %v1443 = vpop.xlane.xlu0 %1442
        %v1444 = vrcp.pop %v1443
        %v1445 = vmul.f32 %v1440, %v1444
        %v1446 = vpack.c.bf16 %v1445, %v1445
        %v1448 = vsel %vm1388, %v1446, 0
        %vm1450 = vcmask 1043456
        %v1452 = vsel %vm1450, %v1387, 0
        %1454 = vmatprep.subr.bf16.mxu0 0
        %1455 = vmatpush1.bf16.msra.mxu0 0
        %1456 = vmatprep.subr.bf16.mxu0 0
        %1457 = vmatpush1.bf16.msra.mxu0 0
        %1458 = vmatprep.subr.bf16.mxu0 0
        %1459 = vmatpush1.bf16.msra.mxu0 0
        %1460 = vmatprep.subr.bf16.mxu0 0
        %1461 = vmatpush1.bf16.msra.mxu0 0
        %1462 = vmatprep.subr.bf16.mxu0 0
        %1463 = vmatpush1.bf16.msra.mxu0 0
        %1464 = vmatprep.subr.bf16.mxu0 0
        %1465 = vmatpush1.bf16.msra.mxu0 0
        %1466 = vmatprep.subr.bf16.mxu0 0
        %1467 = vmatpush1.bf16.msra.mxu0 0
        %1468 = vmatprep.subr.bf16.mxu0 0
        %1469 = vmatpush1.bf16.msra.mxu0 %v1452
        %1470 = vmatprep.subr.bf16.mxu0 0
        %1471 = vmatpush2.bf16.msra.mxu0 0
        %1472 = vmatprep.subr.bf16.mxu0 0
        %1473 = vmatpush2.bf16.msra.mxu0 0
        %1474 = vmatprep.subr.bf16.mxu0 0
        %1475 = vmatpush2.bf16.msra.mxu0 0
        %1476 = vmatprep.subr.bf16.mxu0 0
        %1477 = vmatpush2.bf16.msra.mxu0 0
        %1478 = vmatprep.subr.bf16.mxu0 0
        %1479 = vmatpush2.bf16.msra.mxu0 0
        %1480 = vmatprep.subr.bf16.mxu0 0
        %1481 = vmatpush2.bf16.msra.mxu0 0
        %1482 = vmatprep.subr.bf16.mxu0 0
        %1483 = vmatpush2.bf16.msra.mxu0 0
        %1484 = vmatprep.subr.bf16.mxu0 0
        %1485 = vmatpush2.bf16.msra.mxu0 0
        %1486 = vmatprep.mubr.bf16.mxu0 0
        %1487 = vmatmul.mubr.bf16.gmra.mxu0 %v1448
        %v1488 = vpop.f32.mrf.mxu0
        %v1489 = vadd.f32 0.0, %v1488
        %v1490 = vpop.f32.mrf.mxu0
        %v1491 = vpop.f32.mrf.mxu0
        %v1492 = vpop.f32.mrf.mxu0
        %1493 = vdwg.mxu0
        %v1494 = vpack.c.bf16 %v1489, %v1489
        %1496 = vrot.lane.b32.xlu0 %v1385, 120
        %v1497 = vpop.permute.xlu0 %1496
        %1499 = vrot.lane.b32.xlu0 %v1386, 120
        %v1500 = vpop.permute.xlu0 %1499
        %v1502 = vsel %vm1388, %v1497, 0
        %v1505 = vsel %vm1388, %v1500, 0
        %1507 = vmatprep.subr.bf16.mxu0 0
        %1508 = vmatpush1.bf16.xpose.msra.mxu0 0
        %1509 = vmatprep.subr.bf16.mxu0 0
        %1510 = vmatpush1.bf16.xpose.msra.mxu0 0
        %1511 = vmatprep.subr.bf16.mxu0 0
        %1512 = vmatpush1.bf16.xpose.msra.mxu0 0
        %1513 = vmatprep.subr.bf16.mxu0 0
        %1514 = vmatpush1.bf16.xpose.msra.mxu0 0
        %1515 = vmatprep.subr.bf16.mxu0 0
        %1516 = vmatpush1.bf16.xpose.msra.mxu0 0
        %1517 = vmatprep.subr.bf16.mxu0 0
        %1518 = vmatpush1.bf16.xpose.msra.mxu0 0
        %1519 = vmatprep.subr.bf16.mxu0 0
        %1520 = vmatpush1.bf16.xpose.msra.mxu0 0
        %1521 = vmatprep.subr.bf16.mxu0 0
        %1522 = vmatpush1.bf16.xpose.msra.mxu0 %v1505
        %1523 = vmatprep.subr.bf16.mxu0 0
        %1524 = vmatpush2.bf16.xpose.msra.mxu0 0
        %1525 = vmatprep.subr.bf16.mxu0 0
        %1526 = vmatpush2.bf16.xpose.msra.mxu0 0
        %1527 = vmatprep.subr.bf16.mxu0 0
        %1528 = vmatpush2.bf16.xpose.msra.mxu0 0
        %1529 = vmatprep.subr.bf16.mxu0 0
        %1530 = vmatpush2.bf16.xpose.msra.mxu0 0
        %1531 = vmatprep.subr.bf16.mxu0 0
        %1532 = vmatpush2.bf16.xpose.msra.mxu0 0
        %1533 = vmatprep.subr.bf16.mxu0 0
        %1534 = vmatpush2.bf16.xpose.msra.mxu0 0
        %1535 = vmatprep.subr.bf16.mxu0 0
        %1536 = vmatpush2.bf16.xpose.msra.mxu0 0
        %1537 = vmatprep.subr.bf16.mxu0 0
        %1538 = vmatpush2.bf16.xpose.msra.mxu0 0
        %1539 = vmatprep.mubr.bf16.mxu0 0
        %1540 = vmatmul.mubr.bf16.gmra.mxu0 %v1502
        %v1541 = vpop.f32.mrf.mxu0
        %v1542 = vadd.f32 %v1384, %v1541
        %v1543 = vpop.f32.mrf.mxu0
        %v1544 = vpop.f32.mrf.mxu0
        %v1545 = vpop.f32.mrf.mxu0
        %1546 = vdwg.mxu0
        %v1547 = vsel %vm1388, %v1542, -inf
        %1548 = vmax.xlane.f32.xlu0 %v1547
        %v1549 = vpop.xlane.xlu0 %1548
        %v1550 = vsub.f32 %v1542, %v1549
        %v1551 = vmul.f32 %v1550, 1.442695
        %v1552 = vpow.pop %v1551
        %v1553 = vsel %vm1388, %v1552, 0.0
        %1554 = vadd.xlane.f32.xlu0 %v1553
        %v1555 = vpop.xlane.xlu0 %1554
        %v1556 = vrcp.pop %v1555
        %v1557 = vmul.f32 %v1552, %v1556
        %v1558 = vpack.c.bf16 %v1557, %v1557
        %1560 = vrot.lane.b32.xlu0 %v1387, 120
        %v1561 = vpop.permute.xlu0 %1560
        %v1563 = vsel %vm1388, %v1558, 0
        %v1566 = vsel %vm1450, %v1561, 0
        %1568 = vmatprep.subr.bf16.mxu0 0
        %1569 = vmatpush1.bf16.msra.mxu0 0
        %1570 = vmatprep.subr.bf16.mxu0 0
        %1571 = vmatpush1.bf16.msra.mxu0 0
        %1572 = vmatprep.subr.bf16.mxu0 0
        %1573 = vmatpush1.bf16.msra.mxu0 0
        %1574 = vmatprep.subr.bf16.mxu0 0
        %1575 = vmatpush1.bf16.msra.mxu0 0
        %1576 = vmatprep.subr.bf16.mxu0 0
        %1577 = vmatpush1.bf16.msra.mxu0 0
        %1578 = vmatprep.subr.bf16.mxu0 0
        %1579 = vmatpush1.bf16.msra.mxu0 0
        %1580 = vmatprep.subr.bf16.mxu0 0
        %1581 = vmatpush1.bf16.msra.mxu0 0
        %1582 = vmatprep.subr.bf16.mxu0 0
        %1583 = vmatpush1.bf16.msra.mxu0 %v1566
        %1584 = vmatprep.subr.bf16.mxu0 0
        %1585 = vmatpush2.bf16.msra.mxu0 0
        %1586 = vmatprep.subr.bf16.mxu0 0
        %1587 = vmatpush2.bf16.msra.mxu0 0
        %1588 = vmatprep.subr.bf16.mxu0 0
        %1589 = vmatpush2.bf16.msra.mxu0 0
        %1590 = vmatprep.subr.bf16.mxu0 0
        %1591 = vmatpush2.bf16.msra.mxu0 0
        %1592 = vmatprep.subr.bf16.mxu0 0
        %1593 = vmatpush2.bf16.msra.mxu0 0
        %1594 = vmatprep.subr.bf16.mxu0 0
        %1595 = vmatpush2.bf16.msra.mxu0 0
        %1596 = vmatprep.subr.bf16.mxu0 0
        %1597 = vmatpush2.bf16.msra.mxu0 0
        %1598 = vmatprep.subr.bf16.mxu0 0
        %1599 = vmatpush2.bf16.msra.mxu0 0
        %1600 = vmatprep.mubr.bf16.mxu0 0
        %1601 = vmatmul.mubr.bf16.gmra.mxu0 %v1563
        %v1602 = vpop.f32.mrf.mxu0
        %v1603 = vadd.f32 0.0, %v1602
        %v1604 = vpop.f32.mrf.mxu0
        %v1605 = vpop.f32.mrf.mxu0
        %v1606 = vpop.f32.mrf.mxu0
        %1607 = vdwg.mxu0
        %v1608 = vpack.c.bf16 %v1603, %v1603
        %v1610 = vsel %vm1388, %v1608, 0
        %v1613 = vsel %vm1450, %v1192, 0
        %1615 = vmatprep.subr.bf16.mxu0 0
        %1616 = vmatpush1.bf16.msra.mxu0 0
        %1617 = vmatprep.subr.bf16.mxu0 0
        %1618 = vmatpush1.bf16.msra.mxu0 0
        %1619 = vmatprep.subr.bf16.mxu0 0
        %1620 = vmatpush1.bf16.msra.mxu0 0
        %1621 = vmatprep.subr.bf16.mxu0 0
        %1622 = vmatpush1.bf16.msra.mxu0 0
        %1623 = vmatprep.subr.bf16.mxu0 0
        %1624 = vmatpush1.bf16.msra.mxu0 0
        %1625 = vmatprep.subr.bf16.mxu0 0
        %1626 = vmatpush1.bf16.msra.mxu0 0
        %1627 = vmatprep.subr.bf16.mxu0 0
        %1628 = vmatpush1.bf16.msra.mxu0 0
        %1629 = vmatprep.subr.bf16.mxu0 0
        %1630 = vmatpush1.bf16.msra.mxu0 %v1613
        %1631 = vmatprep.subr.bf16.mxu0 0
        %1632 = vmatpush2.bf16.msra.mxu0 0
        %1633 = vmatprep.subr.bf16.mxu0 0
        %1634 = vmatpush2.bf16.msra.mxu0 0
        %1635 = vmatprep.subr.bf16.mxu0 0
        %1636 = vmatpush2.bf16.msra.mxu0 0
        %1637 = vmatprep.subr.bf16.mxu0 0
        %1638 = vmatpush2.bf16.msra.mxu0 0
        %1639 = vmatprep.subr.bf16.mxu0 0
        %1640 = vmatpush2.bf16.msra.mxu0 0
        %1641 = vmatprep.subr.bf16.mxu0 0
        %1642 = vmatpush2.bf16.msra.mxu0 0
        %1643 = vmatprep.subr.bf16.mxu0 0
        %1644 = vmatpush2.bf16.msra.mxu0 0
        %1645 = vmatprep.subr.bf16.mxu0 0
        %1646 = vmatpush2.bf16.msra.mxu0 0
        %1647 = vmatprep.mubr.bf16.mxu0 0
        %1648 = vmatmul.mubr.bf16.gmra.mxu0 %v1610
        %v1649 = vpop.f32.mrf.mxu0
        %v1650 = vadd.f32 0.0, %v1649
        %v1651 = vpop.f32.mrf.mxu0
        %v1652 = vpop.f32.mrf.mxu0
        %v1653 = vpop.f32.mrf.mxu0
        %1654 = vdwg.mxu0
        %v1656 = vsel %vm1388, %v1494, 0
        %v1659 = vsel %vm1450, %v1191, 0
        %1661 = vmatprep.subr.bf16.mxu0 0
        %1662 = vmatpush1.bf16.msra.mxu0 0
        %1663 = vmatprep.subr.bf16.mxu0 0
        %1664 = vmatpush1.bf16.msra.mxu0 0
        %1665 = vmatprep.subr.bf16.mxu0 0
        %1666 = vmatpush1.bf16.msra.mxu0 0
        %1667 = vmatprep.subr.bf16.mxu0 0
        %1668 = vmatpush1.bf16.msra.mxu0 0
        %1669 = vmatprep.subr.bf16.mxu0 0
        %1670 = vmatpush1.bf16.msra.mxu0 0
        %1671 = vmatprep.subr.bf16.mxu0 0
        %1672 = vmatpush1.bf16.msra.mxu0 0
        %1673 = vmatprep.subr.bf16.mxu0 0
        %1674 = vmatpush1.bf16.msra.mxu0 0
        %1675 = vmatprep.subr.bf16.mxu0 0
        %1676 = vmatpush1.bf16.msra.mxu0 %v1659
        %1677 = vmatprep.subr.bf16.mxu0 0
        %1678 = vmatpush2.bf16.msra.mxu0 0
        %1679 = vmatprep.subr.bf16.mxu0 0
        %1680 = vmatpush2.bf16.msra.mxu0 0
        %1681 = vmatprep.subr.bf16.mxu0 0
        %1682 = vmatpush2.bf16.msra.mxu0 0
        %1683 = vmatprep.subr.bf16.mxu0 0
        %1684 = vmatpush2.bf16.msra.mxu0 0
        %1685 = vmatprep.subr.bf16.mxu0 0
        %1686 = vmatpush2.bf16.msra.mxu0 0
        %1687 = vmatprep.subr.bf16.mxu0 0
        %1688 = vmatpush2.bf16.msra.mxu0 0
        %1689 = vmatprep.subr.bf16.mxu0 0
        %1690 = vmatpush2.bf16.msra.mxu0 0
        %1691 = vmatprep.subr.bf16.mxu0 0
        %1692 = vmatpush2.bf16.msra.mxu0 0
        %1693 = vmatprep.mubr.bf16.mxu0 0
        %1694 = vmatmul.mubr.bf16.gmra.mxu0 %v1656
        %v1695 = vpop.f32.mrf.mxu0
        %v1696 = vadd.f32 %v1650, %v1695
        %v1697 = vpop.f32.mrf.mxu0
        %v1698 = vpop.f32.mrf.mxu0
        %v1699 = vpop.f32.mrf.mxu0
        %1700 = vdwg.mxu0
        %1701 = vrot.lane.b32.xlu0 %v1385, 112
        %v1702 = vpop.permute.xlu0 %1701
        %1703 = vrot.lane.b32.xlu0 %v1386, 112
        %v1704 = vpop.permute.xlu0 %1703
        %v1706 = vsel %vm1388, %v1702, 0
        %v1709 = vsel %vm1388, %v1704, 0
        %1711 = vmatprep.subr.bf16.mxu0 0
        %1712 = vmatpush1.bf16.xpose.msra.mxu0 0
        %1713 = vmatprep.subr.bf16.mxu0 0
        %1714 = vmatpush1.bf16.xpose.msra.mxu0 0
        %1715 = vmatprep.subr.bf16.mxu0 0
        %1716 = vmatpush1.bf16.xpose.msra.mxu0 0
        %1717 = vmatprep.subr.bf16.mxu0 0
        %1718 = vmatpush1.bf16.xpose.msra.mxu0 0
        %1719 = vmatprep.subr.bf16.mxu0 0
        %1720 = vmatpush1.bf16.xpose.msra.mxu0 0
        %1721 = vmatprep.subr.bf16.mxu0 0
        %1722 = vmatpush1.bf16.xpose.msra.mxu0 0
        %1723 = vmatprep.subr.bf16.mxu0 0
        %1724 = vmatpush1.bf16.xpose.msra.mxu0 0
        %1725 = vmatprep.subr.bf16.mxu0 0
        %1726 = vmatpush1.bf16.xpose.msra.mxu0 %v1709
        %1727 = vmatprep.subr.bf16.mxu0 0
        %1728 = vmatpush2.bf16.xpose.msra.mxu0 0
        %1729 = vmatprep.subr.bf16.mxu0 0
        %1730 = vmatpush2.bf16.xpose.msra.mxu0 0
        %1731 = vmatprep.subr.bf16.mxu0 0
        %1732 = vmatpush2.bf16.xpose.msra.mxu0 0
        %1733 = vmatprep.subr.bf16.mxu0 0
        %1734 = vmatpush2.bf16.xpose.msra.mxu0 0
        %1735 = vmatprep.subr.bf16.mxu0 0
        %1736 = vmatpush2.bf16.xpose.msra.mxu0 0
        %1737 = vmatprep.subr.bf16.mxu0 0
        %1738 = vmatpush2.bf16.xpose.msra.mxu0 0
        %1739 = vmatprep.subr.bf16.mxu0 0
        %1740 = vmatpush2.bf16.xpose.msra.mxu0 0
        %1741 = vmatprep.subr.bf16.mxu0 0
        %1742 = vmatpush2.bf16.xpose.msra.mxu0 0
        %1743 = vmatprep.mubr.bf16.mxu0 0
        %1744 = vmatmul.mubr.bf16.gmra.mxu0 %v1706
        %v1745 = vpop.f32.mrf.mxu0
        %v1746 = vadd.f32 %v1384, %v1745
        %v1747 = vpop.f32.mrf.mxu0
        %v1748 = vpop.f32.mrf.mxu0
        %v1749 = vpop.f32.mrf.mxu0
        %1750 = vdwg.mxu0
        %v1751 = vsel %vm1388, %v1746, -inf
        %1752 = vmax.xlane.f32.xlu0 %v1751
        %v1753 = vpop.xlane.xlu0 %1752
        %v1754 = vsub.f32 %v1746, %v1753
        %v1755 = vmul.f32 %v1754, 1.442695
        %v1756 = vpow.pop %v1755
        %v1757 = vsel %vm1388, %v1756, 0.0
        %1758 = vadd.xlane.f32.xlu0 %v1757
        %v1759 = vpop.xlane.xlu0 %1758
        %v1760 = vrcp.pop %v1759
        %v1761 = vmul.f32 %v1756, %v1760
        %v1762 = vpack.c.bf16 %v1761, %v1761
        %1763 = vrot.lane.b32.xlu0 %v1387, 112
        %v1764 = vpop.permute.xlu0 %1763
        %v1766 = vsel %vm1388, %v1762, 0
        %v1769 = vsel %vm1450, %v1764, 0
        %1771 = vmatprep.subr.bf16.mxu0 0
        %1772 = vmatpush1.bf16.msra.mxu0 0
        %1773 = vmatprep.subr.bf16.mxu0 0
        %1774 = vmatpush1.bf16.msra.mxu0 0
        %1775 = vmatprep.subr.bf16.mxu0 0
        %1776 = vmatpush1.bf16.msra.mxu0 0
        %1777 = vmatprep.subr.bf16.mxu0 0
        %1778 = vmatpush1.bf16.msra.mxu0 0
        %1779 = vmatprep.subr.bf16.mxu0 0
        %1780 = vmatpush1.bf16.msra.mxu0 0
        %1781 = vmatprep.subr.bf16.mxu0 0
        %1782 = vmatpush1.bf16.msra.mxu0 0
        %1783 = vmatprep.subr.bf16.mxu0 0
        %1784 = vmatpush1.bf16.msra.mxu0 0
        %1785 = vmatprep.subr.bf16.mxu0 0
        %1786 = vmatpush1.bf16.msra.mxu0 %v1769
        %1787 = vmatprep.subr.bf16.mxu0 0
        %1788 = vmatpush2.bf16.msra.mxu0 0
        %1789 = vmatprep.subr.bf16.mxu0 0
        %1790 = vmatpush2.bf16.msra.mxu0 0
        %1791 = vmatprep.subr.bf16.mxu0 0
        %1792 = vmatpush2.bf16.msra.mxu0 0
        %1793 = vmatprep.subr.bf16.mxu0 0
        %1794 = vmatpush2.bf16.msra.mxu0 0
        %1795 = vmatprep.subr.bf16.mxu0 0
        %1796 = vmatpush2.bf16.msra.mxu0 0
        %1797 = vmatprep.subr.bf16.mxu0 0
        %1798 = vmatpush2.bf16.msra.mxu0 0
        %1799 = vmatprep.subr.bf16.mxu0 0
        %1800 = vmatpush2.bf16.msra.mxu0 0
        %1801 = vmatprep.subr.bf16.mxu0 0
        %1802 = vmatpush2.bf16.msra.mxu0 0
        %1803 = vmatprep.mubr.bf16.mxu0 0
        %1804 = vmatmul.mubr.bf16.gmra.mxu0 %v1766
        %v1805 = vpop.f32.mrf.mxu0
        %v1806 = vadd.f32 0.0, %v1805
        %v1807 = vpop.f32.mrf.mxu0
        %v1808 = vpop.f32.mrf.mxu0
        %v1809 = vpop.f32.mrf.mxu0
        %1810 = vdwg.mxu0
        %v1811 = vpack.c.bf16 %v1806, %v1806
        %v1813 = vsel %vm1388, %v1811, 0
        %v1816 = vsel %vm1450, %v1193, 0
        %1818 = vmatprep.subr.bf16.mxu0 0
        %1819 = vmatpush1.bf16.msra.mxu0 0
        %1820 = vmatprep.subr.bf16.mxu0 0
        %1821 = vmatpush1.bf16.msra.mxu0 0
        %1822 = vmatprep.subr.bf16.mxu0 0
        %1823 = vmatpush1.bf16.msra.mxu0 0
        %1824 = vmatprep.subr.bf16.mxu0 0
        %1825 = vmatpush1.bf16.msra.mxu0 0
        %1826 = vmatprep.subr.bf16.mxu0 0
        %1827 = vmatpush1.bf16.msra.mxu0 0
        %1828 = vmatprep.subr.bf16.mxu0 0
        %1829 = vmatpush1.bf16.msra.mxu0 0
        %1830 = vmatprep.subr.bf16.mxu0 0
        %1831 = vmatpush1.bf16.msra.mxu0 0
        %1832 = vmatprep.subr.bf16.mxu0 0
        %1833 = vmatpush1.bf16.msra.mxu0 %v1816
        %1834 = vmatprep.subr.bf16.mxu0 0
        %1835 = vmatpush2.bf16.msra.mxu0 0
        %1836 = vmatprep.subr.bf16.mxu0 0
        %1837 = vmatpush2.bf16.msra.mxu0 0
        %1838 = vmatprep.subr.bf16.mxu0 0
        %1839 = vmatpush2.bf16.msra.mxu0 0
        %1840 = vmatprep.subr.bf16.mxu0 0
        %1841 = vmatpush2.bf16.msra.mxu0 0
        %1842 = vmatprep.subr.bf16.mxu0 0
        %1843 = vmatpush2.bf16.msra.mxu0 0
        %1844 = vmatprep.subr.bf16.mxu0 0
        %1845 = vmatpush2.bf16.msra.mxu0 0
        %1846 = vmatprep.subr.bf16.mxu0 0
        %1847 = vmatpush2.bf16.msra.mxu0 0
        %1848 = vmatprep.subr.bf16.mxu0 0
        %1849 = vmatpush2.bf16.msra.mxu0 0
        %1850 = vmatprep.mubr.bf16.mxu0 0
        %1851 = vmatmul.mubr.bf16.gmra.mxu0 %v1813
        %v1852 = vpop.f32.mrf.mxu0
        %v1853 = vadd.f32 0.0, %v1852
        %v1854 = vpop.f32.mrf.mxu0
        %v1855 = vpop.f32.mrf.mxu0
        %v1856 = vpop.f32.mrf.mxu0
        %1857 = vdwg.mxu0
        %v1858 = vadd.f32 %v1696, %v1853
        %1859 = vrot.lane.b32.xlu0 %v1385, 104
        %v1860 = vpop.permute.xlu0 %1859
        %1861 = vrot.lane.b32.xlu0 %v1386, 104
        %v1862 = vpop.permute.xlu0 %1861
        %v1864 = vsel %vm1388, %v1860, 0
        %v1867 = vsel %vm1388, %v1862, 0
        %1869 = vmatprep.subr.bf16.mxu0 0
        %1870 = vmatpush1.bf16.xpose.msra.mxu0 0
        %1871 = vmatprep.subr.bf16.mxu0 0
        %1872 = vmatpush1.bf16.xpose.msra.mxu0 0
        %1873 = vmatprep.subr.bf16.mxu0 0
        %1874 = vmatpush1.bf16.xpose.msra.mxu0 0
        %1875 = vmatprep.subr.bf16.mxu0 0
        %1876 = vmatpush1.bf16.xpose.msra.mxu0 0
        %1877 = vmatprep.subr.bf16.mxu0 0
        %1878 = vmatpush1.bf16.xpose.msra.mxu0 0
        %1879 = vmatprep.subr.bf16.mxu0 0
        %1880 = vmatpush1.bf16.xpose.msra.mxu0 0
        %1881 = vmatprep.subr.bf16.mxu0 0
        %1882 = vmatpush1.bf16.xpose.msra.mxu0 0
        %1883 = vmatprep.subr.bf16.mxu0 0
        %1884 = vmatpush1.bf16.xpose.msra.mxu0 %v1867
        %1885 = vmatprep.subr.bf16.mxu0 0
        %1886 = vmatpush2.bf16.xpose.msra.mxu0 0
        %1887 = vmatprep.subr.bf16.mxu0 0
        %1888 = vmatpush2.bf16.xpose.msra.mxu0 0
        %1889 = vmatprep.subr.bf16.mxu0 0
        %1890 = vmatpush2.bf16.xpose.msra.mxu0 0
        %1891 = vmatprep.subr.bf16.mxu0 0
        %1892 = vmatpush2.bf16.xpose.msra.mxu0 0
        %1893 = vmatprep.subr.bf16.mxu0 0
        %1894 = vmatpush2.bf16.xpose.msra.mxu0 0
        %1895 = vmatprep.subr.bf16.mxu0 0
        %1896 = vmatpush2.bf16.xpose.msra.mxu0 0
        %1897 = vmatprep.subr.bf16.mxu0 0
        %1898 = vmatpush2.bf16.xpose.msra.mxu0 0
        %1899 = vmatprep.subr.bf16.mxu0 0
        %1900 = vmatpush2.bf16.xpose.msra.mxu0 0
        %1901 = vmatprep.mubr.bf16.mxu0 0
        %1902 = vmatmul.mubr.bf16.gmra.mxu0 %v1864
        %v1903 = vpop.f32.mrf.mxu0
        %v1904 = vadd.f32 %v1384, %v1903
        %v1905 = vpop.f32.mrf.mxu0
        %v1906 = vpop.f32.mrf.mxu0
        %v1907 = vpop.f32.mrf.mxu0
        %1908 = vdwg.mxu0
        %v1909 = vsel %vm1388, %v1904, -inf
        %1910 = vmax.xlane.f32.xlu0 %v1909
        %v1911 = vpop.xlane.xlu0 %1910
        %v1912 = vsub.f32 %v1904, %v1911
        %v1913 = vmul.f32 %v1912, 1.442695
        %v1914 = vpow.pop %v1913
        %v1915 = vsel %vm1388, %v1914, 0.0
        %1916 = vadd.xlane.f32.xlu0 %v1915
        %v1917 = vpop.xlane.xlu0 %1916
        %v1918 = vrcp.pop %v1917
        %v1919 = vmul.f32 %v1914, %v1918
        %v1920 = vpack.c.bf16 %v1919, %v1919
        %1921 = vrot.lane.b32.xlu0 %v1387, 104
        %v1922 = vpop.permute.xlu0 %1921
        %v1924 = vsel %vm1388, %v1920, 0
        %v1927 = vsel %vm1450, %v1922, 0
        %1929 = vmatprep.subr.bf16.mxu0 0
        %1930 = vmatpush1.bf16.msra.mxu0 0
        %1931 = vmatprep.subr.bf16.mxu0 0
        %1932 = vmatpush1.bf16.msra.mxu0 0
        %1933 = vmatprep.subr.bf16.mxu0 0
        %1934 = vmatpush1.bf16.msra.mxu0 0
        %1935 = vmatprep.subr.bf16.mxu0 0
        %1936 = vmatpush1.bf16.msra.mxu0 0
        %1937 = vmatprep.subr.bf16.mxu0 0
        %1938 = vmatpush1.bf16.msra.mxu0 0
        %1939 = vmatprep.subr.bf16.mxu0 0
        %1940 = vmatpush1.bf16.msra.mxu0 0
        %1941 = vmatprep.subr.bf16.mxu0 0
        %1942 = vmatpush1.bf16.msra.mxu0 0
        %1943 = vmatprep.subr.bf16.mxu0 0
        %1944 = vmatpush1.bf16.msra.mxu0 %v1927
        %1945 = vmatprep.subr.bf16.mxu0 0
        %1946 = vmatpush2.bf16.msra.mxu0 0
        %1947 = vmatprep.subr.bf16.mxu0 0
        %1948 = vmatpush2.bf16.msra.mxu0 0
        %1949 = vmatprep.subr.bf16.mxu0 0
        %1950 = vmatpush2.bf16.msra.mxu0 0
        %1951 = vmatprep.subr.bf16.mxu0 0
        %1952 = vmatpush2.bf16.msra.mxu0 0
        %1953 = vmatprep.subr.bf16.mxu0 0
        %1954 = vmatpush2.bf16.msra.mxu0 0
        %1955 = vmatprep.subr.bf16.mxu0 0
        %1956 = vmatpush2.bf16.msra.mxu0 0
        %1957 = vmatprep.subr.bf16.mxu0 0
        %1958 = vmatpush2.bf16.msra.mxu0 0
        %1959 = vmatprep.subr.bf16.mxu0 0
        %1960 = vmatpush2.bf16.msra.mxu0 0
        %1961 = vmatprep.mubr.bf16.mxu0 0
        %1962 = vmatmul.mubr.bf16.gmra.mxu0 %v1924
        %v1963 = vpop.f32.mrf.mxu0
        %v1964 = vadd.f32 0.0, %v1963
        %v1965 = vpop.f32.mrf.mxu0
        %v1966 = vpop.f32.mrf.mxu0
        %v1967 = vpop.f32.mrf.mxu0
        %1968 = vdwg.mxu0
        %v1969 = vpack.c.bf16 %v1964, %v1964
        %v1971 = vsel %vm1388, %v1969, 0
        %v1974 = vsel %vm1450, %v1194, 0
        %1976 = vmatprep.subr.bf16.mxu0 0
        %1977 = vmatpush1.bf16.msra.mxu0 0
        %1978 = vmatprep.subr.bf16.mxu0 0
        %1979 = vmatpush1.bf16.msra.mxu0 0
        %1980 = vmatprep.subr.bf16.mxu0 0
        %1981 = vmatpush1.bf16.msra.mxu0 0
        %1982 = vmatprep.subr.bf16.mxu0 0
        %1983 = vmatpush1.bf16.msra.mxu0 0
        %1984 = vmatprep.subr.bf16.mxu0 0
        %1985 = vmatpush1.bf16.msra.mxu0 0
        %1986 = vmatprep.subr.bf16.mxu0 0
        %1987 = vmatpush1.bf16.msra.mxu0 0
        %1988 = vmatprep.subr.bf16.mxu0 0
        %1989 = vmatpush1.bf16.msra.mxu0 0
        %1990 = vmatprep.subr.bf16.mxu0 0
        %1991 = vmatpush1.bf16.msra.mxu0 %v1974
        %1992 = vmatprep.subr.bf16.mxu0 0
        %1993 = vmatpush2.bf16.msra.mxu0 0
        %1994 = vmatprep.subr.bf16.mxu0 0
        %1995 = vmatpush2.bf16.msra.mxu0 0
        %1996 = vmatprep.subr.bf16.mxu0 0
        %1997 = vmatpush2.bf16.msra.mxu0 0
        %1998 = vmatprep.subr.bf16.mxu0 0
        %1999 = vmatpush2.bf16.msra.mxu0 0
        %2000 = vmatprep.subr.bf16.mxu0 0
        %2001 = vmatpush2.bf16.msra.mxu0 0
        %2002 = vmatprep.subr.bf16.mxu0 0
        %2003 = vmatpush2.bf16.msra.mxu0 0
        %2004 = vmatprep.subr.bf16.mxu0 0
        %2005 = vmatpush2.bf16.msra.mxu0 0
        %2006 = vmatprep.subr.bf16.mxu0 0
        %2007 = vmatpush2.bf16.msra.mxu0 0
        %2008 = vmatprep.mubr.bf16.mxu0 0
        %2009 = vmatmul.mubr.bf16.gmra.mxu0 %v1971
        %v2010 = vpop.f32.mrf.mxu0
        %v2011 = vadd.f32 0.0, %v2010
        %v2012 = vpop.f32.mrf.mxu0
        %v2013 = vpop.f32.mrf.mxu0
        %v2014 = vpop.f32.mrf.mxu0
        %2015 = vdwg.mxu0
        %v2016 = vadd.f32 %v1858, %v2011
        %s2017 = scalar_lea.vmem %s1003, 8 [#allocation5]
        %v2018 = vld [vmem:[%s2017] sm:$0xff]
        %vm2019 = vcmp.gt.f32.partialorder %v2018, 0.0
        %v2020 = vsel %vm2019, 0.0, -1e+09
        %v2021 = vpack.c.bf16 %v1263, %v1263
        %v2022 = vpack.c.bf16 %v1320, %v1320
        %v2023 = vpack.c.bf16 %v1379, %v1379
        %v2025 = vsel %vm1388, %v2021, 0
        %v2028 = vsel %vm1388, %v2022, 0
        %2030 = vmatprep.subr.bf16.mxu0 0
        %2031 = vmatpush1.bf16.xpose.msra.mxu0 0
        %2032 = vmatprep.subr.bf16.mxu0 0
        %2033 = vmatpush1.bf16.xpose.msra.mxu0 0
        %2034 = vmatprep.subr.bf16.mxu0 0
        %2035 = vmatpush1.bf16.xpose.msra.mxu0 0
        %2036 = vmatprep.subr.bf16.mxu0 0
        %2037 = vmatpush1.bf16.xpose.msra.mxu0 0
        %2038 = vmatprep.subr.bf16.mxu0 0
        %2039 = vmatpush1.bf16.xpose.msra.mxu0 0
        %2040 = vmatprep.subr.bf16.mxu0 0
        %2041 = vmatpush1.bf16.xpose.msra.mxu0 0
        %2042 = vmatprep.subr.bf16.mxu0 0
        %2043 = vmatpush1.bf16.xpose.msra.mxu0 0
        %2044 = vmatprep.subr.bf16.mxu0 0
        %2045 = vmatpush1.bf16.xpose.msra.mxu0 %v2028
        %2046 = vmatprep.subr.bf16.mxu0 0
        %2047 = vmatpush2.bf16.xpose.msra.mxu0 0
        %2048 = vmatprep.subr.bf16.mxu0 0
        %2049 = vmatpush2.bf16.xpose.msra.mxu0 0
        %2050 = vmatprep.subr.bf16.mxu0 0
        %2051 = vmatpush2.bf16.xpose.msra.mxu0 0
        %2052 = vmatprep.subr.bf16.mxu0 0
        %2053 = vmatpush2.bf16.xpose.msra.mxu0 0
        %2054 = vmatprep.subr.bf16.mxu0 0
        %2055 = vmatpush2.bf16.xpose.msra.mxu0 0
        %2056 = vmatprep.subr.bf16.mxu0 0
        %2057 = vmatpush2.bf16.xpose.msra.mxu0 0
        %2058 = vmatprep.subr.bf16.mxu0 0
        %2059 = vmatpush2.bf16.xpose.msra.mxu0 0
        %2060 = vmatprep.subr.bf16.mxu0 0
        %2061 = vmatpush2.bf16.xpose.msra.mxu0 0
        %2062 = vmatprep.mubr.bf16.mxu0 0
        %2063 = vmatmul.mubr.bf16.gmra.mxu0 %v2025
        %v2064 = vpop.f32.mrf.mxu0
        %v2065 = vadd.f32 %v2020, %v2064
        %v2066 = vpop.f32.mrf.mxu0
        %v2067 = vpop.f32.mrf.mxu0
        %v2068 = vpop.f32.mrf.mxu0
        %2069 = vdwg.mxu0
        %v2070 = vsel %vm1388, %v2065, -inf
        %2071 = vmax.xlane.f32.xlu0 %v2070
        %v2072 = vpop.xlane.xlu0 %2071
        %v2073 = vsub.f32 %v2065, %v2072
        %v2074 = vmul.f32 %v2073, 1.442695
        %v2075 = vpow.pop %v2074
        %v2076 = vsel %vm1388, %v2075, 0.0
        %2077 = vadd.xlane.f32.xlu0 %v2076
        %v2078 = vpop.xlane.xlu0 %2077
        %v2079 = vrcp.pop %v2078
        %v2080 = vmul.f32 %v2075, %v2079
        %v2081 = vpack.c.bf16 %v2080, %v2080
        %v2083 = vsel %vm1388, %v2081, 0
        %v2086 = vsel %vm1450, %v2023, 0
        %2088 = vmatprep.subr.bf16.mxu0 0
        %2089 = vmatpush1.bf16.msra.mxu0 0
        %2090 = vmatprep.subr.bf16.mxu0 0
        %2091 = vmatpush1.bf16.msra.mxu0 0
        %2092 = vmatprep.subr.bf16.mxu0 0
        %2093 = vmatpush1.bf16.msra.mxu0 0
        %2094 = vmatprep.subr.bf16.mxu0 0
        %2095 = vmatpush1.bf16.msra.mxu0 0
        %2096 = vmatprep.subr.bf16.mxu0 0
        %2097 = vmatpush1.bf16.msra.mxu0 0
        %2098 = vmatprep.subr.bf16.mxu0 0
        %2099 = vmatpush1.bf16.msra.mxu0 0
        %2100 = vmatprep.subr.bf16.mxu0 0
        %2101 = vmatpush1.bf16.msra.mxu0 0
        %2102 = vmatprep.subr.bf16.mxu0 0
        %2103 = vmatpush1.bf16.msra.mxu0 %v2086
        %2104 = vmatprep.subr.bf16.mxu0 0
        %2105 = vmatpush2.bf16.msra.mxu0 0
        %2106 = vmatprep.subr.bf16.mxu0 0
        %2107 = vmatpush2.bf16.msra.mxu0 0
        %2108 = vmatprep.subr.bf16.mxu0 0
        %2109 = vmatpush2.bf16.msra.mxu0 0
        %2110 = vmatprep.subr.bf16.mxu0 0
        %2111 = vmatpush2.bf16.msra.mxu0 0
        %2112 = vmatprep.subr.bf16.mxu0 0
        %2113 = vmatpush2.bf16.msra.mxu0 0
        %2114 = vmatprep.subr.bf16.mxu0 0
        %2115 = vmatpush2.bf16.msra.mxu0 0
        %2116 = vmatprep.subr.bf16.mxu0 0
        %2117 = vmatpush2.bf16.msra.mxu0 0
        %2118 = vmatprep.subr.bf16.mxu0 0
        %2119 = vmatpush2.bf16.msra.mxu0 0
        %2120 = vmatprep.mubr.bf16.mxu0 0
        %2121 = vmatmul.mubr.bf16.gmra.mxu0 %v2083
        %v2122 = vpop.f32.mrf.mxu0
        %v2123 = vadd.f32 0.0, %v2122
        %v2124 = vpop.f32.mrf.mxu0
        %v2125 = vpop.f32.mrf.mxu0
        %v2126 = vpop.f32.mrf.mxu0
        %2127 = vdwg.mxu0
        %v2128 = vpack.c.bf16 %v2123, %v2123
        %2130 = vrot.lane.b32.xlu0 %v2021, 120
        %v2131 = vpop.permute.xlu0 %2130
        %2133 = vrot.lane.b32.xlu0 %v2022, 120
        %v2134 = vpop.permute.xlu0 %2133
        %v2136 = vsel %vm1388, %v2131, 0
        %v2139 = vsel %vm1388, %v2134, 0
        %2141 = vmatprep.subr.bf16.mxu0 0
        %2142 = vmatpush1.bf16.xpose.msra.mxu0 0
        %2143 = vmatprep.subr.bf16.mxu0 0
        %2144 = vmatpush1.bf16.xpose.msra.mxu0 0
        %2145 = vmatprep.subr.bf16.mxu0 0
        %2146 = vmatpush1.bf16.xpose.msra.mxu0 0
        %2147 = vmatprep.subr.bf16.mxu0 0
        %2148 = vmatpush1.bf16.xpose.msra.mxu0 0
        %2149 = vmatprep.subr.bf16.mxu0 0
        %2150 = vmatpush1.bf16.xpose.msra.mxu0 0
        %2151 = vmatprep.subr.bf16.mxu0 0
        %2152 = vmatpush1.bf16.xpose.msra.mxu0 0
        %2153 = vmatprep.subr.bf16.mxu0 0
        %2154 = vmatpush1.bf16.xpose.msra.mxu0 0
        %2155 = vmatprep.subr.bf16.mxu0 0
        %2156 = vmatpush1.bf16.xpose.msra.mxu0 %v2139
        %2157 = vmatprep.subr.bf16.mxu0 0
        %2158 = vmatpush2.bf16.xpose.msra.mxu0 0
        %2159 = vmatprep.subr.bf16.mxu0 0
        %2160 = vmatpush2.bf16.xpose.msra.mxu0 0
        %2161 = vmatprep.subr.bf16.mxu0 0
        %2162 = vmatpush2.bf16.xpose.msra.mxu0 0
        %2163 = vmatprep.subr.bf16.mxu0 0
        %2164 = vmatpush2.bf16.xpose.msra.mxu0 0
        %2165 = vmatprep.subr.bf16.mxu0 0
        %2166 = vmatpush2.bf16.xpose.msra.mxu0 0
        %2167 = vmatprep.subr.bf16.mxu0 0
        %2168 = vmatpush2.bf16.xpose.msra.mxu0 0
        %2169 = vmatprep.subr.bf16.mxu0 0
        %2170 = vmatpush2.bf16.xpose.msra.mxu0 0
        %2171 = vmatprep.subr.bf16.mxu0 0
        %2172 = vmatpush2.bf16.xpose.msra.mxu0 0
        %2173 = vmatprep.mubr.bf16.mxu0 0
        %2174 = vmatmul.mubr.bf16.gmra.mxu0 %v2136
        %v2175 = vpop.f32.mrf.mxu0
        %v2176 = vadd.f32 %v2020, %v2175
        %v2177 = vpop.f32.mrf.mxu0
        %v2178 = vpop.f32.mrf.mxu0
        %v2179 = vpop.f32.mrf.mxu0
        %2180 = vdwg.mxu0
        %v2181 = vsel %vm1388, %v2176, -inf
        %2182 = vmax.xlane.f32.xlu0 %v2181
        %v2183 = vpop.xlane.xlu0 %2182
        %v2184 = vsub.f32 %v2176, %v2183
        %v2185 = vmul.f32 %v2184, 1.442695
        %v2186 = vpow.pop %v2185
        %v2187 = vsel %vm1388, %v2186, 0.0
        %2188 = vadd.xlane.f32.xlu0 %v2187
        %v2189 = vpop.xlane.xlu0 %2188
        %v2190 = vrcp.pop %v2189
        %v2191 = vmul.f32 %v2186, %v2190
        %v2192 = vpack.c.bf16 %v2191, %v2191
        %2194 = vrot.lane.b32.xlu0 %v2023, 120
        %v2195 = vpop.permute.xlu0 %2194
        %v2197 = vsel %vm1388, %v2192, 0
        %v2200 = vsel %vm1450, %v2195, 0
        %2202 = vmatprep.subr.bf16.mxu0 0
        %2203 = vmatpush1.bf16.msra.mxu0 0
        %2204 = vmatprep.subr.bf16.mxu0 0
        %2205 = vmatpush1.bf16.msra.mxu0 0
        %2206 = vmatprep.subr.bf16.mxu0 0
        %2207 = vmatpush1.bf16.msra.mxu0 0
        %2208 = vmatprep.subr.bf16.mxu0 0
        %2209 = vmatpush1.bf16.msra.mxu0 0
        %2210 = vmatprep.subr.bf16.mxu0 0
        %2211 = vmatpush1.bf16.msra.mxu0 0
        %2212 = vmatprep.subr.bf16.mxu0 0
        %2213 = vmatpush1.bf16.msra.mxu0 0
        %2214 = vmatprep.subr.bf16.mxu0 0
        %2215 = vmatpush1.bf16.msra.mxu0 0
        %2216 = vmatprep.subr.bf16.mxu0 0
        %2217 = vmatpush1.bf16.msra.mxu0 %v2200
        %2218 = vmatprep.subr.bf16.mxu0 0
        %2219 = vmatpush2.bf16.msra.mxu0 0
        %2220 = vmatprep.subr.bf16.mxu0 0
        %2221 = vmatpush2.bf16.msra.mxu0 0
        %2222 = vmatprep.subr.bf16.mxu0 0
        %2223 = vmatpush2.bf16.msra.mxu0 0
        %2224 = vmatprep.subr.bf16.mxu0 0
        %2225 = vmatpush2.bf16.msra.mxu0 0
        %2226 = vmatprep.subr.bf16.mxu0 0
        %2227 = vmatpush2.bf16.msra.mxu0 0
        %2228 = vmatprep.subr.bf16.mxu0 0
        %2229 = vmatpush2.bf16.msra.mxu0 0
        %2230 = vmatprep.subr.bf16.mxu0 0
        %2231 = vmatpush2.bf16.msra.mxu0 0
        %2232 = vmatprep.subr.bf16.mxu0 0
        %2233 = vmatpush2.bf16.msra.mxu0 0
        %2234 = vmatprep.mubr.bf16.mxu0 0
        %2235 = vmatmul.mubr.bf16.gmra.mxu0 %v2197
        %v2236 = vpop.f32.mrf.mxu0
        %v2237 = vadd.f32 0.0, %v2236
        %v2238 = vpop.f32.mrf.mxu0
        %v2239 = vpop.f32.mrf.mxu0
        %v2240 = vpop.f32.mrf.mxu0
        %2241 = vdwg.mxu0
        %v2242 = vpack.c.bf16 %v2237, %v2237
        %v2244 = vsel %vm1388, %v2242, 0
        %2246 = vmatprep.subr.bf16.mxu0 0
        %2247 = vmatpush1.bf16.msra.mxu0 0
        %2248 = vmatprep.subr.bf16.mxu0 0
        %2249 = vmatpush1.bf16.msra.mxu0 0
        %2250 = vmatprep.subr.bf16.mxu0 0
        %2251 = vmatpush1.bf16.msra.mxu0 0
        %2252 = vmatprep.subr.bf16.mxu0 0
        %2253 = vmatpush1.bf16.msra.mxu0 0
        %2254 = vmatprep.subr.bf16.mxu0 0
        %2255 = vmatpush1.bf16.msra.mxu0 0
        %2256 = vmatprep.subr.bf16.mxu0 0
        %2257 = vmatpush1.bf16.msra.mxu0 0
        %2258 = vmatprep.subr.bf16.mxu0 0
        %2259 = vmatpush1.bf16.msra.mxu0 0
        %2260 = vmatprep.subr.bf16.mxu0 0
        %2261 = vmatpush1.bf16.msra.mxu0 %v1613
        %2262 = vmatprep.subr.bf16.mxu0 0
        %2263 = vmatpush2.bf16.msra.mxu0 0
        %2264 = vmatprep.subr.bf16.mxu0 0
        %2265 = vmatpush2.bf16.msra.mxu0 0
        %2266 = vmatprep.subr.bf16.mxu0 0
        %2267 = vmatpush2.bf16.msra.mxu0 0
        %2268 = vmatprep.subr.bf16.mxu0 0
        %2269 = vmatpush2.bf16.msra.mxu0 0
        %2270 = vmatprep.subr.bf16.mxu0 0
        %2271 = vmatpush2.bf16.msra.mxu0 0
        %2272 = vmatprep.subr.bf16.mxu0 0
        %2273 = vmatpush2.bf16.msra.mxu0 0
        %2274 = vmatprep.subr.bf16.mxu0 0
        %2275 = vmatpush2.bf16.msra.mxu0 0
        %2276 = vmatprep.subr.bf16.mxu0 0
        %2277 = vmatpush2.bf16.msra.mxu0 0
        %2278 = vmatprep.mubr.bf16.mxu0 0
        %2279 = vmatmul.mubr.bf16.gmra.mxu0 %v2244
        %v2280 = vpop.f32.mrf.mxu0
        %v2281 = vadd.f32 0.0, %v2280
        %v2282 = vpop.f32.mrf.mxu0
        %v2283 = vpop.f32.mrf.mxu0
        %v2284 = vpop.f32.mrf.mxu0
        %2285 = vdwg.mxu0
        %v2287 = vsel %vm1388, %v2128, 0
        %2289 = vmatprep.subr.bf16.mxu0 0
        %2290 = vmatpush1.bf16.msra.mxu0 0
        %2291 = vmatprep.subr.bf16.mxu0 0
        %2292 = vmatpush1.bf16.msra.mxu0 0
        %2293 = vmatprep.subr.bf16.mxu0 0
        %2294 = vmatpush1.bf16.msra.mxu0 0
        %2295 = vmatprep.subr.bf16.mxu0 0
        %2296 = vmatpush1.bf16.msra.mxu0 0
        %2297 = vmatprep.subr.bf16.mxu0 0
        %2298 = vmatpush1.bf16.msra.mxu0 0
        %2299 = vmatprep.subr.bf16.mxu0 0
        %2300 = vmatpush1.bf16.msra.mxu0 0
        %2301 = vmatprep.subr.bf16.mxu0 0
        %2302 = vmatpush1.bf16.msra.mxu0 0
        %2303 = vmatprep.subr.bf16.mxu0 0
        %2304 = vmatpush1.bf16.msra.mxu0 %v1659
        %2305 = vmatprep.subr.bf16.mxu0 0
        %2306 = vmatpush2.bf16.msra.mxu0 0
        %2307 = vmatprep.subr.bf16.mxu0 0
        %2308 = vmatpush2.bf16.msra.mxu0 0
        %2309 = vmatprep.subr.bf16.mxu0 0
        %2310 = vmatpush2.bf16.msra.mxu0 0
        %2311 = vmatprep.subr.bf16.mxu0 0
        %2312 = vmatpush2.bf16.msra.mxu0 0
        %2313 = vmatprep.subr.bf16.mxu0 0
        %2314 = vmatpush2.bf16.msra.mxu0 0
        %2315 = vmatprep.subr.bf16.mxu0 0
        %2316 = vmatpush2.bf16.msra.mxu0 0
        %2317 = vmatprep.subr.bf16.mxu0 0
        %2318 = vmatpush2.bf16.msra.mxu0 0
        %2319 = vmatprep.subr.bf16.mxu0 0
        %2320 = vmatpush2.bf16.msra.mxu0 0
        %2321 = vmatprep.mubr.bf16.mxu0 0
        %2322 = vmatmul.mubr.bf16.gmra.mxu0 %v2287
        %v2323 = vpop.f32.mrf.mxu0
        %v2324 = vadd.f32 %v2281, %v2323
        %v2325 = vpop.f32.mrf.mxu0
        %v2326 = vpop.f32.mrf.mxu0
        %v2327 = vpop.f32.mrf.mxu0
        %2328 = vdwg.mxu0
        %2329 = vrot.lane.b32.xlu0 %v2021, 112
        %v2330 = vpop.permute.xlu0 %2329
        %2331 = vrot.lane.b32.xlu0 %v2022, 112
        %v2332 = vpop.permute.xlu0 %2331
        %v2334 = vsel %vm1388, %v2330, 0
        %v2337 = vsel %vm1388, %v2332, 0
        %2339 = vmatprep.subr.bf16.mxu0 0
        %2340 = vmatpush1.bf16.xpose.msra.mxu0 0
        %2341 = vmatprep.subr.bf16.mxu0 0
        %2342 = vmatpush1.bf16.xpose.msra.mxu0 0
        %2343 = vmatprep.subr.bf16.mxu0 0
        %2344 = vmatpush1.bf16.xpose.msra.mxu0 0
        %2345 = vmatprep.subr.bf16.mxu0 0
        %2346 = vmatpush1.bf16.xpose.msra.mxu0 0
        %2347 = vmatprep.subr.bf16.mxu0 0
        %2348 = vmatpush1.bf16.xpose.msra.mxu0 0
        %2349 = vmatprep.subr.bf16.mxu0 0
        %2350 = vmatpush1.bf16.xpose.msra.mxu0 0
        %2351 = vmatprep.subr.bf16.mxu0 0
        %2352 = vmatpush1.bf16.xpose.msra.mxu0 0
        %2353 = vmatprep.subr.bf16.mxu0 0
        %2354 = vmatpush1.bf16.xpose.msra.mxu0 %v2337
        %2355 = vmatprep.subr.bf16.mxu0 0
        %2356 = vmatpush2.bf16.xpose.msra.mxu0 0
        %2357 = vmatprep.subr.bf16.mxu0 0
        %2358 = vmatpush2.bf16.xpose.msra.mxu0 0
        %2359 = vmatprep.subr.bf16.mxu0 0
        %2360 = vmatpush2.bf16.xpose.msra.mxu0 0
        %2361 = vmatprep.subr.bf16.mxu0 0
        %2362 = vmatpush2.bf16.xpose.msra.mxu0 0
        %2363 = vmatprep.subr.bf16.mxu0 0
        %2364 = vmatpush2.bf16.xpose.msra.mxu0 0
        %2365 = vmatprep.subr.bf16.mxu0 0
        %2366 = vmatpush2.bf16.xpose.msra.mxu0 0
        %2367 = vmatprep.subr.bf16.mxu0 0
        %2368 = vmatpush2.bf16.xpose.msra.mxu0 0
        %2369 = vmatprep.subr.bf16.mxu0 0
        %2370 = vmatpush2.bf16.xpose.msra.mxu0 0
        %2371 = vmatprep.mubr.bf16.mxu0 0
        %2372 = vmatmul.mubr.bf16.gmra.mxu0 %v2334
        %v2373 = vpop.f32.mrf.mxu0
        %v2374 = vadd.f32 %v2020, %v2373
        %v2375 = vpop.f32.mrf.mxu0
        %v2376 = vpop.f32.mrf.mxu0
        %v2377 = vpop.f32.mrf.mxu0
        %2378 = vdwg.mxu0
        %v2379 = vsel %vm1388, %v2374, -inf
        %2380 = vmax.xlane.f32.xlu0 %v2379
        %v2381 = vpop.xlane.xlu0 %2380
        %v2382 = vsub.f32 %v2374, %v2381
        %v2383 = vmul.f32 %v2382, 1.442695
        %v2384 = vpow.pop %v2383
        %v2385 = vsel %vm1388, %v2384, 0.0
        %2386 = vadd.xlane.f32.xlu0 %v2385
        %v2387 = vpop.xlane.xlu0 %2386
        %v2388 = vrcp.pop %v2387
        %v2389 = vmul.f32 %v2384, %v2388
        %v2390 = vpack.c.bf16 %v2389, %v2389
        %2391 = vrot.lane.b32.xlu0 %v2023, 112
        %v2392 = vpop.permute.xlu0 %2391
        %v2394 = vsel %vm1388, %v2390, 0
        %v2397 = vsel %vm1450, %v2392, 0
        %2399 = vmatprep.subr.bf16.mxu0 0
        %2400 = vmatpush1.bf16.msra.mxu0 0
        %2401 = vmatprep.subr.bf16.mxu0 0
        %2402 = vmatpush1.bf16.msra.mxu0 0
        %2403 = vmatprep.subr.bf16.mxu0 0
        %2404 = vmatpush1.bf16.msra.mxu0 0
        %2405 = vmatprep.subr.bf16.mxu0 0
        %2406 = vmatpush1.bf16.msra.mxu0 0
        %2407 = vmatprep.subr.bf16.mxu0 0
        %2408 = vmatpush1.bf16.msra.mxu0 0
        %2409 = vmatprep.subr.bf16.mxu0 0
        %2410 = vmatpush1.bf16.msra.mxu0 0
        %2411 = vmatprep.subr.bf16.mxu0 0
        %2412 = vmatpush1.bf16.msra.mxu0 0
        %2413 = vmatprep.subr.bf16.mxu0 0
        %2414 = vmatpush1.bf16.msra.mxu0 %v2397
        %2415 = vmatprep.subr.bf16.mxu0 0
        %2416 = vmatpush2.bf16.msra.mxu0 0
        %2417 = vmatprep.subr.bf16.mxu0 0
        %2418 = vmatpush2.bf16.msra.mxu0 0
        %2419 = vmatprep.subr.bf16.mxu0 0
        %2420 = vmatpush2.bf16.msra.mxu0 0
        %2421 = vmatprep.subr.bf16.mxu0 0
        %2422 = vmatpush2.bf16.msra.mxu0 0
        %2423 = vmatprep.subr.bf16.mxu0 0
        %2424 = vmatpush2.bf16.msra.mxu0 0
        %2425 = vmatprep.subr.bf16.mxu0 0
        %2426 = vmatpush2.bf16.msra.mxu0 0
        %2427 = vmatprep.subr.bf16.mxu0 0
        %2428 = vmatpush2.bf16.msra.mxu0 0
        %2429 = vmatprep.subr.bf16.mxu0 0
        %2430 = vmatpush2.bf16.msra.mxu0 0
        %2431 = vmatprep.mubr.bf16.mxu0 0
        %2432 = vmatmul.mubr.bf16.gmra.mxu0 %v2394
        %v2433 = vpop.f32.mrf.mxu0
        %v2434 = vadd.f32 0.0, %v2433
        %v2435 = vpop.f32.mrf.mxu0
        %v2436 = vpop.f32.mrf.mxu0
        %v2437 = vpop.f32.mrf.mxu0
        %2438 = vdwg.mxu0
        %v2439 = vpack.c.bf16 %v2434, %v2434
        %v2441 = vsel %vm1388, %v2439, 0
        %2443 = vmatprep.subr.bf16.mxu0 0
        %2444 = vmatpush1.bf16.msra.mxu0 0
        %2445 = vmatprep.subr.bf16.mxu0 0
        %2446 = vmatpush1.bf16.msra.mxu0 0
        %2447 = vmatprep.subr.bf16.mxu0 0
        %2448 = vmatpush1.bf16.msra.mxu0 0
        %2449 = vmatprep.subr.bf16.mxu0 0
        %2450 = vmatpush1.bf16.msra.mxu0 0
        %2451 = vmatprep.subr.bf16.mxu0 0
        %2452 = vmatpush1.bf16.msra.mxu0 0
        %2453 = vmatprep.subr.bf16.mxu0 0
        %2454 = vmatpush1.bf16.msra.mxu0 0
        %2455 = vmatprep.subr.bf16.mxu0 0
        %2456 = vmatpush1.bf16.msra.mxu0 0
        %2457 = vmatprep.subr.bf16.mxu0 0
        %2458 = vmatpush1.bf16.msra.mxu0 %v1816
        %2459 = vmatprep.subr.bf16.mxu0 0
        %2460 = vmatpush2.bf16.msra.mxu0 0
        %2461 = vmatprep.subr.bf16.mxu0 0
        %2462 = vmatpush2.bf16.msra.mxu0 0
        %2463 = vmatprep.subr.bf16.mxu0 0
        %2464 = vmatpush2.bf16.msra.mxu0 0
        %2465 = vmatprep.subr.bf16.mxu0 0
        %2466 = vmatpush2.bf16.msra.mxu0 0
        %2467 = vmatprep.subr.bf16.mxu0 0
        %2468 = vmatpush2.bf16.msra.mxu0 0
        %2469 = vmatprep.subr.bf16.mxu0 0
        %2470 = vmatpush2.bf16.msra.mxu0 0
        %2471 = vmatprep.subr.bf16.mxu0 0
        %2472 = vmatpush2.bf16.msra.mxu0 0
        %2473 = vmatprep.subr.bf16.mxu0 0
        %2474 = vmatpush2.bf16.msra.mxu0 0
        %2475 = vmatprep.mubr.bf16.mxu0 0
        %2476 = vmatmul.mubr.bf16.gmra.mxu0 %v2441
        %v2477 = vpop.f32.mrf.mxu0
        %v2478 = vadd.f32 0.0, %v2477
        %v2479 = vpop.f32.mrf.mxu0
        %v2480 = vpop.f32.mrf.mxu0
        %v2481 = vpop.f32.mrf.mxu0
        %2482 = vdwg.mxu0
        %v2483 = vadd.f32 %v2324, %v2478
        %2484 = vrot.lane.b32.xlu0 %v2021, 104
        %v2485 = vpop.permute.xlu0 %2484
        %2486 = vrot.lane.b32.xlu0 %v2022, 104
        %v2487 = vpop.permute.xlu0 %2486
        %v2489 = vsel %vm1388, %v2485, 0
        %v2492 = vsel %vm1388, %v2487, 0
        %2494 = vmatprep.subr.bf16.mxu0 0
        %2495 = vmatpush1.bf16.xpose.msra.mxu0 0
        %2496 = vmatprep.subr.bf16.mxu0 0
        %2497 = vmatpush1.bf16.xpose.msra.mxu0 0
        %2498 = vmatprep.subr.bf16.mxu0 0
        %2499 = vmatpush1.bf16.xpose.msra.mxu0 0
        %2500 = vmatprep.subr.bf16.mxu0 0
        %2501 = vmatpush1.bf16.xpose.msra.mxu0 0
        %2502 = vmatprep.subr.bf16.mxu0 0
        %2503 = vmatpush1.bf16.xpose.msra.mxu0 0
        %2504 = vmatprep.subr.bf16.mxu0 0
        %2505 = vmatpush1.bf16.xpose.msra.mxu0 0
        %2506 = vmatprep.subr.bf16.mxu0 0
        %2507 = vmatpush1.bf16.xpose.msra.mxu0 0
        %2508 = vmatprep.subr.bf16.mxu0 0
        %2509 = vmatpush1.bf16.xpose.msra.mxu0 %v2492
        %2510 = vmatprep.subr.bf16.mxu0 0
        %2511 = vmatpush2.bf16.xpose.msra.mxu0 0
        %2512 = vmatprep.subr.bf16.mxu0 0
        %2513 = vmatpush2.bf16.xpose.msra.mxu0 0
        %2514 = vmatprep.subr.bf16.mxu0 0
        %2515 = vmatpush2.bf16.xpose.msra.mxu0 0
        %2516 = vmatprep.subr.bf16.mxu0 0
        %2517 = vmatpush2.bf16.xpose.msra.mxu0 0
        %2518 = vmatprep.subr.bf16.mxu0 0
        %2519 = vmatpush2.bf16.xpose.msra.mxu0 0
        %2520 = vmatprep.subr.bf16.mxu0 0
        %2521 = vmatpush2.bf16.xpose.msra.mxu0 0
        %2522 = vmatprep.subr.bf16.mxu0 0
        %2523 = vmatpush2.bf16.xpose.msra.mxu0 0
        %2524 = vmatprep.subr.bf16.mxu0 0
        %2525 = vmatpush2.bf16.xpose.msra.mxu0 0
        %2526 = vmatprep.mubr.bf16.mxu0 0
        %2527 = vmatmul.mubr.bf16.gmra.mxu0 %v2489
        %v2528 = vpop.f32.mrf.mxu0
        %v2529 = vadd.f32 %v2020, %v2528
        %v2530 = vpop.f32.mrf.mxu0
        %v2531 = vpop.f32.mrf.mxu0
        %v2532 = vpop.f32.mrf.mxu0
        %2533 = vdwg.mxu0
        %v2534 = vsel %vm1388, %v2529, -inf
        %2535 = vmax.xlane.f32.xlu0 %v2534
        %v2536 = vpop.xlane.xlu0 %2535
        %v2537 = vsub.f32 %v2529, %v2536
        %v2538 = vmul.f32 %v2537, 1.442695
        %v2539 = vpow.pop %v2538
        %v2540 = vsel %vm1388, %v2539, 0.0
        %2541 = vadd.xlane.f32.xlu0 %v2540
        %v2542 = vpop.xlane.xlu0 %2541
        %v2543 = vrcp.pop %v2542
        %v2544 = vmul.f32 %v2539, %v2543
        %v2545 = vpack.c.bf16 %v2544, %v2544
        %2546 = vrot.lane.b32.xlu0 %v2023, 104
        %v2547 = vpop.permute.xlu0 %2546
        %v2549 = vsel %vm1388, %v2545, 0
        %v2552 = vsel %vm1450, %v2547, 0
        %2554 = vmatprep.subr.bf16.mxu0 0
        %2555 = vmatpush1.bf16.msra.mxu0 0
        %2556 = vmatprep.subr.bf16.mxu0 0
        %2557 = vmatpush1.bf16.msra.mxu0 0
        %2558 = vmatprep.subr.bf16.mxu0 0
        %2559 = vmatpush1.bf16.msra.mxu0 0
        %2560 = vmatprep.subr.bf16.mxu0 0
        %2561 = vmatpush1.bf16.msra.mxu0 0
        %2562 = vmatprep.subr.bf16.mxu0 0
        %2563 = vmatpush1.bf16.msra.mxu0 0
        %2564 = vmatprep.subr.bf16.mxu0 0
        %2565 = vmatpush1.bf16.msra.mxu0 0
        %2566 = vmatprep.subr.bf16.mxu0 0
        %2567 = vmatpush1.bf16.msra.mxu0 0
        %2568 = vmatprep.subr.bf16.mxu0 0
        %2569 = vmatpush1.bf16.msra.mxu0 %v2552
        %2570 = vmatprep.subr.bf16.mxu0 0
        %2571 = vmatpush2.bf16.msra.mxu0 0
        %2572 = vmatprep.subr.bf16.mxu0 0
        %2573 = vmatpush2.bf16.msra.mxu0 0
        %2574 = vmatprep.subr.bf16.mxu0 0
        %2575 = vmatpush2.bf16.msra.mxu0 0
        %2576 = vmatprep.subr.bf16.mxu0 0
        %2577 = vmatpush2.bf16.msra.mxu0 0
        %2578 = vmatprep.subr.bf16.mxu0 0
        %2579 = vmatpush2.bf16.msra.mxu0 0
        %2580 = vmatprep.subr.bf16.mxu0 0
        %2581 = vmatpush2.bf16.msra.mxu0 0
        %2582 = vmatprep.subr.bf16.mxu0 0
        %2583 = vmatpush2.bf16.msra.mxu0 0
        %2584 = vmatprep.subr.bf16.mxu0 0
        %2585 = vmatpush2.bf16.msra.mxu0 0
        %2586 = vmatprep.mubr.bf16.mxu0 0
        %2587 = vmatmul.mubr.bf16.gmra.mxu0 %v2549
        %v2588 = vpop.f32.mrf.mxu0
        %v2589 = vadd.f32 0.0, %v2588
        %v2590 = vpop.f32.mrf.mxu0
        %v2591 = vpop.f32.mrf.mxu0
        %v2592 = vpop.f32.mrf.mxu0
        %2593 = vdwg.mxu0
        %v2594 = vpack.c.bf16 %v2589, %v2589
        %v2596 = vsel %vm1388, %v2594, 0
        %2598 = vmatprep.subr.bf16.mxu0 0
        %2599 = vmatpush1.bf16.msra.mxu0 0
        %2600 = vmatprep.subr.bf16.mxu0 0
        %2601 = vmatpush1.bf16.msra.mxu0 0
        %2602 = vmatprep.subr.bf16.mxu0 0
        %2603 = vmatpush1.bf16.msra.mxu0 0
        %2604 = vmatprep.subr.bf16.mxu0 0
        %2605 = vmatpush1.bf16.msra.mxu0 0
        %2606 = vmatprep.subr.bf16.mxu0 0
        %2607 = vmatpush1.bf16.msra.mxu0 0
        %2608 = vmatprep.subr.bf16.mxu0 0
        %2609 = vmatpush1.bf16.msra.mxu0 0
        %2610 = vmatprep.subr.bf16.mxu0 0
        %2611 = vmatpush1.bf16.msra.mxu0 0
        %2612 = vmatprep.subr.bf16.mxu0 0
        %2613 = vmatpush1.bf16.msra.mxu0 %v1974
        %2614 = vmatprep.subr.bf16.mxu0 0
        %2615 = vmatpush2.bf16.msra.mxu0 0
        %2616 = vmatprep.subr.bf16.mxu0 0
        %2617 = vmatpush2.bf16.msra.mxu0 0
        %2618 = vmatprep.subr.bf16.mxu0 0
        %2619 = vmatpush2.bf16.msra.mxu0 0
        %2620 = vmatprep.subr.bf16.mxu0 0
        %2621 = vmatpush2.bf16.msra.mxu0 0
        %2622 = vmatprep.subr.bf16.mxu0 0
        %2623 = vmatpush2.bf16.msra.mxu0 0
        %2624 = vmatprep.subr.bf16.mxu0 0
        %2625 = vmatpush2.bf16.msra.mxu0 0
        %2626 = vmatprep.subr.bf16.mxu0 0
        %2627 = vmatpush2.bf16.msra.mxu0 0
        %2628 = vmatprep.subr.bf16.mxu0 0
        %2629 = vmatpush2.bf16.msra.mxu0 0
        %2630 = vmatprep.mubr.bf16.mxu0 0
        %2631 = vmatmul.mubr.bf16.gmra.mxu0 %v2596
        %v2632 = vpop.f32.mrf.mxu0
        %v2633 = vadd.f32 0.0, %v2632
        %v2634 = vpop.f32.mrf.mxu0
        %v2635 = vpop.f32.mrf.mxu0
        %v2636 = vpop.f32.mrf.mxu0
        %2637 = vdwg.mxu0
        %v2638 = vadd.f32 %v2483, %v2633
        %v2640 = vlaneseq
        %v2641 = vshrl.u32 %v2640, 7
        %v2642 = vsub.s32 0, %v2641
        %v2643 = vrot.slane %v1195, %v2642
        %v2645 = vadd.f32 %v2016, %v2643
        %v2646 = vadd.f32 %v2638, %v2643
        %v2647 = vadd.f32 %v1170, %v2645
        %v2648 = vadd.f32 %v1171, %v2646
        %v2649 = vsel %vm1217, %v2647, 0.0
        %2650 = vadd.xlane.f32.xlu0 %v2649
        %v2651 = vpop.xlane.xlu0 %2650
        %v2652 = vsel %vm1217, %v2648, 0.0
        %2653 = vadd.xlane.f32.xlu0 %v2652
        %v2654 = vpop.xlane.xlu0 %2653
        %v2655 = vrcp.pop 32.0
        %v2656 = vmul.f32 %v2651, %v2655
        %v2657 = vmul.f32 %v2654, %v2655
        %v2658 = vsub.f32 %v2647, %v2656
        %v2659 = vsub.f32 %v2648, %v2657
        %v2660 = vmul.f32 %v2658, %v2658
        %v2661 = vmul.f32 %v2659, %v2659
        %v2662 = vsel %vm1217, %v2660, 0.0
        %2663 = vadd.xlane.f32.xlu0 %v2662
        %v2664 = vpop.xlane.xlu0 %2663
        %v2665 = vsel %vm1217, %v2661, 0.0
        %2666 = vadd.xlane.f32.xlu0 %v2665
        %v2667 = vpop.xlane.xlu0 %2666
        %v2668 = vmul.f32 %v2664, %v2655
        %v2669 = vmul.f32 %v2667, %v2655
        %v2671 = vlaneseq
        %v2672 = vshrl.u32 %v2671, 7
        %v2673 = vsub.s32 0, %v2672
        %v2674 = vrot.slane %v1196, %v2673
        %v2676 = vmul.f32 %v2674, %v2658
        %v2677 = vmul.f32 %v2674, %v2659
        %v2678 = vadd.f32 %v2668, 1e-06
        %v2679 = vadd.f32 %v2669, 1e-06
        %v2680 = vrsqrt.pop %v2678
        %v2681 = vrsqrt.pop %v2679
        %v2682 = vmul.f32 %v2676, %v2680
        %v2683 = vmul.f32 %v2677, %v2681
        %v2685 = vlaneseq
        %v2686 = vshrl.u32 %v2685, 7
        %v2687 = vsub.s32 0, %v2686
        %v2688 = vrot.slane %v1197, %v2687
        %v2690 = vadd.f32 %v2682, %v2688
        %v2691 = vadd.f32 %v2683, %v2688
        %v2692 = vld [vmem:[#allocation20] sm:$0xf]
        %v2693 = vld [vmem:[#allocation20 + $0x4] sm:$0xf]
        %v2694 = vld [vmem:[#allocation20 + $0x8] sm:$0xf]
        %v2695 = vld [vmem:[#allocation20 + $0xc] sm:$0xf]
        %v2696 = vld [vmem:[#allocation22] sm:$0x1]
        %v2697 = vld [vmem:[#allocation23] sm:$0xf]
        %v2698 = vld [vmem:[#allocation23 + $0x4] sm:$0xf]
        %v2699 = vld [vmem:[#allocation23 + $0x8] sm:$0xf]
        %v2700 = vld [vmem:[#allocation23 + $0xc] sm:$0xf]
        %v2701 = vld [vmem:[#allocation25] sm:$0x1]
        %v2702 = vld [vmem:[#allocation26] sm:$0xf]
        %v2703 = vld [vmem:[#allocation26 + $0x4] sm:$0xf]
        %v2704 = vld [vmem:[#allocation26 + $0x8] sm:$0xf]
        %v2705 = vld [vmem:[#allocation26 + $0xc] sm:$0xf]
        %v2706 = vld [vmem:[%s19] sm:$0x1]
        %v2707 = vld [vmem:[#allocation28] sm:$0xf]
        %v2708 = vld [vmem:[#allocation28 + $0x4] sm:$0xf]
        %v2709 = vld [vmem:[#allocation28 + $0x8] sm:$0xf]
        %v2710 = vld [vmem:[#allocation28 + $0xc] sm:$0xf]
        %v2711 = vld [vmem:[%s21] sm:$0x1]
        %v2712 = vld [vmem:[%s22] sm:$0x1]
        %v2713 = vld [vmem:[%s23] sm:$0x1]
        %v2714 = vpack.c.bf16 %v2691, %v2690
        %v2716 = vlaneseq
        %v2717 = vshrl.u32 %v2716, 7
        %v2718 = vsub.s32 0, %v2717
        %v2719 = vrot.slane %v2696, %v2718
        %v2725 = vunpack.c.l.b16 %v2692
        %v2726 = vunpack.c.l.b16 %v2693
        %v2727 = vunpack.c.l.b16 %v2694
        %v2728 = vunpack.c.l.b16 %v2695
        %v2729 = vpack.c.b16 %v2726, %v2725
        %v2730 = vpack.c.b16 %v2728, %v2727
        %v2734 = vsel %vm1217, %v2714, 0
        %2736 = vmatprep.subr.bf16.mxu0 0
        %2737 = vmatpush1.bf16.msra.mxu0 0
        %2738 = vmatprep.subr.bf16.mxu0 0
        %2739 = vmatpush1.bf16.msra.mxu0 0
        %2740 = vmatprep.subr.bf16.mxu0 0
        %2741 = vmatpush1.bf16.msra.mxu0 0
        %2742 = vmatprep.subr.bf16.mxu0 0
        %2743 = vmatpush1.bf16.msra.mxu0 0
        %2744 = vmatprep.subr.bf16.mxu0 0
        %2745 = vmatpush1.bf16.msra.mxu0 0
        %2746 = vmatprep.subr.bf16.mxu0 0
        %2747 = vmatpush1.bf16.msra.mxu0 0
        %2748 = vmatprep.subr.bf16.mxu0 0
        %2749 = vmatpush1.bf16.msra.mxu0 %v2730
        %2750 = vmatprep.subr.bf16.mxu0 0
        %2751 = vmatpush1.bf16.msra.mxu0 %v2729
        %2752 = vmatprep.subr.bf16.mxu0 0
        %2753 = vmatpush2.bf16.msra.mxu0 0
        %2754 = vmatprep.subr.bf16.mxu0 0
        %2755 = vmatpush2.bf16.msra.mxu0 0
        %2756 = vmatprep.subr.bf16.mxu0 0
        %2757 = vmatpush2.bf16.msra.mxu0 0
        %2758 = vmatprep.subr.bf16.mxu0 0
        %2759 = vmatpush2.bf16.msra.mxu0 0
        %2760 = vmatprep.subr.bf16.mxu0 0
        %2761 = vmatpush2.bf16.msra.mxu0 0
        %2762 = vmatprep.subr.bf16.mxu0 0
        %2763 = vmatpush2.bf16.msra.mxu0 0
        %2764 = vmatprep.subr.bf16.mxu0 0
        %2765 = vmatpush2.bf16.msra.mxu0 0
        %2766 = vmatprep.subr.bf16.mxu0 0
        %2767 = vmatpush2.bf16.msra.mxu0 0
        %2768 = vmatprep.mubr.bf16.mxu0 0
        %2769 = vmatmul.mubr.bf16.gmra.mxu0 %v2734
        %v2770 = vpop.f32.mrf.mxu0
        %v2771 = vadd.f32 %v2719, %v2770
        %v2772 = vpop.f32.mrf.mxu0
        %v2773 = vpop.f32.mrf.mxu0
        %v2774 = vadd.f32 %v2719, %v2773
        %v2775 = vpop.f32.mrf.mxu0
        %2776 = vdwg.mxu0
        %v2777 = vmul.f32 %v2771, 0.35355338
        %v2778 = vmul.f32 %v2774, 0.35355338
        %v2779 = vpack.c.bf16 %v1173, %v1172
        %v2780 = vpack.c.bf16 %v1175, %v1174
        %v2782 = vlaneseq
        %v2783 = vshrl.u32 %v2782, 7
        %v2784 = vsub.s32 0, %v2783
        %v2785 = vrot.slane %v2701, %v2784
        %v2791 = vunpack.c.l.b16 %v2697
        %v2792 = vunpack.c.l.b16 %v2698
        %v2793 = vunpack.c.l.b16 %v2699
        %v2794 = vunpack.c.l.b16 %v2700
        %v2795 = vpack.c.b16 %v2792, %v2791
        %v2796 = vpack.c.b16 %v2794, %v2793
        %v2800 = vsel %vm1217, %v2779, 0
        %v2803 = vsel %vm1217, %v2780, 0
        %2805 = vmatprep.subr.bf16.mxu0 0
        %2806 = vmatpush1.bf16.msra.mxu0 0
        %2807 = vmatprep.subr.bf16.mxu0 0
        %2808 = vmatpush1.bf16.msra.mxu0 0
        %2809 = vmatprep.subr.bf16.mxu0 0
        %2810 = vmatpush1.bf16.msra.mxu0 0
        %2811 = vmatprep.subr.bf16.mxu0 0
        %2812 = vmatpush1.bf16.msra.mxu0 0
        %2813 = vmatprep.subr.bf16.mxu0 0
        %2814 = vmatpush1.bf16.msra.mxu0 0
        %2815 = vmatprep.subr.bf16.mxu0 0
        %2816 = vmatpush1.bf16.msra.mxu0 0
        %2817 = vmatprep.subr.bf16.mxu0 0
        %2818 = vmatpush1.bf16.msra.mxu0 %v2796
        %2819 = vmatprep.subr.bf16.mxu0 0
        %2820 = vmatpush1.bf16.msra.mxu0 %v2795
        %2821 = vmatprep.subr.bf16.mxu0 0
        %2822 = vmatpush2.bf16.msra.mxu0 0
        %2823 = vmatprep.subr.bf16.mxu0 0
        %2824 = vmatpush2.bf16.msra.mxu0 0
        %2825 = vmatprep.subr.bf16.mxu0 0
        %2826 = vmatpush2.bf16.msra.mxu0 0
        %2827 = vmatprep.subr.bf16.mxu0 0
        %2828 = vmatpush2.bf16.msra.mxu0 0
        %2829 = vmatprep.subr.bf16.mxu0 0
        %2830 = vmatpush2.bf16.msra.mxu0 0
        %2831 = vmatprep.subr.bf16.mxu0 0
        %2832 = vmatpush2.bf16.msra.mxu0 0
        %2833 = vmatprep.subr.bf16.mxu0 0
        %2834 = vmatpush2.bf16.msra.mxu0 0
        %2835 = vmatprep.subr.bf16.mxu0 0
        %2836 = vmatpush2.bf16.msra.mxu0 0
        %2837 = vmatprep.mubr.bf16.mxu0 0
        %2838 = vmatmul.mubr.bf16.gmra.mxu0 %v2800
        %v2839 = vpop.f32.mrf.mxu0
        %v2840 = vadd.f32 %v2785, %v2839
        %v2841 = vpop.f32.mrf.mxu0
        %v2842 = vpop.f32.mrf.mxu0
        %v2843 = vadd.f32 %v2785, %v2842
        %v2844 = vpop.f32.mrf.mxu0
        %2845 = vmatprep.mubr.bf16.mxu0 0
        %2846 = vmatmul.mubr.bf16.gmra.mxu0 %v2803
        %v2847 = vpop.f32.mrf.mxu0
        %v2848 = vadd.f32 %v2785, %v2847
        %v2849 = vpop.f32.mrf.mxu0
        %v2850 = vpop.f32.mrf.mxu0
        %v2851 = vadd.f32 %v2785, %v2850
        %v2852 = vpop.f32.mrf.mxu0
        %2853 = vdwg.mxu0
        %v2855 = vlaneseq
        %v2856 = vshrl.u32 %v2855, 7
        %v2857 = vsub.s32 0, %v2856
        %v2858 = vrot.slane %v2706, %v2857
        %v2864 = vunpack.c.l.b16 %v2702
        %v2865 = vunpack.c.l.b16 %v2703
        %v2866 = vunpack.c.l.b16 %v2704
        %v2867 = vunpack.c.l.b16 %v2705
        %v2868 = vpack.c.b16 %v2865, %v2864
        %v2869 = vpack.c.b16 %v2867, %v2866
        %2872 = vmatprep.subr.bf16.mxu0 0
        %2873 = vmatpush1.bf16.msra.mxu0 0
        %2874 = vmatprep.subr.bf16.mxu0 0
        %2875 = vmatpush1.bf16.msra.mxu0 0
        %2876 = vmatprep.subr.bf16.mxu0 0
        %2877 = vmatpush1.bf16.msra.mxu0 0
        %2878 = vmatprep.subr.bf16.mxu0 0
        %2879 = vmatpush1.bf16.msra.mxu0 0
        %2880 = vmatprep.subr.bf16.mxu0 0
        %2881 = vmatpush1.bf16.msra.mxu0 0
        %2882 = vmatprep.subr.bf16.mxu0 0
        %2883 = vmatpush1.bf16.msra.mxu0 0
        %2884 = vmatprep.subr.bf16.mxu0 0
        %2885 = vmatpush1.bf16.msra.mxu0 %v2869
        %2886 = vmatprep.subr.bf16.mxu0 0
        %2887 = vmatpush1.bf16.msra.mxu0 %v2868
        %2888 = vmatprep.subr.bf16.mxu0 0
        %2889 = vmatpush2.bf16.msra.mxu0 0
        %2890 = vmatprep.subr.bf16.mxu0 0
        %2891 = vmatpush2.bf16.msra.mxu0 0
        %2892 = vmatprep.subr.bf16.mxu0 0
        %2893 = vmatpush2.bf16.msra.mxu0 0
        %2894 = vmatprep.subr.bf16.mxu0 0
        %2895 = vmatpush2.bf16.msra.mxu0 0
        %2896 = vmatprep.subr.bf16.mxu0 0
        %2897 = vmatpush2.bf16.msra.mxu0 0
        %2898 = vmatprep.subr.bf16.mxu0 0
        %2899 = vmatpush2.bf16.msra.mxu0 0
        %2900 = vmatprep.subr.bf16.mxu0 0
        %2901 = vmatpush2.bf16.msra.mxu0 0
        %2902 = vmatprep.subr.bf16.mxu0 0
        %2903 = vmatpush2.bf16.msra.mxu0 0
        %2904 = vmatprep.mubr.bf16.mxu0 0
        %2905 = vmatmul.mubr.bf16.gmra.mxu0 %v2800
        %v2906 = vpop.f32.mrf.mxu0
        %v2907 = vadd.f32 %v2858, %v2906
        %v2908 = vpop.f32.mrf.mxu0
        %v2909 = vpop.f32.mrf.mxu0
        %v2910 = vadd.f32 %v2858, %v2909
        %v2911 = vpop.f32.mrf.mxu0
        %2912 = vmatprep.mubr.bf16.mxu0 0
        %2913 = vmatmul.mubr.bf16.gmra.mxu0 %v2803
        %v2914 = vpop.f32.mrf.mxu0
        %v2915 = vadd.f32 %v2858, %v2914
        %v2916 = vpop.f32.mrf.mxu0
        %v2917 = vpop.f32.mrf.mxu0
        %v2918 = vadd.f32 %v2858, %v2917
        %v2919 = vpop.f32.mrf.mxu0
        %2920 = vdwg.mxu0
        %v2921 = vld [vmem:[%s1012] sm:$0xff]
        %vm2922 = vcmp.gt.f32.partialorder %v2921, 0.0
        %v2923 = vsel %vm2922, 0.0, -1e+09
        %v2924 = vpack.c.bf16 %v2777, %v2777
        %v2925 = vpack.c.bf16 %v2843, %v2840
        %v2926 = vpack.c.bf16 %v2910, %v2907
        %v2928 = vsel %vm1388, %v2924, 0
        %v2931 = vsel %vm1388, %v2925, 0
        %2933 = vmatprep.subr.bf16.mxu0 0
        %2934 = vmatpush1.bf16.xpose.msra.mxu0 0
        %2935 = vmatprep.subr.bf16.mxu0 0
        %2936 = vmatpush1.bf16.xpose.msra.mxu0 0
        %2937 = vmatprep.subr.bf16.mxu0 0
        %2938 = vmatpush1.bf16.xpose.msra.mxu0 0
        %2939 = vmatprep.subr.bf16.mxu0 0
        %2940 = vmatpush1.bf16.xpose.msra.mxu0 0
        %2941 = vmatprep.subr.bf16.mxu0 0
        %2942 = vmatpush1.bf16.xpose.msra.mxu0 0
        %2943 = vmatprep.subr.bf16.mxu0 0
        %2944 = vmatpush1.bf16.xpose.msra.mxu0 0
        %2945 = vmatprep.subr.bf16.mxu0 0
        %2946 = vmatpush1.bf16.xpose.msra.mxu0 0
        %2947 = vmatprep.subr.bf16.mxu0 0
        %2948 = vmatpush1.bf16.xpose.msra.mxu0 %v2931
        %2949 = vmatprep.subr.bf16.mxu0 0
        %2950 = vmatpush2.bf16.xpose.msra.mxu0 0
        %2951 = vmatprep.subr.bf16.mxu0 0
        %2952 = vmatpush2.bf16.xpose.msra.mxu0 0
        %2953 = vmatprep.subr.bf16.mxu0 0
        %2954 = vmatpush2.bf16.xpose.msra.mxu0 0
        %2955 = vmatprep.subr.bf16.mxu0 0
        %2956 = vmatpush2.bf16.xpose.msra.mxu0 0
        %2957 = vmatprep.subr.bf16.mxu0 0
        %2958 = vmatpush2.bf16.xpose.msra.mxu0 0
        %2959 = vmatprep.subr.bf16.mxu0 0
        %2960 = vmatpush2.bf16.xpose.msra.mxu0 0
        %2961 = vmatprep.subr.bf16.mxu0 0
        %2962 = vmatpush2.bf16.xpose.msra.mxu0 0
        %2963 = vmatprep.subr.bf16.mxu0 0
        %2964 = vmatpush2.bf16.xpose.msra.mxu0 0
        %2965 = vmatprep.mubr.bf16.mxu0 0
        %2966 = vmatmul.mubr.bf16.gmra.mxu0 %v2928
        %v2967 = vpop.f32.mrf.mxu0
        %v2968 = vadd.f32 %v2923, %v2967
        %v2969 = vpop.f32.mrf.mxu0
        %v2970 = vpop.f32.mrf.mxu0
        %v2971 = vpop.f32.mrf.mxu0
        %2972 = vdwg.mxu0
        %vm2973 = vcmask 130048
        %v2974 = vsel %vm2973, %v2968, -inf
        %2975 = vmax.xlane.f32.xlu0 %v2974
        %v2976 = vpop.xlane.xlu0 %2975
        %v2977 = vsub.f32 %v2968, %v2976
        %v2978 = vmul.f32 %v2977, 1.442695
        %v2979 = vpow.pop %v2978
        %v2980 = vsel %vm2973, %v2979, 0.0
        %2981 = vadd.xlane.f32.xlu0 %v2980
        %v2982 = vpop.xlane.xlu0 %2981
        %v2983 = vrcp.pop %v2982
        %v2984 = vmul.f32 %v2979, %v2983
        %v2985 = vpack.c.bf16 %v2984, %v2984
        %v2987 = vsel %vm2973, %v2985, 0
        %2989 = vmatprep.subr.bf16.mxu0 0
        %2990 = vmatpush1.bf16.msra.mxu0 0
        %2991 = vmatprep.subr.bf16.mxu0 0
        %2992 = vmatpush1.bf16.msra.mxu0 0
        %2993 = vmatprep.subr.bf16.mxu0 0
        %2994 = vmatpush1.bf16.msra.mxu0 0
        %2995 = vmatprep.subr.bf16.mxu0 0
        %2996 = vmatpush1.bf16.msra.mxu0 0
        %2997 = vmatprep.subr.bf16.mxu0 0
        %2998 = vmatpush1.bf16.msra.mxu0 0
        %2999 = vmatprep.subr.bf16.mxu0 0
        %3000 = vmatpush1.bf16.msra.mxu0 0
        %3001 = vmatprep.subr.bf16.mxu0 0
        %3002 = vmatpush1.bf16.msra.mxu0 0
        %3003 = vmatprep.subr.bf16.mxu0 0
        %3004 = vmatpush1.bf16.msra.mxu0 %v2926
        %3005 = vmatprep.subr.bf16.mxu0 0
        %3006 = vmatpush2.bf16.msra.mxu0 0
        %3007 = vmatprep.subr.bf16.mxu0 0
        %3008 = vmatpush2.bf16.msra.mxu0 0
        %3009 = vmatprep.subr.bf16.mxu0 0
        %3010 = vmatpush2.bf16.msra.mxu0 0
        %3011 = vmatprep.subr.bf16.mxu0 0
        %3012 = vmatpush2.bf16.msra.mxu0 0
        %3013 = vmatprep.subr.bf16.mxu0 0
        %3014 = vmatpush2.bf16.msra.mxu0 0
        %3015 = vmatprep.subr.bf16.mxu0 0
        %3016 = vmatpush2.bf16.msra.mxu0 0
        %3017 = vmatprep.subr.bf16.mxu0 0
        %3018 = vmatpush2.bf16.msra.mxu0 0
        %3019 = vmatprep.subr.bf16.mxu0 0
        %3020 = vmatpush2.bf16.msra.mxu0 0
        %3021 = vmatprep.mubr.bf16.mxu0 0
        %3022 = vmatmul.mubr.bf16.gmra.mxu0 %v2987
        %v3023 = vpop.f32.mrf.mxu0
        %v3024 = vadd.f32 0.0, %v3023
        %v3025 = vpop.f32.mrf.mxu0
        %v3026 = vpop.f32.mrf.mxu0
        %v3027 = vpop.f32.mrf.mxu0
        %3028 = vdwg.mxu0
        %v3029 = vpack.c.bf16 %v3024, %v3024
        %3031 = vrot.lane.b32.xlu0 %v2924, 120
        %v3032 = vpop.permute.xlu0 %3031
        %3034 = vrot.lane.b32.xlu0 %v2925, 120
        %v3035 = vpop.permute.xlu0 %3034
        %v3037 = vsel %vm1388, %v3032, 0
        %v3040 = vsel %vm1388, %v3035, 0
        %3042 = vmatprep.subr.bf16.mxu0 0
        %3043 = vmatpush1.bf16.xpose.msra.mxu0 0
        %3044 = vmatprep.subr.bf16.mxu0 0
        %3045 = vmatpush1.bf16.xpose.msra.mxu0 0
        %3046 = vmatprep.subr.bf16.mxu0 0
        %3047 = vmatpush1.bf16.xpose.msra.mxu0 0
        %3048 = vmatprep.subr.bf16.mxu0 0
        %3049 = vmatpush1.bf16.xpose.msra.mxu0 0
        %3050 = vmatprep.subr.bf16.mxu0 0
        %3051 = vmatpush1.bf16.xpose.msra.mxu0 0
        %3052 = vmatprep.subr.bf16.mxu0 0
        %3053 = vmatpush1.bf16.xpose.msra.mxu0 0
        %3054 = vmatprep.subr.bf16.mxu0 0
        %3055 = vmatpush1.bf16.xpose.msra.mxu0 0
        %3056 = vmatprep.subr.bf16.mxu0 0
        %3057 = vmatpush1.bf16.xpose.msra.mxu0 %v3040
        %3058 = vmatprep.subr.bf16.mxu0 0
        %3059 = vmatpush2.bf16.xpose.msra.mxu0 0
        %3060 = vmatprep.subr.bf16.mxu0 0
        %3061 = vmatpush2.bf16.xpose.msra.mxu0 0
        %3062 = vmatprep.subr.bf16.mxu0 0
        %3063 = vmatpush2.bf16.xpose.msra.mxu0 0
        %3064 = vmatprep.subr.bf16.mxu0 0
        %3065 = vmatpush2.bf16.xpose.msra.mxu0 0
        %3066 = vmatprep.subr.bf16.mxu0 0
        %3067 = vmatpush2.bf16.xpose.msra.mxu0 0
        %3068 = vmatprep.subr.bf16.mxu0 0
        %3069 = vmatpush2.bf16.xpose.msra.mxu0 0
        %3070 = vmatprep.subr.bf16.mxu0 0
        %3071 = vmatpush2.bf16.xpose.msra.mxu0 0
        %3072 = vmatprep.subr.bf16.mxu0 0
        %3073 = vmatpush2.bf16.xpose.msra.mxu0 0
        %3074 = vmatprep.mubr.bf16.mxu0 0
        %3075 = vmatmul.mubr.bf16.gmra.mxu0 %v3037
        %v3076 = vpop.f32.mrf.mxu0
        %v3077 = vadd.f32 %v2923, %v3076
        %v3078 = vpop.f32.mrf.mxu0
        %v3079 = vpop.f32.mrf.mxu0
        %v3080 = vpop.f32.mrf.mxu0
        %3081 = vdwg.mxu0
        %v3082 = vsel %vm2973, %v3077, -inf
        %3083 = vmax.xlane.f32.xlu0 %v3082
        %v3084 = vpop.xlane.xlu0 %3083
        %v3085 = vsub.f32 %v3077, %v3084
        %v3086 = vmul.f32 %v3085, 1.442695
        %v3087 = vpow.pop %v3086
        %v3088 = vsel %vm2973, %v3087, 0.0
        %3089 = vadd.xlane.f32.xlu0 %v3088
        %v3090 = vpop.xlane.xlu0 %3089
        %v3091 = vrcp.pop %v3090
        %v3092 = vmul.f32 %v3087, %v3091
        %v3093 = vpack.c.bf16 %v3092, %v3092
        %3095 = vrot.lane.b32.xlu0 %v2926, 120
        %v3096 = vpop.permute.xlu0 %3095
        %v3099 = vsel %vm2973, %v3093, 0
        %3101 = vmatprep.subr.bf16.mxu0 0
        %3102 = vmatpush1.bf16.msra.mxu0 0
        %3103 = vmatprep.subr.bf16.mxu0 0
        %3104 = vmatpush1.bf16.msra.mxu0 0
        %3105 = vmatprep.subr.bf16.mxu0 0
        %3106 = vmatpush1.bf16.msra.mxu0 0
        %3107 = vmatprep.subr.bf16.mxu0 0
        %3108 = vmatpush1.bf16.msra.mxu0 0
        %3109 = vmatprep.subr.bf16.mxu0 0
        %3110 = vmatpush1.bf16.msra.mxu0 0
        %3111 = vmatprep.subr.bf16.mxu0 0
        %3112 = vmatpush1.bf16.msra.mxu0 0
        %3113 = vmatprep.subr.bf16.mxu0 0
        %3114 = vmatpush1.bf16.msra.mxu0 0
        %3115 = vmatprep.subr.bf16.mxu0 0
        %3116 = vmatpush1.bf16.msra.mxu0 %v3096
        %3117 = vmatprep.subr.bf16.mxu0 0
        %3118 = vmatpush2.bf16.msra.mxu0 0
        %3119 = vmatprep.subr.bf16.mxu0 0
        %3120 = vmatpush2.bf16.msra.mxu0 0
        %3121 = vmatprep.subr.bf16.mxu0 0
        %3122 = vmatpush2.bf16.msra.mxu0 0
        %3123 = vmatprep.subr.bf16.mxu0 0
        %3124 = vmatpush2.bf16.msra.mxu0 0
        %3125 = vmatprep.subr.bf16.mxu0 0
        %3126 = vmatpush2.bf16.msra.mxu0 0
        %3127 = vmatprep.subr.bf16.mxu0 0
        %3128 = vmatpush2.bf16.msra.mxu0 0
        %3129 = vmatprep.subr.bf16.mxu0 0
        %3130 = vmatpush2.bf16.msra.mxu0 0
        %3131 = vmatprep.subr.bf16.mxu0 0
        %3132 = vmatpush2.bf16.msra.mxu0 0
        %3133 = vmatprep.mubr.bf16.mxu0 0
        %3134 = vmatmul.mubr.bf16.gmra.mxu0 %v3099
        %v3135 = vpop.f32.mrf.mxu0
        %v3136 = vadd.f32 0.0, %v3135
        %v3137 = vpop.f32.mrf.mxu0
        %v3138 = vpop.f32.mrf.mxu0
        %v3139 = vpop.f32.mrf.mxu0
        %3140 = vdwg.mxu0
        %v3141 = vpack.c.bf16 %v3136, %v3136
        %v3143 = vsel %vm1388, %v3141, 0
        %v3146 = vsel %vm1450, %v2708, 0
        %3148 = vmatprep.subr.bf16.mxu0 0
        %3149 = vmatpush1.bf16.msra.mxu0 0
        %3150 = vmatprep.subr.bf16.mxu0 0
        %3151 = vmatpush1.bf16.msra.mxu0 0
        %3152 = vmatprep.subr.bf16.mxu0 0
        %3153 = vmatpush1.bf16.msra.mxu0 0
        %3154 = vmatprep.subr.bf16.mxu0 0
        %3155 = vmatpush1.bf16.msra.mxu0 0
        %3156 = vmatprep.subr.bf16.mxu0 0
        %3157 = vmatpush1.bf16.msra.mxu0 0
        %3158 = vmatprep.subr.bf16.mxu0 0
        %3159 = vmatpush1.bf16.msra.mxu0 0
        %3160 = vmatprep.subr.bf16.mxu0 0
        %3161 = vmatpush1.bf16.msra.mxu0 0
        %3162 = vmatprep.subr.bf16.mxu0 0
        %3163 = vmatpush1.bf16.msra.mxu0 %v3146
        %3164 = vmatprep.subr.bf16.mxu0 0
        %3165 = vmatpush2.bf16.msra.mxu0 0
        %3166 = vmatprep.subr.bf16.mxu0 0
        %3167 = vmatpush2.bf16.msra.mxu0 0
        %3168 = vmatprep.subr.bf16.mxu0 0
        %3169 = vmatpush2.bf16.msra.mxu0 0
        %3170 = vmatprep.subr.bf16.mxu0 0
        %3171 = vmatpush2.bf16.msra.mxu0 0
        %3172 = vmatprep.subr.bf16.mxu0 0
        %3173 = vmatpush2.bf16.msra.mxu0 0
        %3174 = vmatprep.subr.bf16.mxu0 0
        %3175 = vmatpush2.bf16.msra.mxu0 0
        %3176 = vmatprep.subr.bf16.mxu0 0
        %3177 = vmatpush2.bf16.msra.mxu0 0
        %3178 = vmatprep.subr.bf16.mxu0 0
        %3179 = vmatpush2.bf16.msra.mxu0 0
        %3180 = vmatprep.mubr.bf16.mxu0 0
        %3181 = vmatmul.mubr.bf16.gmra.mxu0 %v3143
        %v3182 = vpop.f32.mrf.mxu0
        %v3183 = vadd.f32 0.0, %v3182
        %v3184 = vpop.f32.mrf.mxu0
        %v3185 = vpop.f32.mrf.mxu0
        %v3186 = vpop.f32.mrf.mxu0
        %3187 = vdwg.mxu0
        %v3189 = vsel %vm1388, %v3029, 0
        %v3192 = vsel %vm1450, %v2707, 0
        %3194 = vmatprep.subr.bf16.mxu0 0
        %3195 = vmatpush1.bf16.msra.mxu0 0
        %3196 = vmatprep.subr.bf16.mxu0 0
        %3197 = vmatpush1.bf16.msra.mxu0 0
        %3198 = vmatprep.subr.bf16.mxu0 0
        %3199 = vmatpush1.bf16.msra.mxu0 0
        %3200 = vmatprep.subr.bf16.mxu0 0
        %3201 = vmatpush1.bf16.msra.mxu0 0
        %3202 = vmatprep.subr.bf16.mxu0 0
        %3203 = vmatpush1.bf16.msra.mxu0 0
        %3204 = vmatprep.subr.bf16.mxu0 0
        %3205 = vmatpush1.bf16.msra.mxu0 0
        %3206 = vmatprep.subr.bf16.mxu0 0
        %3207 = vmatpush1.bf16.msra.mxu0 0
        %3208 = vmatprep.subr.bf16.mxu0 0
        %3209 = vmatpush1.bf16.msra.mxu0 %v3192
        %3210 = vmatprep.subr.bf16.mxu0 0
        %3211 = vmatpush2.bf16.msra.mxu0 0
        %3212 = vmatprep.subr.bf16.mxu0 0
        %3213 = vmatpush2.bf16.msra.mxu0 0
        %3214 = vmatprep.subr.bf16.mxu0 0
        %3215 = vmatpush2.bf16.msra.mxu0 0
        %3216 = vmatprep.subr.bf16.mxu0 0
        %3217 = vmatpush2.bf16.msra.mxu0 0
        %3218 = vmatprep.subr.bf16.mxu0 0
        %3219 = vmatpush2.bf16.msra.mxu0 0
        %3220 = vmatprep.subr.bf16.mxu0 0
        %3221 = vmatpush2.bf16.msra.mxu0 0
        %3222 = vmatprep.subr.bf16.mxu0 0
        %3223 = vmatpush2.bf16.msra.mxu0 0
        %3224 = vmatprep.subr.bf16.mxu0 0
        %3225 = vmatpush2.bf16.msra.mxu0 0
        %3226 = vmatprep.mubr.bf16.mxu0 0
        %3227 = vmatmul.mubr.bf16.gmra.mxu0 %v3189
        %v3228 = vpop.f32.mrf.mxu0
        %v3229 = vadd.f32 %v3183, %v3228
        %v3230 = vpop.f32.mrf.mxu0
        %v3231 = vpop.f32.mrf.mxu0
        %v3232 = vpop.f32.mrf.mxu0
        %3233 = vdwg.mxu0
        %3234 = vrot.lane.b32.xlu0 %v2924, 112
        %v3235 = vpop.permute.xlu0 %3234
        %3236 = vrot.lane.b32.xlu0 %v2925, 112
        %v3237 = vpop.permute.xlu0 %3236
        %v3239 = vsel %vm1388, %v3235, 0
        %v3242 = vsel %vm1388, %v3237, 0
        %3244 = vmatprep.subr.bf16.mxu0 0
        %3245 = vmatpush1.bf16.xpose.msra.mxu0 0
        %3246 = vmatprep.subr.bf16.mxu0 0
        %3247 = vmatpush1.bf16.xpose.msra.mxu0 0
        %3248 = vmatprep.subr.bf16.mxu0 0
        %3249 = vmatpush1.bf16.xpose.msra.mxu0 0
        %3250 = vmatprep.subr.bf16.mxu0 0
        %3251 = vmatpush1.bf16.xpose.msra.mxu0 0
        %3252 = vmatprep.subr.bf16.mxu0 0
        %3253 = vmatpush1.bf16.xpose.msra.mxu0 0
        %3254 = vmatprep.subr.bf16.mxu0 0
        %3255 = vmatpush1.bf16.xpose.msra.mxu0 0
        %3256 = vmatprep.subr.bf16.mxu0 0
        %3257 = vmatpush1.bf16.xpose.msra.mxu0 0
        %3258 = vmatprep.subr.bf16.mxu0 0
        %3259 = vmatpush1.bf16.xpose.msra.mxu0 %v3242
        %3260 = vmatprep.subr.bf16.mxu0 0
        %3261 = vmatpush2.bf16.xpose.msra.mxu0 0
        %3262 = vmatprep.subr.bf16.mxu0 0
        %3263 = vmatpush2.bf16.xpose.msra.mxu0 0
        %3264 = vmatprep.subr.bf16.mxu0 0
        %3265 = vmatpush2.bf16.xpose.msra.mxu0 0
        %3266 = vmatprep.subr.bf16.mxu0 0
        %3267 = vmatpush2.bf16.xpose.msra.mxu0 0
        %3268 = vmatprep.subr.bf16.mxu0 0
        %3269 = vmatpush2.bf16.xpose.msra.mxu0 0
        %3270 = vmatprep.subr.bf16.mxu0 0
        %3271 = vmatpush2.bf16.xpose.msra.mxu0 0
        %3272 = vmatprep.subr.bf16.mxu0 0
        %3273 = vmatpush2.bf16.xpose.msra.mxu0 0
        %3274 = vmatprep.subr.bf16.mxu0 0
        %3275 = vmatpush2.bf16.xpose.msra.mxu0 0
        %3276 = vmatprep.mubr.bf16.mxu0 0
        %3277 = vmatmul.mubr.bf16.gmra.mxu0 %v3239
        %v3278 = vpop.f32.mrf.mxu0
        %v3279 = vadd.f32 %v2923, %v3278
        %v3280 = vpop.f32.mrf.mxu0
        %v3281 = vpop.f32.mrf.mxu0
        %v3282 = vpop.f32.mrf.mxu0
        %3283 = vdwg.mxu0
        %v3284 = vsel %vm2973, %v3279, -inf
        %3285 = vmax.xlane.f32.xlu0 %v3284
        %v3286 = vpop.xlane.xlu0 %3285
        %v3287 = vsub.f32 %v3279, %v3286
        %v3288 = vmul.f32 %v3287, 1.442695
        %v3289 = vpow.pop %v3288
        %v3290 = vsel %vm2973, %v3289, 0.0
        %3291 = vadd.xlane.f32.xlu0 %v3290
        %v3292 = vpop.xlane.xlu0 %3291
        %v3293 = vrcp.pop %v3292
        %v3294 = vmul.f32 %v3289, %v3293
        %v3295 = vpack.c.bf16 %v3294, %v3294
        %3296 = vrot.lane.b32.xlu0 %v2926, 112
        %v3297 = vpop.permute.xlu0 %3296
        %v3300 = vsel %vm2973, %v3295, 0
        %3302 = vmatprep.subr.bf16.mxu0 0
        %3303 = vmatpush1.bf16.msra.mxu0 0
        %3304 = vmatprep.subr.bf16.mxu0 0
        %3305 = vmatpush1.bf16.msra.mxu0 0
        %3306 = vmatprep.subr.bf16.mxu0 0
        %3307 = vmatpush1.bf16.msra.mxu0 0
        %3308 = vmatprep.subr.bf16.mxu0 0
        %3309 = vmatpush1.bf16.msra.mxu0 0
        %3310 = vmatprep.subr.bf16.mxu0 0
        %3311 = vmatpush1.bf16.msra.mxu0 0
        %3312 = vmatprep.subr.bf16.mxu0 0
        %3313 = vmatpush1.bf16.msra.mxu0 0
        %3314 = vmatprep.subr.bf16.mxu0 0
        %3315 = vmatpush1.bf16.msra.mxu0 0
        %3316 = vmatprep.subr.bf16.mxu0 0
        %3317 = vmatpush1.bf16.msra.mxu0 %v3297
        %3318 = vmatprep.subr.bf16.mxu0 0
        %3319 = vmatpush2.bf16.msra.mxu0 0
        %3320 = vmatprep.subr.bf16.mxu0 0
        %3321 = vmatpush2.bf16.msra.mxu0 0
        %3322 = vmatprep.subr.bf16.mxu0 0
        %3323 = vmatpush2.bf16.msra.mxu0 0
        %3324 = vmatprep.subr.bf16.mxu0 0
        %3325 = vmatpush2.bf16.msra.mxu0 0
        %3326 = vmatprep.subr.bf16.mxu0 0
        %3327 = vmatpush2.bf16.msra.mxu0 0
        %3328 = vmatprep.subr.bf16.mxu0 0
        %3329 = vmatpush2.bf16.msra.mxu0 0
        %3330 = vmatprep.subr.bf16.mxu0 0
        %3331 = vmatpush2.bf16.msra.mxu0 0
        %3332 = vmatprep.subr.bf16.mxu0 0
        %3333 = vmatpush2.bf16.msra.mxu0 0
        %3334 = vmatprep.mubr.bf16.mxu0 0
        %3335 = vmatmul.mubr.bf16.gmra.mxu0 %v3300
        %v3336 = vpop.f32.mrf.mxu0
        %v3337 = vadd.f32 0.0, %v3336
        %v3338 = vpop.f32.mrf.mxu0
        %v3339 = vpop.f32.mrf.mxu0
        %v3340 = vpop.f32.mrf.mxu0
        %3341 = vdwg.mxu0
        %v3342 = vpack.c.bf16 %v3337, %v3337
        %v3344 = vsel %vm1388, %v3342, 0
        %v3347 = vsel %vm1450, %v2709, 0
        %3349 = vmatprep.subr.bf16.mxu0 0
        %3350 = vmatpush1.bf16.msra.mxu0 0
        %3351 = vmatprep.subr.bf16.mxu0 0
        %3352 = vmatpush1.bf16.msra.mxu0 0
        %3353 = vmatprep.subr.bf16.mxu0 0
        %3354 = vmatpush1.bf16.msra.mxu0 0
        %3355 = vmatprep.subr.bf16.mxu0 0
        %3356 = vmatpush1.bf16.msra.mxu0 0
        %3357 = vmatprep.subr.bf16.mxu0 0
        %3358 = vmatpush1.bf16.msra.mxu0 0
        %3359 = vmatprep.subr.bf16.mxu0 0
        %3360 = vmatpush1.bf16.msra.mxu0 0
        %3361 = vmatprep.subr.bf16.mxu0 0
        %3362 = vmatpush1.bf16.msra.mxu0 0
        %3363 = vmatprep.subr.bf16.mxu0 0
        %3364 = vmatpush1.bf16.msra.mxu0 %v3347
        %3365 = vmatprep.subr.bf16.mxu0 0
        %3366 = vmatpush2.bf16.msra.mxu0 0
        %3367 = vmatprep.subr.bf16.mxu0 0
        %3368 = vmatpush2.bf16.msra.mxu0 0
        %3369 = vmatprep.subr.bf16.mxu0 0
        %3370 = vmatpush2.bf16.msra.mxu0 0
        %3371 = vmatprep.subr.bf16.mxu0 0
        %3372 = vmatpush2.bf16.msra.mxu0 0
        %3373 = vmatprep.subr.bf16.mxu0 0
        %3374 = vmatpush2.bf16.msra.mxu0 0
        %3375 = vmatprep.subr.bf16.mxu0 0
        %3376 = vmatpush2.bf16.msra.mxu0 0
        %3377 = vmatprep.subr.bf16.mxu0 0
        %3378 = vmatpush2.bf16.msra.mxu0 0
        %3379 = vmatprep.subr.bf16.mxu0 0
        %3380 = vmatpush2.bf16.msra.mxu0 0
        %3381 = vmatprep.mubr.bf16.mxu0 0
        %3382 = vmatmul.mubr.bf16.gmra.mxu0 %v3344
        %v3383 = vpop.f32.mrf.mxu0
        %v3384 = vadd.f32 0.0, %v3383
        %v3385 = vpop.f32.mrf.mxu0
        %v3386 = vpop.f32.mrf.mxu0
        %v3387 = vpop.f32.mrf.mxu0
        %3388 = vdwg.mxu0
        %v3389 = vadd.f32 %v3229, %v3384
        %3390 = vrot.lane.b32.xlu0 %v2924, 104
        %v3391 = vpop.permute.xlu0 %3390
        %3392 = vrot.lane.b32.xlu0 %v2925, 104
        %v3393 = vpop.permute.xlu0 %3392
        %v3395 = vsel %vm1388, %v3391, 0
        %v3398 = vsel %vm1388, %v3393, 0
        %3400 = vmatprep.subr.bf16.mxu0 0
        %3401 = vmatpush1.bf16.xpose.msra.mxu0 0
        %3402 = vmatprep.subr.bf16.mxu0 0
        %3403 = vmatpush1.bf16.xpose.msra.mxu0 0
        %3404 = vmatprep.subr.bf16.mxu0 0
        %3405 = vmatpush1.bf16.xpose.msra.mxu0 0
        %3406 = vmatprep.subr.bf16.mxu0 0
        %3407 = vmatpush1.bf16.xpose.msra.mxu0 0
        %3408 = vmatprep.subr.bf16.mxu0 0
        %3409 = vmatpush1.bf16.xpose.msra.mxu0 0
        %3410 = vmatprep.subr.bf16.mxu0 0
        %3411 = vmatpush1.bf16.xpose.msra.mxu0 0
        %3412 = vmatprep.subr.bf16.mxu0 0
        %3413 = vmatpush1.bf16.xpose.msra.mxu0 0
        %3414 = vmatprep.subr.bf16.mxu0 0
        %3415 = vmatpush1.bf16.xpose.msra.mxu0 %v3398
        %3416 = vmatprep.subr.bf16.mxu0 0
        %3417 = vmatpush2.bf16.xpose.msra.mxu0 0
        %3418 = vmatprep.subr.bf16.mxu0 0
        %3419 = vmatpush2.bf16.xpose.msra.mxu0 0
        %3420 = vmatprep.subr.bf16.mxu0 0
        %3421 = vmatpush2.bf16.xpose.msra.mxu0 0
        %3422 = vmatprep.subr.bf16.mxu0 0
        %3423 = vmatpush2.bf16.xpose.msra.mxu0 0
        %3424 = vmatprep.subr.bf16.mxu0 0
        %3425 = vmatpush2.bf16.xpose.msra.mxu0 0
        %3426 = vmatprep.subr.bf16.mxu0 0
        %3427 = vmatpush2.bf16.xpose.msra.mxu0 0
        %3428 = vmatprep.subr.bf16.mxu0 0
        %3429 = vmatpush2.bf16.xpose.msra.mxu0 0
        %3430 = vmatprep.subr.bf16.mxu0 0
        %3431 = vmatpush2.bf16.xpose.msra.mxu0 0
        %3432 = vmatprep.mubr.bf16.mxu0 0
        %3433 = vmatmul.mubr.bf16.gmra.mxu0 %v3395
        %v3434 = vpop.f32.mrf.mxu0
        %v3435 = vadd.f32 %v2923, %v3434
        %v3436 = vpop.f32.mrf.mxu0
        %v3437 = vpop.f32.mrf.mxu0
        %v3438 = vpop.f32.mrf.mxu0
        %3439 = vdwg.mxu0
        %v3440 = vsel %vm2973, %v3435, -inf
        %3441 = vmax.xlane.f32.xlu0 %v3440
        %v3442 = vpop.xlane.xlu0 %3441
        %v3443 = vsub.f32 %v3435, %v3442
        %v3444 = vmul.f32 %v3443, 1.442695
        %v3445 = vpow.pop %v3444
        %v3446 = vsel %vm2973, %v3445, 0.0
        %3447 = vadd.xlane.f32.xlu0 %v3446
        %v3448 = vpop.xlane.xlu0 %3447
        %v3449 = vrcp.pop %v3448
        %v3450 = vmul.f32 %v3445, %v3449
        %v3451 = vpack.c.bf16 %v3450, %v3450
        %3452 = vrot.lane.b32.xlu0 %v2926, 104
        %v3453 = vpop.permute.xlu0 %3452
        %v3456 = vsel %vm2973, %v3451, 0
        %3458 = vmatprep.subr.bf16.mxu0 0
        %3459 = vmatpush1.bf16.msra.mxu0 0
        %3460 = vmatprep.subr.bf16.mxu0 0
        %3461 = vmatpush1.bf16.msra.mxu0 0
        %3462 = vmatprep.subr.bf16.mxu0 0
        %3463 = vmatpush1.bf16.msra.mxu0 0
        %3464 = vmatprep.subr.bf16.mxu0 0
        %3465 = vmatpush1.bf16.msra.mxu0 0
        %3466 = vmatprep.subr.bf16.mxu0 0
        %3467 = vmatpush1.bf16.msra.mxu0 0
        %3468 = vmatprep.subr.bf16.mxu0 0
        %3469 = vmatpush1.bf16.msra.mxu0 0
        %3470 = vmatprep.subr.bf16.mxu0 0
        %3471 = vmatpush1.bf16.msra.mxu0 0
        %3472 = vmatprep.subr.bf16.mxu0 0
        %3473 = vmatpush1.bf16.msra.mxu0 %v3453
        %3474 = vmatprep.subr.bf16.mxu0 0
        %3475 = vmatpush2.bf16.msra.mxu0 0
        %3476 = vmatprep.subr.bf16.mxu0 0
        %3477 = vmatpush2.bf16.msra.mxu0 0
        %3478 = vmatprep.subr.bf16.mxu0 0
        %3479 = vmatpush2.bf16.msra.mxu0 0
        %3480 = vmatprep.subr.bf16.mxu0 0
        %3481 = vmatpush2.bf16.msra.mxu0 0
        %3482 = vmatprep.subr.bf16.mxu0 0
        %3483 = vmatpush2.bf16.msra.mxu0 0
        %3484 = vmatprep.subr.bf16.mxu0 0
        %3485 = vmatpush2.bf16.msra.mxu0 0
        %3486 = vmatprep.subr.bf16.mxu0 0
        %3487 = vmatpush2.bf16.msra.mxu0 0
        %3488 = vmatprep.subr.bf16.mxu0 0
        %3489 = vmatpush2.bf16.msra.mxu0 0
        %3490 = vmatprep.mubr.bf16.mxu0 0
        %3491 = vmatmul.mubr.bf16.gmra.mxu0 %v3456
        %v3492 = vpop.f32.mrf.mxu0
        %v3493 = vadd.f32 0.0, %v3492
        %v3494 = vpop.f32.mrf.mxu0
        %v3495 = vpop.f32.mrf.mxu0
        %v3496 = vpop.f32.mrf.mxu0
        %3497 = vdwg.mxu0
        %v3498 = vpack.c.bf16 %v3493, %v3493
        %v3500 = vsel %vm1388, %v3498, 0
        %v3503 = vsel %vm1450, %v2710, 0
        %3505 = vmatprep.subr.bf16.mxu0 0
        %3506 = vmatpush1.bf16.msra.mxu0 0
        %3507 = vmatprep.subr.bf16.mxu0 0
        %3508 = vmatpush1.bf16.msra.mxu0 0
        %3509 = vmatprep.subr.bf16.mxu0 0
        %3510 = vmatpush1.bf16.msra.mxu0 0
        %3511 = vmatprep.subr.bf16.mxu0 0
        %3512 = vmatpush1.bf16.msra.mxu0 0
        %3513 = vmatprep.subr.bf16.mxu0 0
        %3514 = vmatpush1.bf16.msra.mxu0 0
        %3515 = vmatprep.subr.bf16.mxu0 0
        %3516 = vmatpush1.bf16.msra.mxu0 0
        %3517 = vmatprep.subr.bf16.mxu0 0
        %3518 = vmatpush1.bf16.msra.mxu0 0
        %3519 = vmatprep.subr.bf16.mxu0 0
        %3520 = vmatpush1.bf16.msra.mxu0 %v3503
        %3521 = vmatprep.subr.bf16.mxu0 0
        %3522 = vmatpush2.bf16.msra.mxu0 0
        %3523 = vmatprep.subr.bf16.mxu0 0
        %3524 = vmatpush2.bf16.msra.mxu0 0
        %3525 = vmatprep.subr.bf16.mxu0 0
        %3526 = vmatpush2.bf16.msra.mxu0 0
        %3527 = vmatprep.subr.bf16.mxu0 0
        %3528 = vmatpush2.bf16.msra.mxu0 0
        %3529 = vmatprep.subr.bf16.mxu0 0
        %3530 = vmatpush2.bf16.msra.mxu0 0
        %3531 = vmatprep.subr.bf16.mxu0 0
        %3532 = vmatpush2.bf16.msra.mxu0 0
        %3533 = vmatprep.subr.bf16.mxu0 0
        %3534 = vmatpush2.bf16.msra.mxu0 0
        %3535 = vmatprep.subr.bf16.mxu0 0
        %3536 = vmatpush2.bf16.msra.mxu0 0
        %3537 = vmatprep.mubr.bf16.mxu0 0
        %3538 = vmatmul.mubr.bf16.gmra.mxu0 %v3500
        %v3539 = vpop.f32.mrf.mxu0
        %v3540 = vadd.f32 0.0, %v3539
        %v3541 = vpop.f32.mrf.mxu0
        %v3542 = vpop.f32.mrf.mxu0
        %v3543 = vpop.f32.mrf.mxu0
        %3544 = vdwg.mxu0
        %v3545 = vadd.f32 %v3389, %v3540
        %s3546 = scalar_lea.vmem %s1012, 8 [#allocation7]
        %v3547 = vld [vmem:[%s3546] sm:$0xff]
        %vm3548 = vcmp.gt.f32.partialorder %v3547, 0.0
        %v3549 = vsel %vm3548, 0.0, -1e+09
        %v3550 = vpack.c.bf16 %v2778, %v2778
        %v3551 = vpack.c.bf16 %v2851, %v2848
        %v3552 = vpack.c.bf16 %v2918, %v2915
        %v3554 = vsel %vm1388, %v3550, 0
        %v3557 = vsel %vm1388, %v3551, 0
        %3559 = vmatprep.subr.bf16.mxu0 0
        %3560 = vmatpush1.bf16.xpose.msra.mxu0 0
        %3561 = vmatprep.subr.bf16.mxu0 0
        %3562 = vmatpush1.bf16.xpose.msra.mxu0 0
        %3563 = vmatprep.subr.bf16.mxu0 0
        %3564 = vmatpush1.bf16.xpose.msra.mxu0 0
        %3565 = vmatprep.subr.bf16.mxu0 0
        %3566 = vmatpush1.bf16.xpose.msra.mxu0 0
        %3567 = vmatprep.subr.bf16.mxu0 0
        %3568 = vmatpush1.bf16.xpose.msra.mxu0 0
        %3569 = vmatprep.subr.bf16.mxu0 0
        %3570 = vmatpush1.bf16.xpose.msra.mxu0 0
        %3571 = vmatprep.subr.bf16.mxu0 0
        %3572 = vmatpush1.bf16.xpose.msra.mxu0 0
        %3573 = vmatprep.subr.bf16.mxu0 0
        %3574 = vmatpush1.bf16.xpose.msra.mxu0 %v3557
        %3575 = vmatprep.subr.bf16.mxu0 0
        %3576 = vmatpush2.bf16.xpose.msra.mxu0 0
        %3577 = vmatprep.subr.bf16.mxu0 0
        %3578 = vmatpush2.bf16.xpose.msra.mxu0 0
        %3579 = vmatprep.subr.bf16.mxu0 0
        %3580 = vmatpush2.bf16.xpose.msra.mxu0 0
        %3581 = vmatprep.subr.bf16.mxu0 0
        %3582 = vmatpush2.bf16.xpose.msra.mxu0 0
        %3583 = vmatprep.subr.bf16.mxu0 0
        %3584 = vmatpush2.bf16.xpose.msra.mxu0 0
        %3585 = vmatprep.subr.bf16.mxu0 0
        %3586 = vmatpush2.bf16.xpose.msra.mxu0 0
        %3587 = vmatprep.subr.bf16.mxu0 0
        %3588 = vmatpush2.bf16.xpose.msra.mxu0 0
        %3589 = vmatprep.subr.bf16.mxu0 0
        %3590 = vmatpush2.bf16.xpose.msra.mxu0 0
        %3591 = vmatprep.mubr.bf16.mxu0 0
        %3592 = vmatmul.mubr.bf16.gmra.mxu0 %v3554
        %v3593 = vpop.f32.mrf.mxu0
        %v3594 = vadd.f32 %v3549, %v3593
        %v3595 = vpop.f32.mrf.mxu0
        %v3596 = vpop.f32.mrf.mxu0
        %v3597 = vpop.f32.mrf.mxu0
        %3598 = vdwg.mxu0
        %v3599 = vsel %vm2973, %v3594, -inf
        %3600 = vmax.xlane.f32.xlu0 %v3599
        %v3601 = vpop.xlane.xlu0 %3600
        %v3602 = vsub.f32 %v3594, %v3601
        %v3603 = vmul.f32 %v3602, 1.442695
        %v3604 = vpow.pop %v3603
        %v3605 = vsel %vm2973, %v3604, 0.0
        %3606 = vadd.xlane.f32.xlu0 %v3605
        %v3607 = vpop.xlane.xlu0 %3606
        %v3608 = vrcp.pop %v3607
        %v3609 = vmul.f32 %v3604, %v3608
        %v3610 = vpack.c.bf16 %v3609, %v3609
        %v3612 = vsel %vm2973, %v3610, 0
        %3614 = vmatprep.subr.bf16.mxu0 0
        %3615 = vmatpush1.bf16.msra.mxu0 0
        %3616 = vmatprep.subr.bf16.mxu0 0
        %3617 = vmatpush1.bf16.msra.mxu0 0
        %3618 = vmatprep.subr.bf16.mxu0 0
        %3619 = vmatpush1.bf16.msra.mxu0 0
        %3620 = vmatprep.subr.bf16.mxu0 0
        %3621 = vmatpush1.bf16.msra.mxu0 0
        %3622 = vmatprep.subr.bf16.mxu0 0
        %3623 = vmatpush1.bf16.msra.mxu0 0
        %3624 = vmatprep.subr.bf16.mxu0 0
        %3625 = vmatpush1.bf16.msra.mxu0 0
        %3626 = vmatprep.subr.bf16.mxu0 0
        %3627 = vmatpush1.bf16.msra.mxu0 0
        %3628 = vmatprep.subr.bf16.mxu0 0
        %3629 = vmatpush1.bf16.msra.mxu0 %v3552
        %3630 = vmatprep.subr.bf16.mxu0 0
        %3631 = vmatpush2.bf16.msra.mxu0 0
        %3632 = vmatprep.subr.bf16.mxu0 0
        %3633 = vmatpush2.bf16.msra.mxu0 0
        %3634 = vmatprep.subr.bf16.mxu0 0
        %3635 = vmatpush2.bf16.msra.mxu0 0
        %3636 = vmatprep.subr.bf16.mxu0 0
        %3637 = vmatpush2.bf16.msra.mxu0 0
        %3638 = vmatprep.subr.bf16.mxu0 0
        %3639 = vmatpush2.bf16.msra.mxu0 0
        %3640 = vmatprep.subr.bf16.mxu0 0
        %3641 = vmatpush2.bf16.msra.mxu0 0
        %3642 = vmatprep.subr.bf16.mxu0 0
        %3643 = vmatpush2.bf16.msra.mxu0 0
        %3644 = vmatprep.subr.bf16.mxu0 0
        %3645 = vmatpush2.bf16.msra.mxu0 0
        %3646 = vmatprep.mubr.bf16.mxu0 0
        %3647 = vmatmul.mubr.bf16.gmra.mxu0 %v3612
        %v3648 = vpop.f32.mrf.mxu0
        %v3649 = vadd.f32 0.0, %v3648
        %v3650 = vpop.f32.mrf.mxu0
        %v3651 = vpop.f32.mrf.mxu0
        %v3652 = vpop.f32.mrf.mxu0
        %3653 = vdwg.mxu0
        %v3654 = vpack.c.bf16 %v3649, %v3649
        %3656 = vrot.lane.b32.xlu0 %v3550, 120
        %v3657 = vpop.permute.xlu0 %3656
        %3659 = vrot.lane.b32.xlu0 %v3551, 120
        %v3660 = vpop.permute.xlu0 %3659
        %v3662 = vsel %vm1388, %v3657, 0
        %v3665 = vsel %vm1388, %v3660, 0
        %3667 = vmatprep.subr.bf16.mxu0 0
        %3668 = vmatpush1.bf16.xpose.msra.mxu0 0
        %3669 = vmatprep.subr.bf16.mxu0 0
        %3670 = vmatpush1.bf16.xpose.msra.mxu0 0
        %3671 = vmatprep.subr.bf16.mxu0 0
        %3672 = vmatpush1.bf16.xpose.msra.mxu0 0
        %3673 = vmatprep.subr.bf16.mxu0 0
        %3674 = vmatpush1.bf16.xpose.msra.mxu0 0
        %3675 = vmatprep.subr.bf16.mxu0 0
        %3676 = vmatpush1.bf16.xpose.msra.mxu0 0
        %3677 = vmatprep.subr.bf16.mxu0 0
        %3678 = vmatpush1.bf16.xpose.msra.mxu0 0
        %3679 = vmatprep.subr.bf16.mxu0 0
        %3680 = vmatpush1.bf16.xpose.msra.mxu0 0
        %3681 = vmatprep.subr.bf16.mxu0 0
        %3682 = vmatpush1.bf16.xpose.msra.mxu0 %v3665
        %3683 = vmatprep.subr.bf16.mxu0 0
        %3684 = vmatpush2.bf16.xpose.msra.mxu0 0
        %3685 = vmatprep.subr.bf16.mxu0 0
        %3686 = vmatpush2.bf16.xpose.msra.mxu0 0
        %3687 = vmatprep.subr.bf16.mxu0 0
        %3688 = vmatpush2.bf16.xpose.msra.mxu0 0
        %3689 = vmatprep.subr.bf16.mxu0 0
        %3690 = vmatpush2.bf16.xpose.msra.mxu0 0
        %3691 = vmatprep.subr.bf16.mxu0 0
        %3692 = vmatpush2.bf16.xpose.msra.mxu0 0
        %3693 = vmatprep.subr.bf16.mxu0 0
        %3694 = vmatpush2.bf16.xpose.msra.mxu0 0
        %3695 = vmatprep.subr.bf16.mxu0 0
        %3696 = vmatpush2.bf16.xpose.msra.mxu0 0
        %3697 = vmatprep.subr.bf16.mxu0 0
        %3698 = vmatpush2.bf16.xpose.msra.mxu0 0
        %3699 = vmatprep.mubr.bf16.mxu0 0
        %3700 = vmatmul.mubr.bf16.gmra.mxu0 %v3662
        %v3701 = vpop.f32.mrf.mxu0
        %v3702 = vadd.f32 %v3549, %v3701
        %v3703 = vpop.f32.mrf.mxu0
        %v3704 = vpop.f32.mrf.mxu0
        %v3705 = vpop.f32.mrf.mxu0
        %3706 = vdwg.mxu0
        %v3707 = vsel %vm2973, %v3702, -inf
        %3708 = vmax.xlane.f32.xlu0 %v3707
        %v3709 = vpop.xlane.xlu0 %3708
        %v3710 = vsub.f32 %v3702, %v3709
        %v3711 = vmul.f32 %v3710, 1.442695
        %v3712 = vpow.pop %v3711
        %v3713 = vsel %vm2973, %v3712, 0.0
        %3714 = vadd.xlane.f32.xlu0 %v3713
        %v3715 = vpop.xlane.xlu0 %3714
        %v3716 = vrcp.pop %v3715
        %v3717 = vmul.f32 %v3712, %v3716
        %v3718 = vpack.c.bf16 %v3717, %v3717
        %3720 = vrot.lane.b32.xlu0 %v3552, 120
        %v3721 = vpop.permute.xlu0 %3720
        %v3724 = vsel %vm2973, %v3718, 0
        %3726 = vmatprep.subr.bf16.mxu0 0
        %3727 = vmatpush1.bf16.msra.mxu0 0
        %3728 = vmatprep.subr.bf16.mxu0 0
        %3729 = vmatpush1.bf16.msra.mxu0 0
        %3730 = vmatprep.subr.bf16.mxu0 0
        %3731 = vmatpush1.bf16.msra.mxu0 0
        %3732 = vmatprep.subr.bf16.mxu0 0
        %3733 = vmatpush1.bf16.msra.mxu0 0
        %3734 = vmatprep.subr.bf16.mxu0 0
        %3735 = vmatpush1.bf16.msra.mxu0 0
        %3736 = vmatprep.subr.bf16.mxu0 0
        %3737 = vmatpush1.bf16.msra.mxu0 0
        %3738 = vmatprep.subr.bf16.mxu0 0
        %3739 = vmatpush1.bf16.msra.mxu0 0
        %3740 = vmatprep.subr.bf16.mxu0 0
        %3741 = vmatpush1.bf16.msra.mxu0 %v3721
        %3742 = vmatprep.subr.bf16.mxu0 0
        %3743 = vmatpush2.bf16.msra.mxu0 0
        %3744 = vmatprep.subr.bf16.mxu0 0
        %3745 = vmatpush2.bf16.msra.mxu0 0
        %3746 = vmatprep.subr.bf16.mxu0 0
        %3747 = vmatpush2.bf16.msra.mxu0 0
        %3748 = vmatprep.subr.bf16.mxu0 0
        %3749 = vmatpush2.bf16.msra.mxu0 0
        %3750 = vmatprep.subr.bf16.mxu0 0
        %3751 = vmatpush2.bf16.msra.mxu0 0
        %3752 = vmatprep.subr.bf16.mxu0 0
        %3753 = vmatpush2.bf16.msra.mxu0 0
        %3754 = vmatprep.subr.bf16.mxu0 0
        %3755 = vmatpush2.bf16.msra.mxu0 0
        %3756 = vmatprep.subr.bf16.mxu0 0
        %3757 = vmatpush2.bf16.msra.mxu0 0
        %3758 = vmatprep.mubr.bf16.mxu0 0
        %3759 = vmatmul.mubr.bf16.gmra.mxu0 %v3724
        %v3760 = vpop.f32.mrf.mxu0
        %v3761 = vadd.f32 0.0, %v3760
        %v3762 = vpop.f32.mrf.mxu0
        %v3763 = vpop.f32.mrf.mxu0
        %v3764 = vpop.f32.mrf.mxu0
        %3765 = vdwg.mxu0
        %v3766 = vpack.c.bf16 %v3761, %v3761
        %v3768 = vsel %vm1388, %v3766, 0
        %3770 = vmatprep.subr.bf16.mxu0 0
        %3771 = vmatpush1.bf16.msra.mxu0 0
        %3772 = vmatprep.subr.bf16.mxu0 0
        %3773 = vmatpush1.bf16.msra.mxu0 0
        %3774 = vmatprep.subr.bf16.mxu0 0
        %3775 = vmatpush1.bf16.msra.mxu0 0
        %3776 = vmatprep.subr.bf16.mxu0 0
        %3777 = vmatpush1.bf16.msra.mxu0 0
        %3778 = vmatprep.subr.bf16.mxu0 0
        %3779 = vmatpush1.bf16.msra.mxu0 0
        %3780 = vmatprep.subr.bf16.mxu0 0
        %3781 = vmatpush1.bf16.msra.mxu0 0
        %3782 = vmatprep.subr.bf16.mxu0 0
        %3783 = vmatpush1.bf16.msra.mxu0 0
        %3784 = vmatprep.subr.bf16.mxu0 0
        %3785 = vmatpush1.bf16.msra.mxu0 %v3146
        %3786 = vmatprep.subr.bf16.mxu0 0
        %3787 = vmatpush2.bf16.msra.mxu0 0
        %3788 = vmatprep.subr.bf16.mxu0 0
        %3789 = vmatpush2.bf16.msra.mxu0 0
        %3790 = vmatprep.subr.bf16.mxu0 0
        %3791 = vmatpush2.bf16.msra.mxu0 0
        %3792 = vmatprep.subr.bf16.mxu0 0
        %3793 = vmatpush2.bf16.msra.mxu0 0
        %3794 = vmatprep.subr.bf16.mxu0 0
        %3795 = vmatpush2.bf16.msra.mxu0 0
        %3796 = vmatprep.subr.bf16.mxu0 0
        %3797 = vmatpush2.bf16.msra.mxu0 0
        %3798 = vmatprep.subr.bf16.mxu0 0
        %3799 = vmatpush2.bf16.msra.mxu0 0
        %3800 = vmatprep.subr.bf16.mxu0 0
        %3801 = vmatpush2.bf16.msra.mxu0 0
        %3802 = vmatprep.mubr.bf16.mxu0 0
        %3803 = vmatmul.mubr.bf16.gmra.mxu0 %v3768
        %v3804 = vpop.f32.mrf.mxu0
        %v3805 = vadd.f32 0.0, %v3804
        %v3806 = vpop.f32.mrf.mxu0
        %v3807 = vpop.f32.mrf.mxu0
        %v3808 = vpop.f32.mrf.mxu0
        %3809 = vdwg.mxu0
        %v3811 = vsel %vm1388, %v3654, 0
        %3813 = vmatprep.subr.bf16.mxu0 0
        %3814 = vmatpush1.bf16.msra.mxu0 0
        %3815 = vmatprep.subr.bf16.mxu0 0
        %3816 = vmatpush1.bf16.msra.mxu0 0
        %3817 = vmatprep.subr.bf16.mxu0 0
        %3818 = vmatpush1.bf16.msra.mxu0 0
        %3819 = vmatprep.subr.bf16.mxu0 0
        %3820 = vmatpush1.bf16.msra.mxu0 0
        %3821 = vmatprep.subr.bf16.mxu0 0
        %3822 = vmatpush1.bf16.msra.mxu0 0
        %3823 = vmatprep.subr.bf16.mxu0 0
        %3824 = vmatpush1.bf16.msra.mxu0 0
        %3825 = vmatprep.subr.bf16.mxu0 0
        %3826 = vmatpush1.bf16.msra.mxu0 0
        %3827 = vmatprep.subr.bf16.mxu0 0
        %3828 = vmatpush1.bf16.msra.mxu0 %v3192
        %3829 = vmatprep.subr.bf16.mxu0 0
        %3830 = vmatpush2.bf16.msra.mxu0 0
        %3831 = vmatprep.subr.bf16.mxu0 0
        %3832 = vmatpush2.bf16.msra.mxu0 0
        %3833 = vmatprep.subr.bf16.mxu0 0
        %3834 = vmatpush2.bf16.msra.mxu0 0
        %3835 = vmatprep.subr.bf16.mxu0 0
        %3836 = vmatpush2.bf16.msra.mxu0 0
        %3837 = vmatprep.subr.bf16.mxu0 0
        %3838 = vmatpush2.bf16.msra.mxu0 0
        %3839 = vmatprep.subr.bf16.mxu0 0
        %3840 = vmatpush2.bf16.msra.mxu0 0
        %3841 = vmatprep.subr.bf16.mxu0 0
        %3842 = vmatpush2.bf16.msra.mxu0 0
        %3843 = vmatprep.subr.bf16.mxu0 0
        %3844 = vmatpush2.bf16.msra.mxu0 0
        %3845 = vmatprep.mubr.bf16.mxu0 0
        %3846 = vmatmul.mubr.bf16.gmra.mxu0 %v3811
        %v3847 = vpop.f32.mrf.mxu0
        %v3848 = vadd.f32 %v3805, %v3847
        %v3849 = vpop.f32.mrf.mxu0
        %v3850 = vpop.f32.mrf.mxu0
        %v3851 = vpop.f32.mrf.mxu0
        %3852 = vdwg.mxu0
        %3853 = vrot.lane.b32.xlu0 %v3550, 112
        %v3854 = vpop.permute.xlu0 %3853
        %3855 = vrot.lane.b32.xlu0 %v3551, 112
        %v3856 = vpop.permute.xlu0 %3855
        %v3858 = vsel %vm1388, %v3854, 0
        %v3861 = vsel %vm1388, %v3856, 0
        %3863 = vmatprep.subr.bf16.mxu0 0
        %3864 = vmatpush1.bf16.xpose.msra.mxu0 0
        %3865 = vmatprep.subr.bf16.mxu0 0
        %3866 = vmatpush1.bf16.xpose.msra.mxu0 0
        %3867 = vmatprep.subr.bf16.mxu0 0
        %3868 = vmatpush1.bf16.xpose.msra.mxu0 0
        %3869 = vmatprep.subr.bf16.mxu0 0
        %3870 = vmatpush1.bf16.xpose.msra.mxu0 0
        %3871 = vmatprep.subr.bf16.mxu0 0
        %3872 = vmatpush1.bf16.xpose.msra.mxu0 0
        %3873 = vmatprep.subr.bf16.mxu0 0
        %3874 = vmatpush1.bf16.xpose.msra.mxu0 0
        %3875 = vmatprep.subr.bf16.mxu0 0
        %3876 = vmatpush1.bf16.xpose.msra.mxu0 0
        %3877 = vmatprep.subr.bf16.mxu0 0
        %3878 = vmatpush1.bf16.xpose.msra.mxu0 %v3861
        %3879 = vmatprep.subr.bf16.mxu0 0
        %3880 = vmatpush2.bf16.xpose.msra.mxu0 0
        %3881 = vmatprep.subr.bf16.mxu0 0
        %3882 = vmatpush2.bf16.xpose.msra.mxu0 0
        %3883 = vmatprep.subr.bf16.mxu0 0
        %3884 = vmatpush2.bf16.xpose.msra.mxu0 0
        %3885 = vmatprep.subr.bf16.mxu0 0
        %3886 = vmatpush2.bf16.xpose.msra.mxu0 0
        %3887 = vmatprep.subr.bf16.mxu0 0
        %3888 = vmatpush2.bf16.xpose.msra.mxu0 0
        %3889 = vmatprep.subr.bf16.mxu0 0
        %3890 = vmatpush2.bf16.xpose.msra.mxu0 0
        %3891 = vmatprep.subr.bf16.mxu0 0
        %3892 = vmatpush2.bf16.xpose.msra.mxu0 0
        %3893 = vmatprep.subr.bf16.mxu0 0
        %3894 = vmatpush2.bf16.xpose.msra.mxu0 0
        %3895 = vmatprep.mubr.bf16.mxu0 0
        %3896 = vmatmul.mubr.bf16.gmra.mxu0 %v3858
        %v3897 = vpop.f32.mrf.mxu0
        %v3898 = vadd.f32 %v3549, %v3897
        %v3899 = vpop.f32.mrf.mxu0
        %v3900 = vpop.f32.mrf.mxu0
        %v3901 = vpop.f32.mrf.mxu0
        %3902 = vdwg.mxu0
        %v3903 = vsel %vm2973, %v3898, -inf
        %3904 = vmax.xlane.f32.xlu0 %v3903
        %v3905 = vpop.xlane.xlu0 %3904
        %v3906 = vsub.f32 %v3898, %v3905
        %v3907 = vmul.f32 %v3906, 1.442695
        %v3908 = vpow.pop %v3907
        %v3909 = vsel %vm2973, %v3908, 0.0
        %3910 = vadd.xlane.f32.xlu0 %v3909
        %v3911 = vpop.xlane.xlu0 %3910
        %v3912 = vrcp.pop %v3911
        %v3913 = vmul.f32 %v3908, %v3912
        %v3914 = vpack.c.bf16 %v3913, %v3913
        %3915 = vrot.lane.b32.xlu0 %v3552, 112
        %v3916 = vpop.permute.xlu0 %3915
        %v3919 = vsel %vm2973, %v3914, 0
        %3921 = vmatprep.subr.bf16.mxu0 0
        %3922 = vmatpush1.bf16.msra.mxu0 0
        %3923 = vmatprep.subr.bf16.mxu0 0
        %3924 = vmatpush1.bf16.msra.mxu0 0
        %3925 = vmatprep.subr.bf16.mxu0 0
        %3926 = vmatpush1.bf16.msra.mxu0 0
        %3927 = vmatprep.subr.bf16.mxu0 0
        %3928 = vmatpush1.bf16.msra.mxu0 0
        %3929 = vmatprep.subr.bf16.mxu0 0
        %3930 = vmatpush1.bf16.msra.mxu0 0
        %3931 = vmatprep.subr.bf16.mxu0 0
        %3932 = vmatpush1.bf16.msra.mxu0 0
        %3933 = vmatprep.subr.bf16.mxu0 0
        %3934 = vmatpush1.bf16.msra.mxu0 0
        %3935 = vmatprep.subr.bf16.mxu0 0
        %3936 = vmatpush1.bf16.msra.mxu0 %v3916
        %3937 = vmatprep.subr.bf16.mxu0 0
        %3938 = vmatpush2.bf16.msra.mxu0 0
        %3939 = vmatprep.subr.bf16.mxu0 0
        %3940 = vmatpush2.bf16.msra.mxu0 0
        %3941 = vmatprep.subr.bf16.mxu0 0
        %3942 = vmatpush2.bf16.msra.mxu0 0
        %3943 = vmatprep.subr.bf16.mxu0 0
        %3944 = vmatpush2.bf16.msra.mxu0 0
        %3945 = vmatprep.subr.bf16.mxu0 0
        %3946 = vmatpush2.bf16.msra.mxu0 0
        %3947 = vmatprep.subr.bf16.mxu0 0
        %3948 = vmatpush2.bf16.msra.mxu0 0
        %3949 = vmatprep.subr.bf16.mxu0 0
        %3950 = vmatpush2.bf16.msra.mxu0 0
        %3951 = vmatprep.subr.bf16.mxu0 0
        %3952 = vmatpush2.bf16.msra.mxu0 0
        %3953 = vmatprep.mubr.bf16.mxu0 0
        %3954 = vmatmul.mubr.bf16.gmra.mxu0 %v3919
        %v3955 = vpop.f32.mrf.mxu0
        %v3956 = vadd.f32 0.0, %v3955
        %v3957 = vpop.f32.mrf.mxu0
        %v3958 = vpop.f32.mrf.mxu0
        %v3959 = vpop.f32.mrf.mxu0
        %3960 = vdwg.mxu0
        %v3961 = vpack.c.bf16 %v3956, %v3956
        %v3963 = vsel %vm1388, %v3961, 0
        %3965 = vmatprep.subr.bf16.mxu0 0
        %3966 = vmatpush1.bf16.msra.mxu0 0
        %3967 = vmatprep.subr.bf16.mxu0 0
        %3968 = vmatpush1.bf16.msra.mxu0 0
        %3969 = vmatprep.subr.bf16.mxu0 0
        %3970 = vmatpush1.bf16.msra.mxu0 0
        %3971 = vmatprep.subr.bf16.mxu0 0
        %3972 = vmatpush1.bf16.msra.mxu0 0
        %3973 = vmatprep.subr.bf16.mxu0 0
        %3974 = vmatpush1.bf16.msra.mxu0 0
        %3975 = vmatprep.subr.bf16.mxu0 0
        %3976 = vmatpush1.bf16.msra.mxu0 0
        %3977 = vmatprep.subr.bf16.mxu0 0
        %3978 = vmatpush1.bf16.msra.mxu0 0
        %3979 = vmatprep.subr.bf16.mxu0 0
        %3980 = vmatpush1.bf16.msra.mxu0 %v3347
        %3981 = vmatprep.subr.bf16.mxu0 0
        %3982 = vmatpush2.bf16.msra.mxu0 0
        %3983 = vmatprep.subr.bf16.mxu0 0
        %3984 = vmatpush2.bf16.msra.mxu0 0
        %3985 = vmatprep.subr.bf16.mxu0 0
        %3986 = vmatpush2.bf16.msra.mxu0 0
        %3987 = vmatprep.subr.bf16.mxu0 0
        %3988 = vmatpush2.bf16.msra.mxu0 0
        %3989 = vmatprep.subr.bf16.mxu0 0
        %3990 = vmatpush2.bf16.msra.mxu0 0
        %3991 = vmatprep.subr.bf16.mxu0 0
        %3992 = vmatpush2.bf16.msra.mxu0 0
        %3993 = vmatprep.subr.bf16.mxu0 0
        %3994 = vmatpush2.bf16.msra.mxu0 0
        %3995 = vmatprep.subr.bf16.mxu0 0
        %3996 = vmatpush2.bf16.msra.mxu0 0
        %3997 = vmatprep.mubr.bf16.mxu0 0
        %3998 = vmatmul.mubr.bf16.gmra.mxu0 %v3963
        %v3999 = vpop.f32.mrf.mxu0
        %v4000 = vadd.f32 0.0, %v3999
        %v4001 = vpop.f32.mrf.mxu0
        %v4002 = vpop.f32.mrf.mxu0
        %v4003 = vpop.f32.mrf.mxu0
        %4004 = vdwg.mxu0
        %v4005 = vadd.f32 %v3848, %v4000
        %4006 = vrot.lane.b32.xlu0 %v3550, 104
        %v4007 = vpop.permute.xlu0 %4006
        %4008 = vrot.lane.b32.xlu0 %v3551, 104
        %v4009 = vpop.permute.xlu0 %4008
        %v4011 = vsel %vm1388, %v4007, 0
        %v4014 = vsel %vm1388, %v4009, 0
        %4016 = vmatprep.subr.bf16.mxu0 0
        %4017 = vmatpush1.bf16.xpose.msra.mxu0 0
        %4018 = vmatprep.subr.bf16.mxu0 0
        %4019 = vmatpush1.bf16.xpose.msra.mxu0 0
        %4020 = vmatprep.subr.bf16.mxu0 0
        %4021 = vmatpush1.bf16.xpose.msra.mxu0 0
        %4022 = vmatprep.subr.bf16.mxu0 0
        %4023 = vmatpush1.bf16.xpose.msra.mxu0 0
        %4024 = vmatprep.subr.bf16.mxu0 0
        %4025 = vmatpush1.bf16.xpose.msra.mxu0 0
        %4026 = vmatprep.subr.bf16.mxu0 0
        %4027 = vmatpush1.bf16.xpose.msra.mxu0 0
        %4028 = vmatprep.subr.bf16.mxu0 0
        %4029 = vmatpush1.bf16.xpose.msra.mxu0 0
        %4030 = vmatprep.subr.bf16.mxu0 0
        %4031 = vmatpush1.bf16.xpose.msra.mxu0 %v4014
        %4032 = vmatprep.subr.bf16.mxu0 0
        %4033 = vmatpush2.bf16.xpose.msra.mxu0 0
        %4034 = vmatprep.subr.bf16.mxu0 0
        %4035 = vmatpush2.bf16.xpose.msra.mxu0 0
        %4036 = vmatprep.subr.bf16.mxu0 0
        %4037 = vmatpush2.bf16.xpose.msra.mxu0 0
        %4038 = vmatprep.subr.bf16.mxu0 0
        %4039 = vmatpush2.bf16.xpose.msra.mxu0 0
        %4040 = vmatprep.subr.bf16.mxu0 0
        %4041 = vmatpush2.bf16.xpose.msra.mxu0 0
        %4042 = vmatprep.subr.bf16.mxu0 0
        %4043 = vmatpush2.bf16.xpose.msra.mxu0 0
        %4044 = vmatprep.subr.bf16.mxu0 0
        %4045 = vmatpush2.bf16.xpose.msra.mxu0 0
        %4046 = vmatprep.subr.bf16.mxu0 0
        %4047 = vmatpush2.bf16.xpose.msra.mxu0 0
        %4048 = vmatprep.mubr.bf16.mxu0 0
        %4049 = vmatmul.mubr.bf16.gmra.mxu0 %v4011
        %v4050 = vpop.f32.mrf.mxu0
        %v4051 = vadd.f32 %v3549, %v4050
        %v4052 = vpop.f32.mrf.mxu0
        %v4053 = vpop.f32.mrf.mxu0
        %v4054 = vpop.f32.mrf.mxu0
        %4055 = vdwg.mxu0
        %v4056 = vsel %vm2973, %v4051, -inf
        %4057 = vmax.xlane.f32.xlu0 %v4056
        %v4058 = vpop.xlane.xlu0 %4057
        %v4059 = vsub.f32 %v4051, %v4058
        %v4060 = vmul.f32 %v4059, 1.442695
        %v4061 = vpow.pop %v4060
        %v4062 = vsel %vm2973, %v4061, 0.0
        %4063 = vadd.xlane.f32.xlu0 %v4062
        %v4064 = vpop.xlane.xlu0 %4063
        %v4065 = vrcp.pop %v4064
        %v4066 = vmul.f32 %v4061, %v4065
        %v4067 = vpack.c.bf16 %v4066, %v4066
        %4068 = vrot.lane.b32.xlu0 %v3552, 104
        %v4069 = vpop.permute.xlu0 %4068
        %v4072 = vsel %vm2973, %v4067, 0
        %4074 = vmatprep.subr.bf16.mxu0 0
        %4075 = vmatpush1.bf16.msra.mxu0 0
        %4076 = vmatprep.subr.bf16.mxu0 0
        %4077 = vmatpush1.bf16.msra.mxu0 0
        %4078 = vmatprep.subr.bf16.mxu0 0
        %4079 = vmatpush1.bf16.msra.mxu0 0
        %4080 = vmatprep.subr.bf16.mxu0 0
        %4081 = vmatpush1.bf16.msra.mxu0 0
        %4082 = vmatprep.subr.bf16.mxu0 0
        %4083 = vmatpush1.bf16.msra.mxu0 0
        %4084 = vmatprep.subr.bf16.mxu0 0
        %4085 = vmatpush1.bf16.msra.mxu0 0
        %4086 = vmatprep.subr.bf16.mxu0 0
        %4087 = vmatpush1.bf16.msra.mxu0 0
        %4088 = vmatprep.subr.bf16.mxu0 0
        %4089 = vmatpush1.bf16.msra.mxu0 %v4069
        %4090 = vmatprep.subr.bf16.mxu0 0
        %4091 = vmatpush2.bf16.msra.mxu0 0
        %4092 = vmatprep.subr.bf16.mxu0 0
        %4093 = vmatpush2.bf16.msra.mxu0 0
        %4094 = vmatprep.subr.bf16.mxu0 0
        %4095 = vmatpush2.bf16.msra.mxu0 0
        %4096 = vmatprep.subr.bf16.mxu0 0
        %4097 = vmatpush2.bf16.msra.mxu0 0
        %4098 = vmatprep.subr.bf16.mxu0 0
        %4099 = vmatpush2.bf16.msra.mxu0 0
        %4100 = vmatprep.subr.bf16.mxu0 0
        %4101 = vmatpush2.bf16.msra.mxu0 0
        %4102 = vmatprep.subr.bf16.mxu0 0
        %4103 = vmatpush2.bf16.msra.mxu0 0
        %4104 = vmatprep.subr.bf16.mxu0 0
        %4105 = vmatpush2.bf16.msra.mxu0 0
        %4106 = vmatprep.mubr.bf16.mxu0 0
        %4107 = vmatmul.mubr.bf16.gmra.mxu0 %v4072
        %v4108 = vpop.f32.mrf.mxu0
        %v4109 = vadd.f32 0.0, %v4108
        %v4110 = vpop.f32.mrf.mxu0
        %v4111 = vpop.f32.mrf.mxu0
        %v4112 = vpop.f32.mrf.mxu0
        %4113 = vdwg.mxu0
        %v4114 = vpack.c.bf16 %v4109, %v4109
        %v4116 = vsel %vm1388, %v4114, 0
        %4118 = vmatprep.subr.bf16.mxu0 0
        %4119 = vmatpush1.bf16.msra.mxu0 0
        %4120 = vmatprep.subr.bf16.mxu0 0
        %4121 = vmatpush1.bf16.msra.mxu0 0
        %4122 = vmatprep.subr.bf16.mxu0 0
        %4123 = vmatpush1.bf16.msra.mxu0 0
        %4124 = vmatprep.subr.bf16.mxu0 0
        %4125 = vmatpush1.bf16.msra.mxu0 0
        %4126 = vmatprep.subr.bf16.mxu0 0
        %4127 = vmatpush1.bf16.msra.mxu0 0
        %4128 = vmatprep.subr.bf16.mxu0 0
        %4129 = vmatpush1.bf16.msra.mxu0 0
        %4130 = vmatprep.subr.bf16.mxu0 0
        %4131 = vmatpush1.bf16.msra.mxu0 0
        %4132 = vmatprep.subr.bf16.mxu0 0
        %4133 = vmatpush1.bf16.msra.mxu0 %v3503
        %4134 = vmatprep.subr.bf16.mxu0 0
        %4135 = vmatpush2.bf16.msra.mxu0 0
        %4136 = vmatprep.subr.bf16.mxu0 0
        %4137 = vmatpush2.bf16.msra.mxu0 0
        %4138 = vmatprep.subr.bf16.mxu0 0
        %4139 = vmatpush2.bf16.msra.mxu0 0
        %4140 = vmatprep.subr.bf16.mxu0 0
        %4141 = vmatpush2.bf16.msra.mxu0 0
        %4142 = vmatprep.subr.bf16.mxu0 0
        %4143 = vmatpush2.bf16.msra.mxu0 0
        %4144 = vmatprep.subr.bf16.mxu0 0
        %4145 = vmatpush2.bf16.msra.mxu0 0
        %4146 = vmatprep.subr.bf16.mxu0 0
        %4147 = vmatpush2.bf16.msra.mxu0 0
        %4148 = vmatprep.subr.bf16.mxu0 0
        %4149 = vmatpush2.bf16.msra.mxu0 0
        %4150 = vmatprep.mubr.bf16.mxu0 0
        %4151 = vmatmul.mubr.bf16.gmra.mxu0 %v4116
        %v4152 = vpop.f32.mrf.mxu0
        %v4153 = vadd.f32 0.0, %v4152
        %v4154 = vpop.f32.mrf.mxu0
        %v4155 = vpop.f32.mrf.mxu0
        %v4156 = vpop.f32.mrf.mxu0
        %4157 = vdwg.mxu0
        %v4158 = vadd.f32 %v4005, %v4153
        %v4160 = vlaneseq
        %v4161 = vshrl.u32 %v4160, 7
        %v4162 = vsub.s32 0, %v4161
        %v4163 = vrot.slane %v2711, %v4162
        %v4165 = vadd.f32 %v3545, %v4163
        %v4166 = vadd.f32 %v4158, %v4163
        %v4167 = vadd.f32 %v2690, %v4165
        %v4168 = vadd.f32 %v2691, %v4166
        %v4169 = vsel %vm1217, %v4167, 0.0
        %4170 = vadd.xlane.f32.xlu0 %v4169
        %v4171 = vpop.xlane.xlu0 %4170
        %v4172 = vsel %vm1217, %v4168, 0.0
        %4173 = vadd.xlane.f32.xlu0 %v4172
        %v4174 = vpop.xlane.xlu0 %4173
        %v4175 = vmul.f32 %v4171, %v2655
        %v4176 = vmul.f32 %v4174, %v2655
        %v4177 = vsub.f32 %v4167, %v4175
        %v4178 = vsub.f32 %v4168, %v4176
        %v4179 = vmul.f32 %v4177, %v4177
        %v4180 = vmul.f32 %v4178, %v4178
        %v4181 = vsel %vm1217, %v4179, 0.0
        %4182 = vadd.xlane.f32.xlu0 %v4181
        %v4183 = vpop.xlane.xlu0 %4182
        %v4184 = vsel %vm1217, %v4180, 0.0
        %4185 = vadd.xlane.f32.xlu0 %v4184
        %v4186 = vpop.xlane.xlu0 %4185
        %v4187 = vmul.f32 %v4183, %v2655
        %v4188 = vmul.f32 %v4186, %v2655
        %v4190 = vlaneseq
        %v4191 = vshrl.u32 %v4190, 7
        %v4192 = vsub.s32 0, %v4191
        %v4193 = vrot.slane %v2712, %v4192
        %v4195 = vmul.f32 %v4193, %v4177
        %v4196 = vmul.f32 %v4193, %v4178
        %v4197 = vadd.f32 %v4187, 1e-06
        %v4198 = vadd.f32 %v4188, 1e-06
        %v4199 = vrsqrt.pop %v4197
        %v4200 = vrsqrt.pop %v4198
        %v4201 = vmul.f32 %v4195, %v4199
        %v4202 = vmul.f32 %v4196, %v4200
        %v4204 = vlaneseq
        %v4205 = vshrl.u32 %v4204, 7
        %v4206 = vsub.s32 0, %v4205
        %v4207 = vrot.slane %v2713, %v4206
        %v4209 = vadd.f32 %v4201, %v4207
        %v4210 = vadd.f32 %v4202, %v4207
        %v4211 = vld [vmem:[#allocation29] sm:$0xf]
        %v4212 = vld [vmem:[#allocation29 + $0x4] sm:$0xf]
        %v4213 = vld [vmem:[#allocation29 + $0x8] sm:$0xf]
        %v4214 = vld [vmem:[#allocation29 + $0xc] sm:$0xf]
        %v4215 = vpack.c.bf16 %v4210, %v4209
        %v4216 = vld [vmem:[%s25] sm:$0x1]
        %v4218 = vlaneseq
        %v4219 = vshrl.u32 %v4218, 7
        %v4220 = vsub.s32 0, %v4219
        %v4221 = vrot.slane %v4216, %v4220
        %v4227 = vunpack.c.l.b16 %v4211
        %v4228 = vunpack.c.l.b16 %v4212
        %v4229 = vunpack.c.l.b16 %v4213
        %v4230 = vunpack.c.l.b16 %v4214
        %v4231 = vpack.c.b16 %v4228, %v4227
        %v4232 = vpack.c.b16 %v4230, %v4229
        %v4236 = vsel %vm1217, %v4215, 0
        %4238 = vmatprep.subr.bf16.mxu0 0
        %4239 = vmatpush1.bf16.msra.mxu0 0
        %4240 = vmatprep.subr.bf16.mxu0 0
        %4241 = vmatpush1.bf16.msra.mxu0 0
        %4242 = vmatprep.subr.bf16.mxu0 0
        %4243 = vmatpush1.bf16.msra.mxu0 0
        %4244 = vmatprep.subr.bf16.mxu0 0
        %4245 = vmatpush1.bf16.msra.mxu0 0
        %4246 = vmatprep.subr.bf16.mxu0 0
        %4247 = vmatpush1.bf16.msra.mxu0 0
        %4248 = vmatprep.subr.bf16.mxu0 0
        %4249 = vmatpush1.bf16.msra.mxu0 0
        %4250 = vmatprep.subr.bf16.mxu0 0
        %4251 = vmatpush1.bf16.msra.mxu0 %v4232
        %4252 = vmatprep.subr.bf16.mxu0 0
        %4253 = vmatpush1.bf16.msra.mxu0 %v4231
        %4254 = vmatprep.subr.bf16.mxu0 0
        %4255 = vmatpush2.bf16.msra.mxu0 0
        %4256 = vmatprep.subr.bf16.mxu0 0
        %4257 = vmatpush2.bf16.msra.mxu0 0
        %4258 = vmatprep.subr.bf16.mxu0 0
        %4259 = vmatpush2.bf16.msra.mxu0 0
        %4260 = vmatprep.subr.bf16.mxu0 0
        %4261 = vmatpush2.bf16.msra.mxu0 0
        %4262 = vmatprep.subr.bf16.mxu0 0
        %4263 = vmatpush2.bf16.msra.mxu0 0
        %4264 = vmatprep.subr.bf16.mxu0 0
        %4265 = vmatpush2.bf16.msra.mxu0 0
        %4266 = vmatprep.subr.bf16.mxu0 0
        %4267 = vmatpush2.bf16.msra.mxu0 0
        %4268 = vmatprep.subr.bf16.mxu0 0
        %4269 = vmatpush2.bf16.msra.mxu0 0
        %4270 = vmatprep.mubr.bf16.mxu0 0
        %4271 = vmatmul.mubr.bf16.gmra.mxu0 %v4236
        %v4272 = vpop.f32.mrf.mxu0
        %v4273 = vadd.f32 %v4221, %v4272
        %v4274 = vpop.f32.mrf.mxu0
        %v4275 = vpop.f32.mrf.mxu0
        %v4276 = vadd.f32 %v4221, %v4275
        %v4277 = vpop.f32.mrf.mxu0
        %4278 = vdwg.mxu0
        %v4279 = vmax.f32 %v4273, 0.0
        %v4280 = vmax.f32 %v4276, 0.0
        %v4281 = vld [vmem:[%s26] sm:$0xf]
        %v4282 = vld [vmem:[%s26 + $0x4] sm:$0xf]
        %v4283 = vld [vmem:[%s26 + $0x8] sm:$0xf]
        %v4284 = vld [vmem:[%s26 + $0xc] sm:$0xf]
        %v4285 = vld [vmem:[%s26 + $0x10] sm:$0xf]
        %v4286 = vld [vmem:[%s26 + $0x14] sm:$0xf]
        %v4287 = vld [vmem:[%s26 + $0x18] sm:$0xf]
        %v4288 = vld [vmem:[%s26 + $0x1c] sm:$0xf]
        %v4289 = vpack.c.bf16 %v4280, %v4279
        %v4290 = vld [vmem:[%s27] sm:$0x1]
        %v4292 = vlaneseq
        %v4293 = vshrl.u32 %v4292, 7
        %v4294 = vsub.s32 0, %v4293
        %v4295 = vrot.slane %v4290, %v4294
        %v4305 = vunpack.c.l.b16 %v4281
        %v4306 = vunpack.c.l.b16 %v4282
        %v4307 = vunpack.c.l.b16 %v4283
        %v4308 = vunpack.c.l.b16 %v4284
        %v4309 = vunpack.c.l.b16 %v4285
        %v4310 = vunpack.c.l.b16 %v4286
        %v4311 = vunpack.c.l.b16 %v4287
        %v4312 = vunpack.c.l.b16 %v4288
        %v4313 = vpack.c.b16 %v4306, %v4305
        %v4314 = vpack.c.b16 %v4308, %v4307
        %v4315 = vpack.c.b16 %v4310, %v4309
        %v4316 = vpack.c.b16 %v4312, %v4311
        %vm4321 = vcmask 523264
        %v4323 = vsel %vm4321, %v4289, 0
        %4325 = vmatprep.subr.bf16.mxu0 0
        %4326 = vmatpush1.bf16.msra.mxu0 0
        %4327 = vmatprep.subr.bf16.mxu0 0
        %4328 = vmatpush1.bf16.msra.mxu0 0
        %4329 = vmatprep.subr.bf16.mxu0 0
        %4330 = vmatpush1.bf16.msra.mxu0 0
        %4331 = vmatprep.subr.bf16.mxu0 0
        %4332 = vmatpush1.bf16.msra.mxu0 0
        %4333 = vmatprep.subr.bf16.mxu0 0
        %4334 = vmatpush1.bf16.msra.mxu0 %v4316
        %4335 = vmatprep.subr.bf16.mxu0 0
        %4336 = vmatpush1.bf16.msra.mxu0 %v4315
        %4337 = vmatprep.subr.bf16.mxu0 0
        %4338 = vmatpush1.bf16.msra.mxu0 %v4314
        %4339 = vmatprep.subr.bf16.mxu0 0
        %4340 = vmatpush1.bf16.msra.mxu0 %v4313
        %4341 = vmatprep.subr.bf16.mxu0 0
        %4342 = vmatpush2.bf16.msra.mxu0 0
        %4343 = vmatprep.subr.bf16.mxu0 0
        %4344 = vmatpush2.bf16.msra.mxu0 0
        %4345 = vmatprep.subr.bf16.mxu0 0
        %4346 = vmatpush2.bf16.msra.mxu0 0
        %4347 = vmatprep.subr.bf16.mxu0 0
        %4348 = vmatpush2.bf16.msra.mxu0 0
        %4349 = vmatprep.subr.bf16.mxu0 0
        %4350 = vmatpush2.bf16.msra.mxu0 0
        %4351 = vmatprep.subr.bf16.mxu0 0
        %4352 = vmatpush2.bf16.msra.mxu0 0
        %4353 = vmatprep.subr.bf16.mxu0 0
        %4354 = vmatpush2.bf16.msra.mxu0 0
        %4355 = vmatprep.subr.bf16.mxu0 0
        %4356 = vmatpush2.bf16.msra.mxu0 0
        %4357 = vmatprep.mubr.bf16.mxu0 0
        %4358 = vmatmul.mubr.bf16.gmra.mxu0 %v4323
        %v4359 = vpop.f32.mrf.mxu0
        %v4360 = vadd.f32 %v4295, %v4359
        %v4361 = vpop.f32.mrf.mxu0
        %v4362 = vpop.f32.mrf.mxu0
        %v4363 = vadd.f32 %v4295, %v4362
        %v4364 = vpop.f32.mrf.mxu0
        %4365 = vdwg.mxu0
        %v4367 = vrot.slane %v4360, 1
        %4368 = vrot.lane.b32.xlu0 %v4367, 32
        %v4369 = vpop.permute.xlu0 %4368
        %v4371 = vrot.slane %v4360, 2
        %4372 = vrot.lane.b32.xlu0 %v4371, 64
        %v4373 = vpop.permute.xlu0 %4372
        %v4375 = vrot.slane %v4360, 3
        %4376 = vrot.lane.b32.xlu0 %v4375, 96
        %v4377 = vpop.permute.xlu0 %4376
        %v4379 = vrot.slane %v4360, 4
        %v4381 = vrot.slane %v4360, 5
        %4382 = vrot.lane.b32.xlu0 %v4381, 32
        %v4383 = vpop.permute.xlu0 %4382
        %v4385 = vrot.slane %v4360, 6
        %4386 = vrot.lane.b32.xlu0 %v4385, 64
        %v4387 = vpop.permute.xlu0 %4386
        %v4389 = vrot.slane %v4360, 7
        %4390 = vrot.lane.b32.xlu0 %v4389, 96
        %v4391 = vpop.permute.xlu0 %4390
        %v4393 = vsel %vm1217, %v4360, %v4369
        %v4394 = vsel %vm4321, %v4393, %v4373
        %vm4395 = vcmask 785408
        %v4396 = vsel %vm4395, %v4394, %v4377
        %v4397 = vsel %vm1217, %v4379, %v4383
        %v4398 = vsel %vm4321, %v4397, %v4387
        %v4399 = vsel %vm4395, %v4398, %v4391
        %v4401 = vrot.slane %v4363, 1
        %4402 = vrot.lane.b32.xlu0 %v4401, 32
        %v4403 = vpop.permute.xlu0 %4402
        %v4405 = vrot.slane %v4363, 2
        %4406 = vrot.lane.b32.xlu0 %v4405, 64
        %v4407 = vpop.permute.xlu0 %4406
        %v4409 = vrot.slane %v4363, 3
        %4410 = vrot.lane.b32.xlu0 %v4409, 96
        %v4411 = vpop.permute.xlu0 %4410
        %v4413 = vrot.slane %v4363, 4
        %v4415 = vrot.slane %v4363, 5
        %4416 = vrot.lane.b32.xlu0 %v4415, 32
        %v4417 = vpop.permute.xlu0 %4416
        %v4419 = vrot.slane %v4363, 6
        %4420 = vrot.lane.b32.xlu0 %v4419, 64
        %v4421 = vpop.permute.xlu0 %4420
        %v4423 = vrot.slane %v4363, 7
        %4424 = vrot.lane.b32.xlu0 %v4423, 96
        %v4425 = vpop.permute.xlu0 %4424
        %v4427 = vsel %vm1217, %v4363, %v4403
        %v4428 = vsel %vm4321, %v4427, %v4407
        %v4429 = vsel %vm4395, %v4428, %v4411
        %v4430 = vsel %vm1217, %v4413, %v4417
        %v4431 = vsel %vm4321, %v4430, %v4421
        %v4432 = vsel %vm4395, %v4431, %v4425
        %v4435 = vrot.slane %v4429, 7
        %v4436 = vrot.slane %v4432, 7
        %vm4439 = vcmask 1040384
        %v4440 = vsel %vm4439, %v4396, %v4435
        %v4441 = vsel %vm4439, %v4399, %v4436
        %v4444 = vcombine.low %v4440, %v4441
        %v4446 = vunpack.c.l.s4 1983009808
        %v4447 = vunpack.c.0.s8 %v4446
        %v4448 = vlaneseq
        %v4449 = vshrl.u32 %v4448, 7
        %v4450 = vsub.s32 %v4447, %v4449
        %v4451 = vrot.slane %v4444, %v4450
        %4453 = vst [vmem:[%s1159] sm:$0xf] %v4451
        %s4454 = sand.u32 %s672, 1
        %s4455 = scalar_lea.sflag [#allocation4], %s4454
        %s4456 = sand.u32 %s672, 1
        %s4457 = smul.addr %s4456, 4
        %s4458 = scalar_lea.vmem [#allocation31], %s4457
        // Predicated region
        $region205: #{tpu_custom_call.1} parent=131 // pred_check
          %p4459 = pneg %p682
        $region206: #{tpu_custom_call.1} parent=131 // pred_check_branch
          %4461 = sbr.rel (%p4459) target = $region208
        $region207: #{tpu_custom_call.1} parent=131 // pred_region
          %s4463 = ssub.s32 64, 64
          %4464 = vsyncadd %s4455, %s4463
          %s4465 = smul.addr %s56, 2
          %s4466 = smul.addr %s4465, 32
          %s4467 = scalar_lea.hbm %s28, %s4466
          %s4469 = sshll.u32 %s4458, 4
          %s4470 = int_to_ptr.vmem [resolvable:$true] %s4469
          %4472 = dma.vmem_to_hbm [thread:$0]  %s4470, 64, %s4467, %s4455
        $region208: #{tpu_custom_call.1} parent=131 // pred_fallthru
          _
      $region132: #{tpu_custom_call.1} parent=5 // pred_fallthru
        _
      %p4473 = scmp.le.s32.totalorder 2, %s51
      // Predicated region
      $region209: #{tpu_custom_call.1} parent=5 // pred_check
        %p4474 = pneg %p4473
      $region210: #{tpu_custom_call.1} parent=5 // pred_check_branch
        %4476 = sbr.rel (%p4474) target = $region212
      $region211: #{tpu_custom_call.1} parent=5 // pred_region
        %s4477 = ssub.s32 %s51, 2
        // Predicated region
        $region213: #{tpu_custom_call.1} parent=211 // pred_check
          %p4478 = pneg %p688
        $region214: #{tpu_custom_call.1} parent=211 // pred_check_branch
          %4480 = sbr.rel (%p4478) target = $region216
        $region215: #{tpu_custom_call.1} parent=211 // pred_region
          %s4481 = sand.u32 %s673, 1
          %s4482 = scalar_lea.sflag [#allocation4], %s4481
          %s4483 = sand.u32 %s673, 1
          %s4484 = smul.addr %s4483, 4
          %s4485 = scalar_lea.vmem [#allocation31], %s4484
          %4486 = dma.done %s4482, 64
        $region216: #{tpu_custom_call.1} parent=211 // pred_fallthru
          _
      $region212: #{tpu_custom_call.1} parent=5 // pred_fallthru
        _
    $region6: #{tpu_custom_call.1} parent=1 // loop_footer
      %s55 = sadd.s32 1, %s51
    $region7: #{tpu_custom_call.1} parent=1 // loop_footer_branch
      %50 = sbr.rel target = $region3
    $region8: #{tpu_custom_call.1} parent=1 // loop_exit
      _
    %4487 = vsyncpa [#allocation3], 1
    %s4488 = scalar_lea.sflag [#allocation3], 1
    %4489 = vsyncpa %s4488, 1
    %4490 = vsyncpa [#allocation6], 1
    %s4491 = scalar_lea.sflag [#allocation6], 1
    %4492 = vsyncpa %s4491, 1
    %4493 = vsyncpa [#allocation9], 1
    %4494 = vsyncpa [#allocation12], 1
    %4495 = vsyncpa [#allocation15], 1
    %4496 = vsyncpa [#allocation18], 1
    %4497 = vsyncpa [#allocation21], 1
    %4498 = vsyncpa [#allocation24], 1
    %4499 = vsyncpa [#allocation27], 1
    %4500 = vsyncpa [#allocation30], 1
    %4501 = vsyncpa [#allocation4], 1
    %s4502 = scalar_lea.sflag [#allocation4], 1
    %4503 = vsyncpa %s4502, 1

</llo_original>
